<compile_context>
chip_gen: v7x
topology: tpu7x:2x2x1
jax: 0.10.0
libtpu: 0.0.40
codegen_flags: <defaults>
</compile_context>

<pallas_src>
import numpy as np
import jax
import jax.numpy as jnp
from jax.experimental import pallas as pl
from jax.experimental.pallas import tpu as pltpu

# ---------------- hp (small, deterministic, lane-dense) ----------------------
ALPHABET_SIZE = 40            # hp.alphabet_size
A_PAD         = 128           # table rows padded to one full MXU contraction
CHANNELS      = 128           # hp.channels (real value -> 128-lane dense)
ENC_KERNEL    = 4             # hp.enc_kernel_size
ENC_DILATIONS = (1, 2, 4, 1)  # hp.enc_dilations (reduced)
N_PER_BLOCK   = 2             # ResidualBlock(n=2)
BN_EPS        = 1e-5

B  = 2                        # batch
T  = 24                       # time steps (multiple of 8 -> clean sublanes)
BT = B * T

L  = len(ENC_DILATIONS) * N_PER_BLOCK           # total dilated conv layers
KC = ENC_KERNEL * CHANNELS                      # fused conv contraction dim


def _tap_shifts(d):
    """Row shifts (in time steps) of the K dilated taps for dilation d."""
    begin = (d * (ENC_KERNEL - 1)) // 2          # ZeroTemporalPad 'begin'
    return [k * d - begin for k in range(ENC_KERNEL)]


# distinct nonzero shifts across all layers -> one hoisted mask each
NEEDED_SHIFTS = sorted({s for d in ENC_DILATIONS for s in _tap_shifts(d)
                        if s != 0})


def encoder_kernel(ids_ref, table_ref, b_pre_ref,
                   w_res_ref, b_res_ref, w_p1_ref, b_p1_ref,
                   w_p2_ref, b_p2_ref, out_ref):
    f32 = jnp.float32
    bf16 = jnp.bfloat16

    # ---- prenet: Embedding + 1x1 conv folded into `table` at init -----------
    ids = ids_ref[...]                                           # (BT, 1) int32
    lane = jax.lax.broadcasted_iota(jnp.int32, (BT, A_PAD), 1)
    onehot = (lane == ids).astype(bf16)                          # (BT, 128)
    e = jnp.dot(onehot, table_ref[...], preferred_element_type=f32)  # (BT, C)
    e = jnp.maximum(e + b_pre_ref[...], 0.0)

    # ---- hoisted static row masks for the rolled dilated-conv taps ----------
    # row t = (flat row) % T; a tap shifted by s is valid iff 0 <= t+s < T.
    # This zeroes both the ZeroTemporalPad halo AND any roll wraparound /
    # cross-batch leakage of the flattened (B*T) slab.
    row_t = jax.lax.broadcasted_iota(jnp.int32, (BT, 1), 0) % T
    masks = {s: ((row_t + s) >= 0) & ((row_t + s) < T) for s in NEEDED_SHIFTS}

    # ---- residual blocks (BatchNorm folded into w_res / b_res) --------------
    h = e
    li = 0
    for d in ENC_DILATIONS:                      # static unroll (8 layers)
        y = h
        for _ in range(N_PER_BLOCK):
            taps = []
            for s in _tap_shifts(d):
                if s == 0:
                    tap = y                                      # (BT, C) f32
                else:
                    # tap[i] = y[i + s]  -> static XLU sublane rotate
                    rolled = pltpu.roll(y, shift=(-s) % BT, axis=0)
                    tap = jnp.where(masks[s], rolled, 0.0)
                taps.append(tap.astype(bf16))
            # lane-concat of the K taps: no relayout, just vreg placement
            xcat = jnp.concatenate(taps, axis=-1)                # (BT, K*C)
            acc = jnp.dot(xcat, w_res_ref[li],
                          preferred_element_type=f32) + b_res_ref[li]
            y = jnp.maximum(acc, 0.0)
            li += 1
        h = h + y                                # residual add (f32)

    # ---- post_net1 (1x1 conv) + residual connection to embedding ------------
    x1 = jnp.dot(h.astype(bf16), w_p1_ref[...], preferred_element_type=f32)
    x1 = x1 + b_p1_ref[...] + e

    # ---- post_net2: ReLU -> (FreqNorm folded into w_p2/b_p2) -> 1x1 conv ----
    y2 = jnp.maximum(x1, 0.0)
    out = jnp.dot(y2.astype(bf16), w_p2_ref[...], preferred_element_type=f32)
    # consumer wants f32 here; if bf16 is acceptable downstream, cast before
    # the store and make out_shape bf16 to halve the output vst/DMA.
    out_ref[...] = out + b_p2_ref[...]


def encoder_pallas(ids, params):
    ids2d = ids.reshape(BT, 1).astype(jnp.int32)
    vmem = pl.BlockSpec(memory_space=pltpu.MemorySpace.VMEM)

    flops = (2 * BT * A_PAD * CHANNELS                 # prenet
             + 2 * BT * KC * CHANNELS * L              # dilated convs
             + 2 * 2 * BT * CHANNELS * CHANNELS)       # post_net1 / post_net2
    bytes_accessed = (ids2d.size * ids2d.dtype.itemsize
                      + sum(int(np.prod(p.shape)) * p.dtype.itemsize
                            for p in params)
                      + BT * CHANNELS * 4)
    cost = pl.CostEstimate(flops=flops, transcendentals=0,
                           bytes_accessed=bytes_accessed)

    # Single program: per-element work is tiny, so grid/pipeline overhead would
    # dominate.  For large B (esp. on v7x megacore) reintroduce a batch grid
    # axis with dimension_semantics=("parallel",) to engage the second TC and
    # to keep the (BT, K*C) slab under v7x's 64 MiB VMEM at long sequences.
    out = pl.pallas_call(
        encoder_kernel,
        out_shape=jax.ShapeDtypeStruct((BT, CHANNELS), jnp.float32),
        in_specs=[vmem] * (1 + len(params)),
        out_specs=vmem,
        cost_estimate=cost,
    )(ids2d, *params)
    return out.reshape(B, T, CHANNELS)


# ---------------- pure-JAX reference (pad/slice ground-truth formulation) ----
def encoder_ref(ids_flat, params):
    (table, b_pre, w_res, b_res, w_p1, b_p1, w_p2, b_p2) = params
    f32 = jnp.float32
    bf16 = jnp.bfloat16
    # one-hot @ table == exact row selection of the bf16 table
    e = table.astype(f32)[ids_flat[:, 0]]
    e = jnp.maximum(e + b_pre, 0.0)
    h = e
    li = 0
    for d in ENC_DILATIONS:
        y = h
        for _ in range(N_PER_BLOCK):
            total = d * (ENC_KERNEL - 1)
            begin = total // 2
            end = total - begin
            y3 = y.reshape(B, T, CHANNELS)
            ypad = jnp.pad(y3, ((0, 0), (begin, end), (0, 0)))
            xcat = jnp.concatenate(
                [ypad[:, k * d:k * d + T, :].astype(bf16)
                 for k in range(ENC_KERNEL)],
                axis=-1).reshape(BT, KC)
            acc = jnp.dot(xcat, w_res[li],
                          preferred_element_type=f32) + b_res[li]
            y = jnp.maximum(acc, 0.0)
            li += 1
        h = h + y
    x1 = jnp.dot(h.astype(bf16), w_p1, preferred_element_type=f32) + b_p1 + e
    y2 = jnp.maximum(x1, 0.0)
    return jnp.dot(y2.astype(bf16), w_p2, preferred_element_type=f32) + b_p2


# ---------------- deterministic parameter init + BN/tap/prenet fusion --------
def init_params(key):
    ks = jax.random.split(key, 17)

    def nrm(k, shape, scale):
        return scale * jax.random.normal(k, shape, dtype=jnp.float32)

    c = CHANNELS
    emb = nrm(ks[0], (ALPHABET_SIZE, c), 0.3)
    emb = emb.at[0].set(0.0)                               # padding_idx = 0
    w_pre = nrm(ks[1], (c, c), 1.0 / np.sqrt(c))
    b_pre = nrm(ks[2], (1, c), 0.05)
    # dilated conv params: (L, K, C_in, C_out)  (== torch weight[:, :, k].T)
    w_res = nrm(ks[3], (L, ENC_KERNEL, c, c), 0.7 / np.sqrt(ENC_KERNEL * c))
    b_res = nrm(ks[4], (L, 1, c), 0.05)
    # FreqNorm == BatchNorm1d over channels, eval mode
    gamma = 1.0 + nrm(ks[5], (L, 1, c), 0.1)
    beta  = nrm(ks[6], (L, 1, c), 0.1)
    rmean = nrm(ks[7], (L, 1, c), 0.1)
    rvar  = 1.0 + jnp.abs(nrm(ks[8], (L, 1, c), 0.1))
    s_res  = gamma * jax.lax.rsqrt(rvar + BN_EPS)
    sh_res = beta - rmean * s_res
    w_p1 = nrm(ks[9], (c, c), 1.0 / np.sqrt(c))
    b_p1 = nrm(ks[10], (1, c), 0.05)
    gamma2 = 1.0 + nrm(ks[11], (1, c), 0.1)
    beta2  = nrm(ks[12], (1, c), 0.1)
    rmean2 = nrm(ks[13], (1, c), 0.1)
    rvar2  = 1.0 + jnp.abs(nrm(ks[14], (1, c), 0.1))
    s_p2  = gamma2 * jax.lax.rsqrt(rvar2 + BN_EPS)
    sh_p2 = beta2 - rmean2 * s_p2
    w_p2 = nrm(ks[15], (c, c), 1.0 / np.sqrt(c))
    b_p2 = nrm(ks[16], (1, c), 0.05)

    # ---- prenet fold: (one-hot @ emb) @ w_pre == one-hot @ (emb @ w_pre) -----
    # exact row selection; pad contraction dim 40 -> 128 (zero rows unreachable)
    table = jnp.pad(emb @ w_pre, ((0, A_PAD - ALPHABET_SIZE), (0, 0)))

    # ---- fold BatchNorm (eval) into adjacent weights & fuse conv taps -------
    # res conv li:  relu((sum_k X_k @ W_k + b) * s + sh)
    #            == relu(Xcat @ (W * s)  +  (b * s + sh))
    w_res_f = (w_res * s_res[:, None, :, :]).reshape(L, KC, c)
    b_res_f = b_res * s_res + sh_res
    # post_net2: (relu(x1)*s + sh) @ W + b == relu(x1) @ (diag(s) W) + (sh @ W + b)
    w_p2_f = w_p2 * s_p2.reshape(c, 1)
    b_p2_f = b_p2 + sh_p2 @ w_p2

    bf = lambda a: a.astype(jnp.bfloat16)                  # MXU operands in bf16
    return (bf(table), b_pre,
            bf(w_res_f), b_res_f,
            bf(w_p1), b_p1,
            bf(w_p2_f), b_p2_f)


if __name__ == "__main__":
    key = jax.random.PRNGKey(0)
    kx, kp = jax.random.split(key)

    x = jax.random.randint(kx, (B, T), 0, ALPHABET_SIZE, dtype=jnp.int32)
    params = init_params(kp)

    out = jax.block_until_ready(encoder_pallas(x, params))
    ref = encoder_ref(x.reshape(BT, 1).astype(jnp.int32), params)
    ref = jax.block_until_ready(ref).reshape(B, T, CHANNELS)

    np.testing.assert_allclose(np.asarray(out), np.asarray(ref),
                               rtol=2e-3, atol=2e-3)
    print("KERNEL_OK")
</pallas_src>

<mosaic_0001>
module attributes {stable_mosaic.version = 11 : i64} {
  func.func @encoder_kernel(%arg0: memref<48x1xi32, #tpu.memory_space<vmem>>, %arg1: memref<128x128xbf16, #tpu.memory_space<vmem>>, %arg2: memref<1x128xf32, #tpu.memory_space<vmem>>, %arg3: memref<8x512x128xbf16, #tpu.memory_space<vmem>>, %arg4: memref<8x1x128xf32, #tpu.memory_space<vmem>>, %arg5: memref<128x128xbf16, #tpu.memory_space<vmem>>, %arg6: memref<1x128xf32, #tpu.memory_space<vmem>>, %arg7: memref<128x128xbf16, #tpu.memory_space<vmem>>, %arg8: memref<1x128xf32, #tpu.memory_space<vmem>>, %arg9: memref<48x128xf32, #tpu.memory_space<vmem>>) attributes {dimension_semantics = [], scalar_prefetch = 0 : i64, scratch_operands = 0 : i64, tpu.core_type = #tpu.core_type<tc>} {
    %c0 = arith.constant 0 : index
    %c0_0 = arith.constant 0 : index
    %0 = vector.load %arg0[%c0, %c0_0] : memref<48x1xi32, #tpu.memory_space<vmem>>, vector<48x1xi32>
    %1 = tpu.iota {dimensions = array<i32: 1>} : vector<48x128xi32>
    %2 = vector.broadcast %0 : vector<48x1xi32> to vector<48x128xi32>
    %3 = arith.cmpi eq, %1, %2 : vector<48x128xi32>
    %4 = arith.extui %3 : vector<48x128xi1> to vector<48x128xi32>
    %5 = arith.sitofp %4 : vector<48x128xi32> to vector<48x128xf32>
    %6 = arith.truncf %5 : vector<48x128xf32> to vector<48x128xbf16>
    %c0_1 = arith.constant 0 : index
    %c0_2 = arith.constant 0 : index
    %7 = vector.load %arg1[%c0_1, %c0_2] : memref<128x128xbf16, #tpu.memory_space<vmem>>, vector<128x128xbf16>
    %cst = arith.constant dense<0.000000e+00> : vector<48x128xf32>
    %8 = tpu.matmul %6, %7, %cst {dimension_numbers = #tpu.dot_dimension_numbers<[1], [0], [0], [1], [0, 0, 1, 1], [], []>} : vector<48x128xbf16>, vector<128x128xbf16>, vector<48x128xf32> -> vector<48x128xf32>
    %c0_3 = arith.constant 0 : index
    %c0_4 = arith.constant 0 : index
    %9 = vector.load %arg2[%c0_3, %c0_4] : memref<1x128xf32, #tpu.memory_space<vmem>>, vector<1x128xf32>
    %10 = vector.broadcast %9 : vector<1x128xf32> to vector<48x128xf32>
    %11 = arith.addf %8, %10 : vector<48x128xf32>
    %cst_5 = arith.constant 0.000000e+00 : f32
    %12 = vector.broadcast %cst_5 : f32 to vector<48x128xf32>
    %13 = arith.maximumf %11, %12 : vector<48x128xf32>
    %14 = tpu.iota {dimensions = array<i32: 0>} : vector<48x1xi32>
    %c24_i32 = arith.constant 24 : i32
    %c0_i32 = arith.constant 0 : i32
    %15 = arith.cmpi eq, %c24_i32, %c0_i32 : i32
    %c1_i32 = arith.constant 1 : i32
    %16 = arith.select %15, %c1_i32, %c24_i32 : i32
    %17 = vector.broadcast %16 : i32 to vector<48x1xi32>
    %18 = arith.remsi %14, %17 : vector<48x1xi32>
    %c0_i32_6 = arith.constant 0 : i32
    %19 = vector.broadcast %c0_i32_6 : i32 to vector<48x1xi32>
    %20 = arith.cmpi ne, %18, %19 : vector<48x1xi32>
    %c0_i32_7 = arith.constant 0 : i32
    %21 = vector.broadcast %c0_i32_7 : i32 to vector<48x1xi32>
    %22 = arith.cmpi slt, %18, %21 : vector<48x1xi32>
    %c0_i32_8 = arith.constant 0 : i32
    %23 = arith.cmpi slt, %16, %c0_i32_8 : i32
    %24 = vector.broadcast %23 : i1 to vector<48x1xi1>
    %25 = vector.broadcast %24 : vector<48x1xi1> to vector<48x1xi1>
    %26 = arith.xori %22, %25 : vector<48x1xi1>
    %27 = arith.andi %26, %20 : vector<48x1xi1>
    %28 = vector.broadcast %16 : i32 to vector<48x1xi32>
    %29 = arith.addi %18, %28 : vector<48x1xi32>
    %30 = arith.select %27, %29, %18 : vector<48x1xi1>, vector<48x1xi32>
    %c-6_i32 = arith.constant -6 : i32
    %31 = vector.broadcast %c-6_i32 : i32 to vector<48x1xi32>
    %32 = arith.addi %30, %31 : vector<48x1xi32>
    %c0_i32_9 = arith.constant 0 : i32
    %33 = vector.broadcast %c0_i32_9 : i32 to vector<48x1xi32>
    %34 = arith.cmpi sge, %32, %33 : vector<48x1xi32>
    %c-6_i32_10 = arith.constant -6 : i32
    %35 = vector.broadcast %c-6_i32_10 : i32 to vector<48x1xi32>
    %36 = arith.addi %30, %35 : vector<48x1xi32>
    %c24_i32_11 = arith.constant 24 : i32
    %37 = vector.broadcast %c24_i32_11 : i32 to vector<48x1xi32>
    %38 = arith.cmpi slt, %36, %37 : vector<48x1xi32>
    %39 = arith.andi %34, %38 : vector<48x1xi1>
    %c-3_i32 = arith.constant -3 : i32
    %40 = vector.broadcast %c-3_i32 : i32 to vector<48x1xi32>
    %41 = arith.addi %30, %40 : vector<48x1xi32>
    %c0_i32_12 = arith.constant 0 : i32
    %42 = vector.broadcast %c0_i32_12 : i32 to vector<48x1xi32>
    %43 = arith.cmpi sge, %41, %42 : vector<48x1xi32>
    %c-3_i32_13 = arith.constant -3 : i32
    %44 = vector.broadcast %c-3_i32_13 : i32 to vector<48x1xi32>
    %45 = arith.addi %30, %44 : vector<48x1xi32>
    %c24_i32_14 = arith.constant 24 : i32
    %46 = vector.broadcast %c24_i32_14 : i32 to vector<48x1xi32>
    %47 = arith.cmpi slt, %45, %46 : vector<48x1xi32>
    %48 = arith.andi %43, %47 : vector<48x1xi1>
    %c-2_i32 = arith.constant -2 : i32
    %49 = vector.broadcast %c-2_i32 : i32 to vector<48x1xi32>
    %50 = arith.addi %30, %49 : vector<48x1xi32>
    %c0_i32_15 = arith.constant 0 : i32
    %51 = vector.broadcast %c0_i32_15 : i32 to vector<48x1xi32>
    %52 = arith.cmpi sge, %50, %51 : vector<48x1xi32>
    %c-2_i32_16 = arith.constant -2 : i32
    %53 = vector.broadcast %c-2_i32_16 : i32 to vector<48x1xi32>
    %54 = arith.addi %30, %53 : vector<48x1xi32>
    %c24_i32_17 = arith.constant 24 : i32
    %55 = vector.broadcast %c24_i32_17 : i32 to vector<48x1xi32>
    %56 = arith.cmpi slt, %54, %55 : vector<48x1xi32>
    %57 = arith.andi %52, %56 : vector<48x1xi1>
    %c-1_i32 = arith.constant -1 : i32
    %58 = vector.broadcast %c-1_i32 : i32 to vector<48x1xi32>
    %59 = arith.addi %30, %58 : vector<48x1xi32>
    %c0_i32_18 = arith.constant 0 : i32
    %60 = vector.broadcast %c0_i32_18 : i32 to vector<48x1xi32>
    %61 = arith.cmpi sge, %59, %60 : vector<48x1xi32>
    %c-1_i32_19 = arith.constant -1 : i32
    %62 = vector.broadcast %c-1_i32_19 : i32 to vector<48x1xi32>
    %63 = arith.addi %30, %62 : vector<48x1xi32>
    %c24_i32_20 = arith.constant 24 : i32
    %64 = vector.broadcast %c24_i32_20 : i32 to vector<48x1xi32>
    %65 = arith.cmpi slt, %63, %64 : vector<48x1xi32>
    %66 = arith.andi %61, %65 : vector<48x1xi1>
    %c1_i32_21 = arith.constant 1 : i32
    %67 = vector.broadcast %c1_i32_21 : i32 to vector<48x1xi32>
    %68 = arith.addi %30, %67 : vector<48x1xi32>
    %c0_i32_22 = arith.constant 0 : i32
    %69 = vector.broadcast %c0_i32_22 : i32 to vector<48x1xi32>
    %70 = arith.cmpi sge, %68, %69 : vector<48x1xi32>
    %c1_i32_23 = arith.constant 1 : i32
    %71 = vector.broadcast %c1_i32_23 : i32 to vector<48x1xi32>
    %72 = arith.addi %30, %71 : vector<48x1xi32>
    %c24_i32_24 = arith.constant 24 : i32
    %73 = vector.broadcast %c24_i32_24 : i32 to vector<48x1xi32>
    %74 = arith.cmpi slt, %72, %73 : vector<48x1xi32>
    %75 = arith.andi %70, %74 : vector<48x1xi1>
    %c2_i32 = arith.constant 2 : i32
    %76 = vector.broadcast %c2_i32 : i32 to vector<48x1xi32>
    %77 = arith.addi %30, %76 : vector<48x1xi32>
    %c0_i32_25 = arith.constant 0 : i32
    %78 = vector.broadcast %c0_i32_25 : i32 to vector<48x1xi32>
    %79 = arith.cmpi sge, %77, %78 : vector<48x1xi32>
    %c2_i32_26 = arith.constant 2 : i32
    %80 = vector.broadcast %c2_i32_26 : i32 to vector<48x1xi32>
    %81 = arith.addi %30, %80 : vector<48x1xi32>
    %c24_i32_27 = arith.constant 24 : i32
    %82 = vector.broadcast %c24_i32_27 : i32 to vector<48x1xi32>
    %83 = arith.cmpi slt, %81, %82 : vector<48x1xi32>
    %84 = arith.andi %79, %83 : vector<48x1xi1>
    %c3_i32 = arith.constant 3 : i32
    %85 = vector.broadcast %c3_i32 : i32 to vector<48x1xi32>
    %86 = arith.addi %30, %85 : vector<48x1xi32>
    %c0_i32_28 = arith.constant 0 : i32
    %87 = vector.broadcast %c0_i32_28 : i32 to vector<48x1xi32>
    %88 = arith.cmpi sge, %86, %87 : vector<48x1xi32>
    %c3_i32_29 = arith.constant 3 : i32
    %89 = vector.broadcast %c3_i32_29 : i32 to vector<48x1xi32>
    %90 = arith.addi %30, %89 : vector<48x1xi32>
    %c24_i32_30 = arith.constant 24 : i32
    %91 = vector.broadcast %c24_i32_30 : i32 to vector<48x1xi32>
    %92 = arith.cmpi slt, %90, %91 : vector<48x1xi32>
    %93 = arith.andi %88, %92 : vector<48x1xi1>
    %c6_i32 = arith.constant 6 : i32
    %94 = vector.broadcast %c6_i32 : i32 to vector<48x1xi32>
    %95 = arith.addi %30, %94 : vector<48x1xi32>
    %c0_i32_31 = arith.constant 0 : i32
    %96 = vector.broadcast %c0_i32_31 : i32 to vector<48x1xi32>
    %97 = arith.cmpi sge, %95, %96 : vector<48x1xi32>
    %c6_i32_32 = arith.constant 6 : i32
    %98 = vector.broadcast %c6_i32_32 : i32 to vector<48x1xi32>
    %99 = arith.addi %30, %98 : vector<48x1xi32>
    %c24_i32_33 = arith.constant 24 : i32
    %100 = vector.broadcast %c24_i32_33 : i32 to vector<48x1xi32>
    %101 = arith.cmpi slt, %99, %100 : vector<48x1xi32>
    %102 = arith.andi %97, %101 : vector<48x1xi1>
    %c1_i32_34 = arith.constant 1 : i32
    %103 = tpu.dynamic_rotate %13 by %c1_i32_34 dim 0 : vector<48x128xf32>, i32 -> vector<48x128xf32>
    %cst_35 = arith.constant 0.000000e+00 : f32
    %104 = vector.shape_cast %66 : vector<48x1xi1> to vector<48x1xi1>
    %105 = vector.broadcast %104 : vector<48x1xi1> to vector<48x128xi1>
    %106 = vector.broadcast %cst_35 : f32 to vector<48x128xf32>
    %107 = arith.select %105, %103, %106 : vector<48x128xi1>, vector<48x128xf32>
    %108 = arith.truncf %107 : vector<48x128xf32> to vector<48x128xbf16>
    %109 = arith.truncf %13 : vector<48x128xf32> to vector<48x128xbf16>
    %c47_i32 = arith.constant 47 : i32
    %110 = tpu.dynamic_rotate %13 by %c47_i32 dim 0 : vector<48x128xf32>, i32 -> vector<48x128xf32>
    %cst_36 = arith.constant 0.000000e+00 : f32
    %111 = vector.shape_cast %75 : vector<48x1xi1> to vector<48x1xi1>
    %112 = vector.broadcast %111 : vector<48x1xi1> to vector<48x128xi1>
    %113 = vector.broadcast %cst_36 : f32 to vector<48x128xf32>
    %114 = arith.select %112, %110, %113 : vector<48x128xi1>, vector<48x128xf32>
    %115 = arith.truncf %114 : vector<48x128xf32> to vector<48x128xbf16>
    %c46_i32 = arith.constant 46 : i32
    %116 = tpu.dynamic_rotate %13 by %c46_i32 dim 0 : vector<48x128xf32>, i32 -> vector<48x128xf32>
    %cst_37 = arith.constant 0.000000e+00 : f32
    %117 = vector.shape_cast %84 : vector<48x1xi1> to vector<48x1xi1>
    %118 = vector.broadcast %117 : vector<48x1xi1> to vector<48x128xi1>
    %119 = vector.broadcast %cst_37 : f32 to vector<48x128xf32>
    %120 = arith.select %118, %116, %119 : vector<48x128xi1>, vector<48x128xf32>
    %121 = arith.truncf %120 : vector<48x128xf32> to vector<48x128xbf16>
    %122 = tpu.concatenate %108, %109, %115, %121 in 1 : vector<48x128xbf16>, vector<48x128xbf16>, vector<48x128xbf16>, vector<48x128xbf16> -> vector<48x512xbf16>
    %c0_38 = arith.constant 0 : index
    %c0_39 = arith.constant 0 : index
    %c0_40 = arith.constant 0 : index
    %123 = vector.load %arg3[%c0_38, %c0_39, %c0_40] : memref<8x512x128xbf16, #tpu.memory_space<vmem>>, vector<1x512x128xbf16>
    %124 = vector.shape_cast %123 : vector<1x512x128xbf16> to vector<512x128xbf16>
    %cst_41 = arith.constant dense<0.000000e+00> : vector<48x128xf32>
    %125 = tpu.matmul %122, %124, %cst_41 {dimension_numbers = #tpu.dot_dimension_numbers<[1], [0], [0], [1], [0, 0, 1, 1], [], []>} : vector<48x512xbf16>, vector<512x128xbf16>, vector<48x128xf32> -> vector<48x128xf32>
    %c0_42 = arith.constant 0 : index
    %c0_43 = arith.constant 0 : index
    %c0_44 = arith.constant 0 : index
    %126 = vector.load %arg4[%c0_42, %c0_43, %c0_44] : memref<8x1x128xf32, #tpu.memory_space<vmem>>, vector<1x1x128xf32>
    %127 = vector.shape_cast %126 : vector<1x1x128xf32> to vector<1x128xf32>
    %128 = vector.broadcast %127 : vector<1x128xf32> to vector<48x128xf32>
    %129 = arith.addf %125, %128 : vector<48x128xf32>
    %cst_45 = arith.constant 0.000000e+00 : f32
    %130 = vector.broadcast %cst_45 : f32 to vector<48x128xf32>
    %131 = arith.maximumf %129, %130 : vector<48x128xf32>
    %c1_i32_46 = arith.constant 1 : i32
    %132 = tpu.dynamic_rotate %131 by %c1_i32_46 dim 0 : vector<48x128xf32>, i32 -> vector<48x128xf32>
    %cst_47 = arith.constant 0.000000e+00 : f32
    %133 = vector.shape_cast %66 : vector<48x1xi1> to vector<48x1xi1>
    %134 = vector.broadcast %133 : vector<48x1xi1> to vector<48x128xi1>
    %135 = vector.broadcast %cst_47 : f32 to vector<48x128xf32>
    %136 = arith.select %134, %132, %135 : vector<48x128xi1>, vector<48x128xf32>
    %137 = arith.truncf %136 : vector<48x128xf32> to vector<48x128xbf16>
    %138 = arith.truncf %131 : vector<48x128xf32> to vector<48x128xbf16>
    %c47_i32_48 = arith.constant 47 : i32
    %139 = tpu.dynamic_rotate %131 by %c47_i32_48 dim 0 : vector<48x128xf32>, i32 -> vector<48x128xf32>
    %cst_49 = arith.constant 0.000000e+00 : f32
    %140 = vector.shape_cast %75 : vector<48x1xi1> to vector<48x1xi1>
    %141 = vector.broadcast %140 : vector<48x1xi1> to vector<48x128xi1>
    %142 = vector.broadcast %cst_49 : f32 to vector<48x128xf32>
    %143 = arith.select %141, %139, %142 : vector<48x128xi1>, vector<48x128xf32>
    %144 = arith.truncf %143 : vector<48x128xf32> to vector<48x128xbf16>
    %c46_i32_50 = arith.constant 46 : i32
    %145 = tpu.dynamic_rotate %131 by %c46_i32_50 dim 0 : vector<48x128xf32>, i32 -> vector<48x128xf32>
    %cst_51 = arith.constant 0.000000e+00 : f32
    %146 = vector.shape_cast %84 : vector<48x1xi1> to vector<48x1xi1>
    %147 = vector.broadcast %146 : vector<48x1xi1> to vector<48x128xi1>
    %148 = vector.broadcast %cst_51 : f32 to vector<48x128xf32>
    %149 = arith.select %147, %145, %148 : vector<48x128xi1>, vector<48x128xf32>
    %150 = arith.truncf %149 : vector<48x128xf32> to vector<48x128xbf16>
    %151 = tpu.concatenate %137, %138, %144, %150 in 1 : vector<48x128xbf16>, vector<48x128xbf16>, vector<48x128xbf16>, vector<48x128xbf16> -> vector<48x512xbf16>
    %c1 = arith.constant 1 : index
    %c0_52 = arith.constant 0 : index
    %c0_53 = arith.constant 0 : index
    %152 = vector.load %arg3[%c1, %c0_52, %c0_53] : memref<8x512x128xbf16, #tpu.memory_space<vmem>>, vector<1x512x128xbf16>
    %153 = vector.shape_cast %152 : vector<1x512x128xbf16> to vector<512x128xbf16>
    %cst_54 = arith.constant dense<0.000000e+00> : vector<48x128xf32>
    %154 = tpu.matmul %151, %153, %cst_54 {dimension_numbers = #tpu.dot_dimension_numbers<[1], [0], [0], [1], [0, 0, 1, 1], [], []>} : vector<48x512xbf16>, vector<512x128xbf16>, vector<48x128xf32> -> vector<48x128xf32>
    %c1_55 = arith.constant 1 : index
    %c0_56 = arith.constant 0 : index
    %c0_57 = arith.constant 0 : index
    %155 = vector.load %arg4[%c1_55, %c0_56, %c0_57] : memref<8x1x128xf32, #tpu.memory_space<vmem>>, vector<1x1x128xf32>
    %156 = vector.shape_cast %155 : vector<1x1x128xf32> to vector<1x128xf32>
    %157 = vector.broadcast %156 : vector<1x128xf32> to vector<48x128xf32>
    %158 = arith.addf %154, %157 : vector<48x128xf32>
    %cst_58 = arith.constant 0.000000e+00 : f32
    %159 = vector.broadcast %cst_58 : f32 to vector<48x128xf32>
    %160 = arith.maximumf %158, %159 : vector<48x128xf32>
    %161 = arith.addf %13, %160 : vector<48x128xf32>
    %c3_i32_59 = arith.constant 3 : i32
    %162 = tpu.dynamic_rotate %161 by %c3_i32_59 dim 0 : vector<48x128xf32>, i32 -> vector<48x128xf32>
    %cst_60 = arith.constant 0.000000e+00 : f32
    %163 = vector.shape_cast %48 : vector<48x1xi1> to vector<48x1xi1>
    %164 = vector.broadcast %163 : vector<48x1xi1> to vector<48x128xi1>
    %165 = vector.broadcast %cst_60 : f32 to vector<48x128xf32>
    %166 = arith.select %164, %162, %165 : vector<48x128xi1>, vector<48x128xf32>
    %167 = arith.truncf %166 : vector<48x128xf32> to vector<48x128xbf16>
    %c1_i32_61 = arith.constant 1 : i32
    %168 = tpu.dynamic_rotate %161 by %c1_i32_61 dim 0 : vector<48x128xf32>, i32 -> vector<48x128xf32>
    %cst_62 = arith.constant 0.000000e+00 : f32
    %169 = vector.shape_cast %66 : vector<48x1xi1> to vector<48x1xi1>
    %170 = vector.broadcast %169 : vector<48x1xi1> to vector<48x128xi1>
    %171 = vector.broadcast %cst_62 : f32 to vector<48x128xf32>
    %172 = arith.select %170, %168, %171 : vector<48x128xi1>, vector<48x128xf32>
    %173 = arith.truncf %172 : vector<48x128xf32> to vector<48x128xbf16>
    %c47_i32_63 = arith.constant 47 : i32
    %174 = tpu.dynamic_rotate %161 by %c47_i32_63 dim 0 : vector<48x128xf32>, i32 -> vector<48x128xf32>
    %cst_64 = arith.constant 0.000000e+00 : f32
    %175 = vector.shape_cast %75 : vector<48x1xi1> to vector<48x1xi1>
    %176 = vector.broadcast %175 : vector<48x1xi1> to vector<48x128xi1>
    %177 = vector.broadcast %cst_64 : f32 to vector<48x128xf32>
    %178 = arith.select %176, %174, %177 : vector<48x128xi1>, vector<48x128xf32>
    %179 = arith.truncf %178 : vector<48x128xf32> to vector<48x128xbf16>
    %c45_i32 = arith.constant 45 : i32
    %180 = tpu.dynamic_rotate %161 by %c45_i32 dim 0 : vector<48x128xf32>, i32 -> vector<48x128xf32>
    %cst_65 = arith.constant 0.000000e+00 : f32
    %181 = vector.shape_cast %93 : vector<48x1xi1> to vector<48x1xi1>
    %182 = vector.broadcast %181 : vector<48x1xi1> to vector<48x128xi1>
    %183 = vector.broadcast %cst_65 : f32 to vector<48x128xf32>
    %184 = arith.select %182, %180, %183 : vector<48x128xi1>, vector<48x128xf32>
    %185 = arith.truncf %184 : vector<48x128xf32> to vector<48x128xbf16>
    %186 = tpu.concatenate %167, %173, %179, %185 in 1 : vector<48x128xbf16>, vector<48x128xbf16>, vector<48x128xbf16>, vector<48x128xbf16> -> vector<48x512xbf16>
    %c2 = arith.constant 2 : index
    %c0_66 = arith.constant 0 : index
    %c0_67 = arith.constant 0 : index
    %187 = vector.load %arg3[%c2, %c0_66, %c0_67] : memref<8x512x128xbf16, #tpu.memory_space<vmem>>, vector<1x512x128xbf16>
    %188 = vector.shape_cast %187 : vector<1x512x128xbf16> to vector<512x128xbf16>
    %cst_68 = arith.constant dense<0.000000e+00> : vector<48x128xf32>
    %189 = tpu.matmul %186, %188, %cst_68 {dimension_numbers = #tpu.dot_dimension_numbers<[1], [0], [0], [1], [0, 0, 1, 1], [], []>} : vector<48x512xbf16>, vector<512x128xbf16>, vector<48x128xf32> -> vector<48x128xf32>
    %c2_69 = arith.constant 2 : index
    %c0_70 = arith.constant 0 : index
    %c0_71 = arith.constant 0 : index
    %190 = vector.load %arg4[%c2_69, %c0_70, %c0_71] : memref<8x1x128xf32, #tpu.memory_space<vmem>>, vector<1x1x128xf32>
    %191 = vector.shape_cast %190 : vector<1x1x128xf32> to vector<1x128xf32>
    %192 = vector.broadcast %191 : vector<1x128xf32> to vector<48x128xf32>
    %193 = arith.addf %189, %192 : vector<48x128xf32>
    %cst_72 = arith.constant 0.000000e+00 : f32
    %194 = vector.broadcast %cst_72 : f32 to vector<48x128xf32>
    %195 = arith.maximumf %193, %194 : vector<48x128xf32>
    %c3_i32_73 = arith.constant 3 : i32
    %196 = tpu.dynamic_rotate %195 by %c3_i32_73 dim 0 : vector<48x128xf32>, i32 -> vector<48x128xf32>
    %cst_74 = arith.constant 0.000000e+00 : f32
    %197 = vector.shape_cast %48 : vector<48x1xi1> to vector<48x1xi1>
    %198 = vector.broadcast %197 : vector<48x1xi1> to vector<48x128xi1>
    %199 = vector.broadcast %cst_74 : f32 to vector<48x128xf32>
    %200 = arith.select %198, %196, %199 : vector<48x128xi1>, vector<48x128xf32>
    %201 = arith.truncf %200 : vector<48x128xf32> to vector<48x128xbf16>
    %c1_i32_75 = arith.constant 1 : i32
    %202 = tpu.dynamic_rotate %195 by %c1_i32_75 dim 0 : vector<48x128xf32>, i32 -> vector<48x128xf32>
    %cst_76 = arith.constant 0.000000e+00 : f32
    %203 = vector.shape_cast %66 : vector<48x1xi1> to vector<48x1xi1>
    %204 = vector.broadcast %203 : vector<48x1xi1> to vector<48x128xi1>
    %205 = vector.broadcast %cst_76 : f32 to vector<48x128xf32>
    %206 = arith.select %204, %202, %205 : vector<48x128xi1>, vector<48x128xf32>
    %207 = arith.truncf %206 : vector<48x128xf32> to vector<48x128xbf16>
    %c47_i32_77 = arith.constant 47 : i32
    %208 = tpu.dynamic_rotate %195 by %c47_i32_77 dim 0 : vector<48x128xf32>, i32 -> vector<48x128xf32>
    %cst_78 = arith.constant 0.000000e+00 : f32
    %209 = vector.shape_cast %75 : vector<48x1xi1> to vector<48x1xi1>
    %210 = vector.broadcast %209 : vector<48x1xi1> to vector<48x128xi1>
    %211 = vector.broadcast %cst_78 : f32 to vector<48x128xf32>
    %212 = arith.select %210, %208, %211 : vector<48x128xi1>, vector<48x128xf32>
    %213 = arith.truncf %212 : vector<48x128xf32> to vector<48x128xbf16>
    %c45_i32_79 = arith.constant 45 : i32
    %214 = tpu.dynamic_rotate %195 by %c45_i32_79 dim 0 : vector<48x128xf32>, i32 -> vector<48x128xf32>
    %cst_80 = arith.constant 0.000000e+00 : f32
    %215 = vector.shape_cast %93 : vector<48x1xi1> to vector<48x1xi1>
    %216 = vector.broadcast %215 : vector<48x1xi1> to vector<48x128xi1>
    %217 = vector.broadcast %cst_80 : f32 to vector<48x128xf32>
    %218 = arith.select %216, %214, %217 : vector<48x128xi1>, vector<48x128xf32>
    %219 = arith.truncf %218 : vector<48x128xf32> to vector<48x128xbf16>
    %220 = tpu.concatenate %201, %207, %213, %219 in 1 : vector<48x128xbf16>, vector<48x128xbf16>, vector<48x128xbf16>, vector<48x128xbf16> -> vector<48x512xbf16>
    %c3 = arith.constant 3 : index
    %c0_81 = arith.constant 0 : index
    %c0_82 = arith.constant 0 : index
    %221 = vector.load %arg3[%c3, %c0_81, %c0_82] : memref<8x512x128xbf16, #tpu.memory_space<vmem>>, vector<1x512x128xbf16>
    %222 = vector.shape_cast %221 : vector<1x512x128xbf16> to vector<512x128xbf16>
    %cst_83 = arith.constant dense<0.000000e+00> : vector<48x128xf32>
    %223 = tpu.matmul %220, %222, %cst_83 {dimension_numbers = #tpu.dot_dimension_numbers<[1], [0], [0], [1], [0, 0, 1, 1], [], []>} : vector<48x512xbf16>, vector<512x128xbf16>, vector<48x128xf32> -> vector<48x128xf32>
    %c3_84 = arith.constant 3 : index
    %c0_85 = arith.constant 0 : index
    %c0_86 = arith.constant 0 : index
    %224 = vector.load %arg4[%c3_84, %c0_85, %c0_86] : memref<8x1x128xf32, #tpu.memory_space<vmem>>, vector<1x1x128xf32>
    %225 = vector.shape_cast %224 : vector<1x1x128xf32> to vector<1x128xf32>
    %226 = vector.broadcast %225 : vector<1x128xf32> to vector<48x128xf32>
    %227 = arith.addf %223, %226 : vector<48x128xf32>
    %cst_87 = arith.constant 0.000000e+00 : f32
    %228 = vector.broadcast %cst_87 : f32 to vector<48x128xf32>
    %229 = arith.maximumf %227, %228 : vector<48x128xf32>
    %230 = arith.addf %161, %229 : vector<48x128xf32>
    %c6_i32_88 = arith.constant 6 : i32
    %231 = tpu.dynamic_rotate %230 by %c6_i32_88 dim 0 : vector<48x128xf32>, i32 -> vector<48x128xf32>
    %cst_89 = arith.constant 0.000000e+00 : f32
    %232 = vector.shape_cast %39 : vector<48x1xi1> to vector<48x1xi1>
    %233 = vector.broadcast %232 : vector<48x1xi1> to vector<48x128xi1>
    %234 = vector.broadcast %cst_89 : f32 to vector<48x128xf32>
    %235 = arith.select %233, %231, %234 : vector<48x128xi1>, vector<48x128xf32>
    %236 = arith.truncf %235 : vector<48x128xf32> to vector<48x128xbf16>
    %c2_i32_90 = arith.constant 2 : i32
    %237 = tpu.dynamic_rotate %230 by %c2_i32_90 dim 0 : vector<48x128xf32>, i32 -> vector<48x128xf32>
    %cst_91 = arith.constant 0.000000e+00 : f32
    %238 = vector.shape_cast %57 : vector<48x1xi1> to vector<48x1xi1>
    %239 = vector.broadcast %238 : vector<48x1xi1> to vector<48x128xi1>
    %240 = vector.broadcast %cst_91 : f32 to vector<48x128xf32>
    %241 = arith.select %239, %237, %240 : vector<48x128xi1>, vector<48x128xf32>
    %242 = arith.truncf %241 : vector<48x128xf32> to vector<48x128xbf16>
    %c46_i32_92 = arith.constant 46 : i32
    %243 = tpu.dynamic_rotate %230 by %c46_i32_92 dim 0 : vector<48x128xf32>, i32 -> vector<48x128xf32>
    %cst_93 = arith.constant 0.000000e+00 : f32
    %244 = vector.shape_cast %84 : vector<48x1xi1> to vector<48x1xi1>
    %245 = vector.broadcast %244 : vector<48x1xi1> to vector<48x128xi1>
    %246 = vector.broadcast %cst_93 : f32 to vector<48x128xf32>
    %247 = arith.select %245, %243, %246 : vector<48x128xi1>, vector<48x128xf32>
    %248 = arith.truncf %247 : vector<48x128xf32> to vector<48x128xbf16>
    %c42_i32 = arith.constant 42 : i32
    %249 = tpu.dynamic_rotate %230 by %c42_i32 dim 0 : vector<48x128xf32>, i32 -> vector<48x128xf32>
    %cst_94 = arith.constant 0.000000e+00 : f32
    %250 = vector.shape_cast %102 : vector<48x1xi1> to vector<48x1xi1>
    %251 = vector.broadcast %250 : vector<48x1xi1> to vector<48x128xi1>
    %252 = vector.broadcast %cst_94 : f32 to vector<48x128xf32>
    %253 = arith.select %251, %249, %252 : vector<48x128xi1>, vector<48x128xf32>
    %254 = arith.truncf %253 : vector<48x128xf32> to vector<48x128xbf16>
    %255 = tpu.concatenate %236, %242, %248, %254 in 1 : vector<48x128xbf16>, vector<48x128xbf16>, vector<48x128xbf16>, vector<48x128xbf16> -> vector<48x512xbf16>
    %c4 = arith.constant 4 : index
    %c0_95 = arith.constant 0 : index
    %c0_96 = arith.constant 0 : index
    %256 = vector.load %arg3[%c4, %c0_95, %c0_96] : memref<8x512x128xbf16, #tpu.memory_space<vmem>>, vector<1x512x128xbf16>
    %257 = vector.shape_cast %256 : vector<1x512x128xbf16> to vector<512x128xbf16>
    %cst_97 = arith.constant dense<0.000000e+00> : vector<48x128xf32>
    %258 = tpu.matmul %255, %257, %cst_97 {dimension_numbers = #tpu.dot_dimension_numbers<[1], [0], [0], [1], [0, 0, 1, 1], [], []>} : vector<48x512xbf16>, vector<512x128xbf16>, vector<48x128xf32> -> vector<48x128xf32>
    %c4_98 = arith.constant 4 : index
    %c0_99 = arith.constant 0 : index
    %c0_100 = arith.constant 0 : index
    %259 = vector.load %arg4[%c4_98, %c0_99, %c0_100] : memref<8x1x128xf32, #tpu.memory_space<vmem>>, vector<1x1x128xf32>
    %260 = vector.shape_cast %259 : vector<1x1x128xf32> to vector<1x128xf32>
    %261 = vector.broadcast %260 : vector<1x128xf32> to vector<48x128xf32>
    %262 = arith.addf %258, %261 : vector<48x128xf32>
    %cst_101 = arith.constant 0.000000e+00 : f32
    %263 = vector.broadcast %cst_101 : f32 to vector<48x128xf32>
    %264 = arith.maximumf %262, %263 : vector<48x128xf32>
    %c6_i32_102 = arith.constant 6 : i32
    %265 = tpu.dynamic_rotate %264 by %c6_i32_102 dim 0 : vector<48x128xf32>, i32 -> vector<48x128xf32>
    %cst_103 = arith.constant 0.000000e+00 : f32
    %266 = vector.shape_cast %39 : vector<48x1xi1> to vector<48x1xi1>
    %267 = vector.broadcast %266 : vector<48x1xi1> to vector<48x128xi1>
    %268 = vector.broadcast %cst_103 : f32 to vector<48x128xf32>
    %269 = arith.select %267, %265, %268 : vector<48x128xi1>, vector<48x128xf32>
    %270 = arith.truncf %269 : vector<48x128xf32> to vector<48x128xbf16>
    %c2_i32_104 = arith.constant 2 : i32
    %271 = tpu.dynamic_rotate %264 by %c2_i32_104 dim 0 : vector<48x128xf32>, i32 -> vector<48x128xf32>
    %cst_105 = arith.constant 0.000000e+00 : f32
    %272 = vector.shape_cast %57 : vector<48x1xi1> to vector<48x1xi1>
    %273 = vector.broadcast %272 : vector<48x1xi1> to vector<48x128xi1>
    %274 = vector.broadcast %cst_105 : f32 to vector<48x128xf32>
    %275 = arith.select %273, %271, %274 : vector<48x128xi1>, vector<48x128xf32>
    %276 = arith.truncf %275 : vector<48x128xf32> to vector<48x128xbf16>
    %c46_i32_106 = arith.constant 46 : i32
    %277 = tpu.dynamic_rotate %264 by %c46_i32_106 dim 0 : vector<48x128xf32>, i32 -> vector<48x128xf32>
    %cst_107 = arith.constant 0.000000e+00 : f32
    %278 = vector.shape_cast %84 : vector<48x1xi1> to vector<48x1xi1>
    %279 = vector.broadcast %278 : vector<48x1xi1> to vector<48x128xi1>
    %280 = vector.broadcast %cst_107 : f32 to vector<48x128xf32>
    %281 = arith.select %279, %277, %280 : vector<48x128xi1>, vector<48x128xf32>
    %282 = arith.truncf %281 : vector<48x128xf32> to vector<48x128xbf16>
    %c42_i32_108 = arith.constant 42 : i32
    %283 = tpu.dynamic_rotate %264 by %c42_i32_108 dim 0 : vector<48x128xf32>, i32 -> vector<48x128xf32>
    %cst_109 = arith.constant 0.000000e+00 : f32
    %284 = vector.shape_cast %102 : vector<48x1xi1> to vector<48x1xi1>
    %285 = vector.broadcast %284 : vector<48x1xi1> to vector<48x128xi1>
    %286 = vector.broadcast %cst_109 : f32 to vector<48x128xf32>
    %287 = arith.select %285, %283, %286 : vector<48x128xi1>, vector<48x128xf32>
    %288 = arith.truncf %287 : vector<48x128xf32> to vector<48x128xbf16>
    %289 = tpu.concatenate %270, %276, %282, %288 in 1 : vector<48x128xbf16>, vector<48x128xbf16>, vector<48x128xbf16>, vector<48x128xbf16> -> vector<48x512xbf16>
    %c5 = arith.constant 5 : index
    %c0_110 = arith.constant 0 : index
    %c0_111 = arith.constant 0 : index
    %290 = vector.load %arg3[%c5, %c0_110, %c0_111] : memref<8x512x128xbf16, #tpu.memory_space<vmem>>, vector<1x512x128xbf16>
    %291 = vector.shape_cast %290 : vector<1x512x128xbf16> to vector<512x128xbf16>
    %cst_112 = arith.constant dense<0.000000e+00> : vector<48x128xf32>
    %292 = tpu.matmul %289, %291, %cst_112 {dimension_numbers = #tpu.dot_dimension_numbers<[1], [0], [0], [1], [0, 0, 1, 1], [], []>} : vector<48x512xbf16>, vector<512x128xbf16>, vector<48x128xf32> -> vector<48x128xf32>
    %c5_113 = arith.constant 5 : index
    %c0_114 = arith.constant 0 : index
    %c0_115 = arith.constant 0 : index
    %293 = vector.load %arg4[%c5_113, %c0_114, %c0_115] : memref<8x1x128xf32, #tpu.memory_space<vmem>>, vector<1x1x128xf32>
    %294 = vector.shape_cast %293 : vector<1x1x128xf32> to vector<1x128xf32>
    %295 = vector.broadcast %294 : vector<1x128xf32> to vector<48x128xf32>
    %296 = arith.addf %292, %295 : vector<48x128xf32>
    %cst_116 = arith.constant 0.000000e+00 : f32
    %297 = vector.broadcast %cst_116 : f32 to vector<48x128xf32>
    %298 = arith.maximumf %296, %297 : vector<48x128xf32>
    %299 = arith.addf %230, %298 : vector<48x128xf32>
    %c1_i32_117 = arith.constant 1 : i32
    %300 = tpu.dynamic_rotate %299 by %c1_i32_117 dim 0 : vector<48x128xf32>, i32 -> vector<48x128xf32>
    %cst_118 = arith.constant 0.000000e+00 : f32
    %301 = vector.shape_cast %66 : vector<48x1xi1> to vector<48x1xi1>
    %302 = vector.broadcast %301 : vector<48x1xi1> to vector<48x128xi1>
    %303 = vector.broadcast %cst_118 : f32 to vector<48x128xf32>
    %304 = arith.select %302, %300, %303 : vector<48x128xi1>, vector<48x128xf32>
    %305 = arith.truncf %304 : vector<48x128xf32> to vector<48x128xbf16>
    %306 = arith.truncf %299 : vector<48x128xf32> to vector<48x128xbf16>
    %c47_i32_119 = arith.constant 47 : i32
    %307 = tpu.dynamic_rotate %299 by %c47_i32_119 dim 0 : vector<48x128xf32>, i32 -> vector<48x128xf32>
    %cst_120 = arith.constant 0.000000e+00 : f32
    %308 = vector.shape_cast %75 : vector<48x1xi1> to vector<48x1xi1>
    %309 = vector.broadcast %308 : vector<48x1xi1> to vector<48x128xi1>
    %310 = vector.broadcast %cst_120 : f32 to vector<48x128xf32>
    %311 = arith.select %309, %307, %310 : vector<48x128xi1>, vector<48x128xf32>
    %312 = arith.truncf %311 : vector<48x128xf32> to vector<48x128xbf16>
    %c46_i32_121 = arith.constant 46 : i32
    %313 = tpu.dynamic_rotate %299 by %c46_i32_121 dim 0 : vector<48x128xf32>, i32 -> vector<48x128xf32>
    %cst_122 = arith.constant 0.000000e+00 : f32
    %314 = vector.shape_cast %84 : vector<48x1xi1> to vector<48x1xi1>
    %315 = vector.broadcast %314 : vector<48x1xi1> to vector<48x128xi1>
    %316 = vector.broadcast %cst_122 : f32 to vector<48x128xf32>
    %317 = arith.select %315, %313, %316 : vector<48x128xi1>, vector<48x128xf32>
    %318 = arith.truncf %317 : vector<48x128xf32> to vector<48x128xbf16>
    %319 = tpu.concatenate %305, %306, %312, %318 in 1 : vector<48x128xbf16>, vector<48x128xbf16>, vector<48x128xbf16>, vector<48x128xbf16> -> vector<48x512xbf16>
    %c6 = arith.constant 6 : index
    %c0_123 = arith.constant 0 : index
    %c0_124 = arith.constant 0 : index
    %320 = vector.load %arg3[%c6, %c0_123, %c0_124] : memref<8x512x128xbf16, #tpu.memory_space<vmem>>, vector<1x512x128xbf16>
    %321 = vector.shape_cast %320 : vector<1x512x128xbf16> to vector<512x128xbf16>
    %cst_125 = arith.constant dense<0.000000e+00> : vector<48x128xf32>
    %322 = tpu.matmul %319, %321, %cst_125 {dimension_numbers = #tpu.dot_dimension_numbers<[1], [0], [0], [1], [0, 0, 1, 1], [], []>} : vector<48x512xbf16>, vector<512x128xbf16>, vector<48x128xf32> -> vector<48x128xf32>
    %c6_126 = arith.constant 6 : index
    %c0_127 = arith.constant 0 : index
    %c0_128 = arith.constant 0 : index
    %323 = vector.load %arg4[%c6_126, %c0_127, %c0_128] : memref<8x1x128xf32, #tpu.memory_space<vmem>>, vector<1x1x128xf32>
    %324 = vector.shape_cast %323 : vector<1x1x128xf32> to vector<1x128xf32>
    %325 = vector.broadcast %324 : vector<1x128xf32> to vector<48x128xf32>
    %326 = arith.addf %322, %325 : vector<48x128xf32>
    %cst_129 = arith.constant 0.000000e+00 : f32
    %327 = vector.broadcast %cst_129 : f32 to vector<48x128xf32>
    %328 = arith.maximumf %326, %327 : vector<48x128xf32>
    %c1_i32_130 = arith.constant 1 : i32
    %329 = tpu.dynamic_rotate %328 by %c1_i32_130 dim 0 : vector<48x128xf32>, i32 -> vector<48x128xf32>
    %cst_131 = arith.constant 0.000000e+00 : f32
    %330 = vector.shape_cast %66 : vector<48x1xi1> to vector<48x1xi1>
    %331 = vector.broadcast %330 : vector<48x1xi1> to vector<48x128xi1>
    %332 = vector.broadcast %cst_131 : f32 to vector<48x128xf32>
    %333 = arith.select %331, %329, %332 : vector<48x128xi1>, vector<48x128xf32>
    %334 = arith.truncf %333 : vector<48x128xf32> to vector<48x128xbf16>
    %335 = arith.truncf %328 : vector<48x128xf32> to vector<48x128xbf16>
    %c47_i32_132 = arith.constant 47 : i32
    %336 = tpu.dynamic_rotate %328 by %c47_i32_132 dim 0 : vector<48x128xf32>, i32 -> vector<48x128xf32>
    %cst_133 = arith.constant 0.000000e+00 : f32
    %337 = vector.shape_cast %75 : vector<48x1xi1> to vector<48x1xi1>
    %338 = vector.broadcast %337 : vector<48x1xi1> to vector<48x128xi1>
    %339 = vector.broadcast %cst_133 : f32 to vector<48x128xf32>
    %340 = arith.select %338, %336, %339 : vector<48x128xi1>, vector<48x128xf32>
    %341 = arith.truncf %340 : vector<48x128xf32> to vector<48x128xbf16>
    %c46_i32_134 = arith.constant 46 : i32
    %342 = tpu.dynamic_rotate %328 by %c46_i32_134 dim 0 : vector<48x128xf32>, i32 -> vector<48x128xf32>
    %cst_135 = arith.constant 0.000000e+00 : f32
    %343 = vector.shape_cast %84 : vector<48x1xi1> to vector<48x1xi1>
    %344 = vector.broadcast %343 : vector<48x1xi1> to vector<48x128xi1>
    %345 = vector.broadcast %cst_135 : f32 to vector<48x128xf32>
    %346 = arith.select %344, %342, %345 : vector<48x128xi1>, vector<48x128xf32>
    %347 = arith.truncf %346 : vector<48x128xf32> to vector<48x128xbf16>
    %348 = tpu.concatenate %334, %335, %341, %347 in 1 : vector<48x128xbf16>, vector<48x128xbf16>, vector<48x128xbf16>, vector<48x128xbf16> -> vector<48x512xbf16>
    %c7 = arith.constant 7 : index
    %c0_136 = arith.constant 0 : index
    %c0_137 = arith.constant 0 : index
    %349 = vector.load %arg3[%c7, %c0_136, %c0_137] : memref<8x512x128xbf16, #tpu.memory_space<vmem>>, vector<1x512x128xbf16>
    %350 = vector.shape_cast %349 : vector<1x512x128xbf16> to vector<512x128xbf16>
    %cst_138 = arith.constant dense<0.000000e+00> : vector<48x128xf32>
    %351 = tpu.matmul %348, %350, %cst_138 {dimension_numbers = #tpu.dot_dimension_numbers<[1], [0], [0], [1], [0, 0, 1, 1], [], []>} : vector<48x512xbf16>, vector<512x128xbf16>, vector<48x128xf32> -> vector<48x128xf32>
    %c7_139 = arith.constant 7 : index
    %c0_140 = arith.constant 0 : index
    %c0_141 = arith.constant 0 : index
    %352 = vector.load %arg4[%c7_139, %c0_140, %c0_141] : memref<8x1x128xf32, #tpu.memory_space<vmem>>, vector<1x1x128xf32>
    %353 = vector.shape_cast %352 : vector<1x1x128xf32> to vector<1x128xf32>
    %354 = vector.broadcast %353 : vector<1x128xf32> to vector<48x128xf32>
    %355 = arith.addf %351, %354 : vector<48x128xf32>
    %cst_142 = arith.constant 0.000000e+00 : f32
    %356 = vector.broadcast %cst_142 : f32 to vector<48x128xf32>
    %357 = arith.maximumf %355, %356 : vector<48x128xf32>
    %358 = arith.addf %299, %357 : vector<48x128xf32>
    %359 = arith.truncf %358 : vector<48x128xf32> to vector<48x128xbf16>
    %c0_143 = arith.constant 0 : index
    %c0_144 = arith.constant 0 : index
    %360 = vector.load %arg5[%c0_143, %c0_144] : memref<128x128xbf16, #tpu.memory_space<vmem>>, vector<128x128xbf16>
    %cst_145 = arith.constant dense<0.000000e+00> : vector<48x128xf32>
    %361 = tpu.matmul %359, %360, %cst_145 {dimension_numbers = #tpu.dot_dimension_numbers<[1], [0], [0], [1], [0, 0, 1, 1], [], []>} : vector<48x128xbf16>, vector<128x128xbf16>, vector<48x128xf32> -> vector<48x128xf32>
    %c0_146 = arith.constant 0 : index
    %c0_147 = arith.constant 0 : index
    %362 = vector.load %arg6[%c0_146, %c0_147] : memref<1x128xf32, #tpu.memory_space<vmem>>, vector<1x128xf32>
    %363 = vector.broadcast %362 : vector<1x128xf32> to vector<48x128xf32>
    %364 = arith.addf %361, %363 : vector<48x128xf32>
    %365 = arith.addf %364, %13 : vector<48x128xf32>
    %cst_148 = arith.constant 0.000000e+00 : f32
    %366 = vector.broadcast %cst_148 : f32 to vector<48x128xf32>
    %367 = arith.maximumf %365, %366 : vector<48x128xf32>
    %368 = arith.truncf %367 : vector<48x128xf32> to vector<48x128xbf16>
    %c0_149 = arith.constant 0 : index
    %c0_150 = arith.constant 0 : index
    %369 = vector.load %arg7[%c0_149, %c0_150] : memref<128x128xbf16, #tpu.memory_space<vmem>>, vector<128x128xbf16>
    %cst_151 = arith.constant dense<0.000000e+00> : vector<48x128xf32>
    %370 = tpu.matmul %368, %369, %cst_151 {dimension_numbers = #tpu.dot_dimension_numbers<[1], [0], [0], [1], [0, 0, 1, 1], [], []>} : vector<48x128xbf16>, vector<128x128xbf16>, vector<48x128xf32> -> vector<48x128xf32>
    %c0_152 = arith.constant 0 : index
    %c0_153 = arith.constant 0 : index
    %371 = vector.load %arg8[%c0_152, %c0_153] : memref<1x128xf32, #tpu.memory_space<vmem>>, vector<1x128xf32>
    %372 = vector.broadcast %371 : vector<1x128xf32> to vector<48x128xf32>
    %373 = arith.addf %370, %372 : vector<48x128xf32>
    %c0_154 = arith.constant 0 : index
    %c0_155 = arith.constant 0 : index
    %374 = vector.load %arg9[%c0_154, %c0_155] : memref<48x128xf32, #tpu.memory_space<vmem>>, vector<48x128xf32>
    tpu.vector_store %arg9[%c0_154, %c0_155], %373 {strides = array<i32>} : memref<48x128xf32, #tpu.memory_space<vmem>>, vector<48x128xf32>,
    return
  }
}

</mosaic_0001>

<llo_original>
// kernel: tpu_custom_call.1
$region0: #{tpu_custom_call.1}
  #allocation0 [shape = 'u32[]', space=smem, size = 0x4, offset = 0x4, fixed_abs, tag = 'smem constant byte address 0x4 - core index']
  #allocation1 [shape = 'u32[144,128]{1,0:T(1,128)}', space=vmem, size = 0x12000, scoped, tag = 'internal scratch']
  %s0 = inlined_call_operand.vmem [shape: s32[48,1], index: 0, kind: input, shape index: {}]
  %s1 = inlined_call_operand.hbm [shape: bf16[128,128], index: 1, kind: input, shape index: {}]
  %s2 = inlined_call_operand.vmem [shape: f32[1,128], index: 2, kind: input, shape index: {}]
  %s3 = inlined_call_operand.hbm [shape: bf16[8,512,128], index: 3, kind: input, shape index: {}]
  %s4 = inlined_call_operand.hbm [shape: f32[8,1,128], index: 4, kind: input, shape index: {}]
  %s5 = inlined_call_operand.vmem [shape: bf16[128,128], index: 5, kind: input, shape index: {}]
  %s6 = inlined_call_operand.vmem [shape: f32[1,128], index: 6, kind: input, shape index: {}]
  %s7 = inlined_call_operand.hbm [shape: bf16[128,128], index: 7, kind: input, shape index: {}]
  %s8 = inlined_call_operand.vmem [shape: f32[1,128], index: 8, kind: input, shape index: {}]
  %s9 = inlined_call_operand.hbm [shape: f32[48,128], index: 9, kind: output, shape index: {}]
  %s10 = sld [smem:[#allocation0]]
  $region62: #{tpu_custom_call.1} parent=0
    _
  %s12 = ssub.s32 1, %s10
  %s13 = scalar_select 0, %s12, %s10
  $region1: #{tpu_custom_call.1} parent=0
    #allocation2 [shape = 'u8[32768]{0}', space=vmem, size = 0x8000, scoped, tag = 'input window, operand 1, single buffered']
    #allocation3 [shape = 's32[1]{0}', space=sflag, size = 0x4, scoped, tag = 'scoped memory for tpu_custom_call.1']
    #allocation4 [shape = 's32[1]{0}', space=sflag, size = 0x4, scoped, tag = 'scoped memory for tpu_custom_call.1']
    #allocation5 [shape = 'u8[1048576]{0}', space=vmem, size = 0x100000, scoped, tag = 'input window, operand 3, single buffered']
    #allocation6 [shape = 's32[1]{0}', space=sflag, size = 0x4, scoped, tag = 'scoped memory for tpu_custom_call.1']
    #allocation7 [shape = 'u8[4096]{0}', space=vmem, size = 0x1000, scoped, tag = 'input window, operand 4, single buffered']
    #allocation8 [shape = 'u8[32768]{0}', space=vmem, size = 0x8000, scoped, tag = 'input window, operand 7, single buffered']
    #allocation9 [shape = 's32[1]{0}', space=sflag, size = 0x4, scoped, tag = 'scoped memory for tpu_custom_call.1']
    #allocation10 [shape = 'u8[24576]{0}', space=vmem, size = 0x6000, scoped, tag = 'output window, operand 0, single buffered']
    %14 = vsyncpa [#allocation3], 0
    %15 = vsyncpa [#allocation6], 0
    %16 = vsyncpa [#allocation9], 0
    %17 = vsyncpa [#allocation4], 0
    // Predicated region
    $region2: #{tpu_custom_call.1} parent=1 // pred_check
      _
    $region3: #{tpu_custom_call.1} parent=1 // pred_check_branch
      %19 = sbr.rel (0) target = $region5
    $region4: #{tpu_custom_call.1} parent=1 // pred_region
      _
    $region5: #{tpu_custom_call.1} parent=1 // pred_fallthru
      _
    // Predicated region
    $region6: #{tpu_custom_call.1} parent=1 // pred_check
      _
    $region7: #{tpu_custom_call.1} parent=1 // pred_check_branch
      %21 = sbr.rel (0) target = $region9
    $region8: #{tpu_custom_call.1} parent=1 // pred_region
      %s23 = ssub.s32 1024, 1024
      %24 = vsyncadd [#allocation3], %s23
      %s25 = sshll.u32 [#allocation2], 4
      %s26 = int_to_ptr.vmem [resolvable:$true] %s25
      %31 = dma.hbm_to_vmem [thread:$0]  %s1, 1024, %s26, [#allocation3], 64, 64, 4
    $region9: #{tpu_custom_call.1} parent=1 // pred_fallthru
      _
    // Predicated region
    $region10: #{tpu_custom_call.1} parent=1 // pred_check
      _
    $region11: #{tpu_custom_call.1} parent=1 // pred_check_branch
      %33 = sbr.rel (0) target = $region13
    $region12: #{tpu_custom_call.1} parent=1 // pred_region
      _
    $region13: #{tpu_custom_call.1} parent=1 // pred_fallthru
      _
    // Predicated region
    $region14: #{tpu_custom_call.1} parent=1 // pred_check
      _
    $region15: #{tpu_custom_call.1} parent=1 // pred_check_branch
      %35 = sbr.rel (0) target = $region17
    $region16: #{tpu_custom_call.1} parent=1 // pred_region
      %s37 = ssub.s32 32768, 32768
      %38 = vsyncadd [#allocation6], %s37
      %s39 = sshll.u32 [#allocation5], 4
      %s40 = int_to_ptr.vmem [resolvable:$true] %s39
      %45 = dma.hbm_to_vmem [thread:$0]  %s3, 32768, %s40, [#allocation6], 64, 64, 4
    $region17: #{tpu_custom_call.1} parent=1 // pred_fallthru
      _
    // Predicated region
    $region18: #{tpu_custom_call.1} parent=1 // pred_check
      _
    $region19: #{tpu_custom_call.1} parent=1 // pred_check_branch
      %47 = sbr.rel (0) target = $region21
    $region20: #{tpu_custom_call.1} parent=1 // pred_region
      %s49 = ssub.s32 128, 128
      %50 = vsyncadd [#allocation6], %s49
      %s51 = sshll.u32 [#allocation7], 4
      %s52 = int_to_ptr.vmem [resolvable:$true] %s51
      %57 = dma.hbm_to_vmem [thread:$0]  %s4, 128, %s52, [#allocation6], 16, 16, 1
    $region21: #{tpu_custom_call.1} parent=1 // pred_fallthru
      _
    // Predicated region
    $region22: #{tpu_custom_call.1} parent=1 // pred_check
      _
    $region23: #{tpu_custom_call.1} parent=1 // pred_check_branch
      %59 = sbr.rel (0) target = $region25
    $region24: #{tpu_custom_call.1} parent=1 // pred_region
      _
    $region25: #{tpu_custom_call.1} parent=1 // pred_fallthru
      _
    // Predicated region
    $region26: #{tpu_custom_call.1} parent=1 // pred_check
      _
    $region27: #{tpu_custom_call.1} parent=1 // pred_check_branch
      %61 = sbr.rel (0) target = $region29
    $region28: #{tpu_custom_call.1} parent=1 // pred_region
      _
    $region29: #{tpu_custom_call.1} parent=1 // pred_fallthru
      _
    // Predicated region
    $region30: #{tpu_custom_call.1} parent=1 // pred_check
      _
    $region31: #{tpu_custom_call.1} parent=1 // pred_check_branch
      %63 = sbr.rel (0) target = $region33
    $region32: #{tpu_custom_call.1} parent=1 // pred_region
      %s65 = ssub.s32 1024, 1024
      %66 = vsyncadd [#allocation9], %s65
      %s67 = sshll.u32 [#allocation8], 4
      %s68 = int_to_ptr.vmem [resolvable:$true] %s67
      %73 = dma.hbm_to_vmem [thread:$0]  %s7, 1024, %s68, [#allocation9], 64, 64, 4
    $region33: #{tpu_custom_call.1} parent=1 // pred_fallthru
      _
    // Predicated region
    $region34: #{tpu_custom_call.1} parent=1 // pred_check
      _
    $region35: #{tpu_custom_call.1} parent=1 // pred_check_branch
      %75 = sbr.rel (0) target = $region37
    $region36: #{tpu_custom_call.1} parent=1 // pred_region
      _
    $region37: #{tpu_custom_call.1} parent=1 // pred_fallthru
      _
    // Predicated region
    $region38: #{tpu_custom_call.1} parent=1 // pred_check
      _
    $region39: #{tpu_custom_call.1} parent=1 // pred_check_branch
      %77 = sbr.rel (0) target = $region41
    $region40: #{tpu_custom_call.1} parent=1 // pred_region
      %78 = dma.done [#allocation3], 1024
    $region41: #{tpu_custom_call.1} parent=1 // pred_fallthru
      _
    // Predicated region
    $region42: #{tpu_custom_call.1} parent=1 // pred_check
      _
    $region43: #{tpu_custom_call.1} parent=1 // pred_check_branch
      %80 = sbr.rel (0) target = $region45
    $region44: #{tpu_custom_call.1} parent=1 // pred_region
      %81 = dma.done [#allocation6], 32768
    $region45: #{tpu_custom_call.1} parent=1 // pred_fallthru
      _
    // Predicated region
    $region46: #{tpu_custom_call.1} parent=1 // pred_check
      _
    $region47: #{tpu_custom_call.1} parent=1 // pred_check_branch
      %83 = sbr.rel (0) target = $region49
    $region48: #{tpu_custom_call.1} parent=1 // pred_region
      %84 = dma.done [#allocation6], 128
    $region49: #{tpu_custom_call.1} parent=1 // pred_fallthru
      _
    // Predicated region
    $region50: #{tpu_custom_call.1} parent=1 // pred_check
      _
    $region51: #{tpu_custom_call.1} parent=1 // pred_check_branch
      %86 = sbr.rel (0) target = $region53
    $region52: #{tpu_custom_call.1} parent=1 // pred_region
      %87 = dma.done [#allocation9], 1024
    $region53: #{tpu_custom_call.1} parent=1 // pred_fallthru
      _
    %v89 = vld [vmem:[%s0] sm:$0xff]
    %v90 = vld [vmem:[%s0 + $0x8] sm:$0xff]
    %v91 = vld [vmem:[%s0 + $0x10] sm:$0xff]
    %v92 = vld [vmem:[%s0 + $0x18] sm:$0xff]
    %v93 = vld [vmem:[%s0 + $0x20] sm:$0xff]
    %v94 = vld [vmem:[%s0 + $0x28] sm:$0xff]
    %v95 = vlaneseq
    %v96 = vand.u32 %v95, 127
    %97 = vset.pattern.permute.xlu0 0
    %98 = vperm.xlu0 %97, %v89
    %v99 = vpop.permute.xlu0 %98
    %100 = vset.pattern.permute.xlu0 0
    %101 = vperm.xlu0 %100, %v90
    %v102 = vpop.permute.xlu0 %101
    %103 = vset.pattern.permute.xlu0 0
    %104 = vperm.xlu0 %103, %v91
    %v105 = vpop.permute.xlu0 %104
    %106 = vset.pattern.permute.xlu0 0
    %107 = vperm.xlu0 %106, %v92
    %v108 = vpop.permute.xlu0 %107
    %109 = vset.pattern.permute.xlu0 0
    %110 = vperm.xlu0 %109, %v93
    %v111 = vpop.permute.xlu0 %110
    %112 = vset.pattern.permute.xlu0 0
    %113 = vperm.xlu0 %112, %v94
    %v114 = vpop.permute.xlu0 %113
    %vm115 = vcmp.eq.s32.totalorder %v96, %v99
    %vm116 = vcmp.eq.s32.totalorder %v96, %v102
    %vm117 = vcmp.eq.s32.totalorder %v96, %v105
    %vm118 = vcmp.eq.s32.totalorder %v96, %v108
    %vm119 = vcmp.eq.s32.totalorder %v96, %v111
    %vm120 = vcmp.eq.s32.totalorder %v96, %v114
    %v121 = vsel %vm115, 1, 0
    %v122 = vsel %vm116, 1, 0
    %v123 = vsel %vm117, 1, 0
    %v124 = vsel %vm118, 1, 0
    %v125 = vsel %vm119, 1, 0
    %v126 = vsel %vm120, 1, 0
    %v127 = vcvt.s32.f32 %v121
    %v128 = vcvt.s32.f32 %v122
    %v129 = vcvt.s32.f32 %v123
    %v130 = vcvt.s32.f32 %v124
    %v131 = vcvt.s32.f32 %v125
    %v132 = vcvt.s32.f32 %v126
    %v133 = vpack.c.bf16 %v128, %v127
    %v134 = vpack.c.bf16 %v130, %v129
    %v135 = vpack.c.bf16 %v132, %v131
    %v136 = vld [vmem:[#allocation2] sm:$0xf]
    %v137 = vld [vmem:[#allocation2 + $0x4] sm:$0xf]
    %v138 = vld [vmem:[#allocation2 + $0x8] sm:$0xf]
    %v139 = vld [vmem:[#allocation2 + $0xc] sm:$0xf]
    %v140 = vld [vmem:[#allocation2 + $0x10] sm:$0xf]
    %v141 = vld [vmem:[#allocation2 + $0x14] sm:$0xf]
    %v142 = vld [vmem:[#allocation2 + $0x18] sm:$0xf]
    %v143 = vld [vmem:[#allocation2 + $0x1c] sm:$0xf]
    %v144 = vld [vmem:[#allocation2 + $0x20] sm:$0xf]
    %v145 = vld [vmem:[#allocation2 + $0x24] sm:$0xf]
    %v146 = vld [vmem:[#allocation2 + $0x28] sm:$0xf]
    %v147 = vld [vmem:[#allocation2 + $0x2c] sm:$0xf]
    %v148 = vld [vmem:[#allocation2 + $0x30] sm:$0xf]
    %v149 = vld [vmem:[#allocation2 + $0x34] sm:$0xf]
    %v150 = vld [vmem:[#allocation2 + $0x38] sm:$0xf]
    %v151 = vld [vmem:[#allocation2 + $0x3c] sm:$0xf]
    %v152 = vld [vmem:[%s2] sm:$0x1]
    %v154 = vlaneseq
    %v155 = vshrl.u32 %v154, 7
    %v156 = vsub.s32 0, %v155
    %v157 = vrot.slane %v152, %v156
    %v175 = vunpack.c.l.b16 %v136
    %v176 = vunpack.c.l.b16 %v137
    %v177 = vunpack.c.l.b16 %v138
    %v178 = vunpack.c.l.b16 %v139
    %v179 = vunpack.c.l.b16 %v140
    %v180 = vunpack.c.l.b16 %v141
    %v181 = vunpack.c.l.b16 %v142
    %v182 = vunpack.c.l.b16 %v143
    %v183 = vunpack.c.l.b16 %v144
    %v184 = vunpack.c.l.b16 %v145
    %v185 = vunpack.c.l.b16 %v146
    %v186 = vunpack.c.l.b16 %v147
    %v187 = vunpack.c.l.b16 %v148
    %v188 = vunpack.c.l.b16 %v149
    %v189 = vunpack.c.l.b16 %v150
    %v190 = vunpack.c.l.b16 %v151
    %v191 = vpack.c.b16 %v176, %v175
    %v192 = vpack.c.b16 %v178, %v177
    %v193 = vpack.c.b16 %v180, %v179
    %v194 = vpack.c.b16 %v182, %v181
    %v195 = vpack.c.b16 %v184, %v183
    %v196 = vpack.c.b16 %v186, %v185
    %v197 = vpack.c.b16 %v188, %v187
    %v198 = vpack.c.b16 %v190, %v189
    %207 = vmatprep.subr.bf16.mxu0 0
    %208 = vmatpush1.bf16.msra.mxu0 %v191
    %209 = vmatprep.subr.bf16.mxu0 0
    %210 = vmatpush1.bf16.msra.mxu0 %v192
    %211 = vmatprep.subr.bf16.mxu0 0
    %212 = vmatpush1.bf16.msra.mxu0 %v193
    %213 = vmatprep.subr.bf16.mxu0 0
    %214 = vmatpush1.bf16.msra.mxu0 %v194
    %215 = vmatprep.subr.bf16.mxu0 0
    %216 = vmatpush1.bf16.msra.mxu0 %v195
    %217 = vmatprep.subr.bf16.mxu0 0
    %218 = vmatpush1.bf16.msra.mxu0 %v196
    %219 = vmatprep.subr.bf16.mxu0 0
    %220 = vmatpush1.bf16.msra.mxu0 %v197
    %221 = vmatprep.subr.bf16.mxu0 0
    %222 = vmatpush1.bf16.msra.mxu0 %v198
    %223 = vmatprep.subr.bf16.mxu0 0
    %224 = vmatpush1.bf16.msra.mxu0 0
    %225 = vmatprep.subr.bf16.mxu0 0
    %226 = vmatpush1.bf16.msra.mxu0 0
    %227 = vmatprep.subr.bf16.mxu0 0
    %228 = vmatpush1.bf16.msra.mxu0 0
    %229 = vmatprep.subr.bf16.mxu0 0
    %230 = vmatpush1.bf16.msra.mxu0 0
    %231 = vmatprep.subr.bf16.mxu0 0
    %232 = vmatpush1.bf16.msra.mxu0 0
    %233 = vmatprep.subr.bf16.mxu0 0
    %234 = vmatpush1.bf16.msra.mxu0 0
    %235 = vmatprep.subr.bf16.mxu0 0
    %236 = vmatpush1.bf16.msra.mxu0 0
    %237 = vmatprep.subr.bf16.mxu0 0
    %238 = vmatpush1.bf16.msra.mxu0 0
    %239 = vmatprep.mubr.bf16.mxu0 0
    %240 = vmatmul.mubr.bf16.gmra.mrb[0].mxu0 %v133
    %v241 = vpop.f32.mrb[0].mxu0
    %v242 = vadd.f32 %v157, %v241
    %v243 = vpop.f32.mrb[0].mxu0
    %v244 = vpop.f32.mrb[0].mxu0
    %v245 = vadd.f32 %v157, %v244
    %v246 = vpop.f32.mrb[0].mxu0
    %247 = vmatprep.mubr.bf16.mxu0 0
    %248 = vmatmul.mubr.bf16.gmra.mrb[0].mxu0 %v134
    %v249 = vpop.f32.mrb[0].mxu0
    %v250 = vadd.f32 %v157, %v249
    %v251 = vpop.f32.mrb[0].mxu0
    %v252 = vpop.f32.mrb[0].mxu0
    %v253 = vadd.f32 %v157, %v252
    %v254 = vpop.f32.mrb[0].mxu0
    %255 = vmatprep.mubr.bf16.mxu0 0
    %256 = vmatmul.mubr.bf16.gmra.mrb[0].mxu0 %v135
    %v257 = vpop.f32.mrb[0].mxu0
    %v258 = vadd.f32 %v157, %v257
    %v259 = vpop.f32.mrb[0].mxu0
    %v260 = vpop.f32.mrb[0].mxu0
    %v261 = vadd.f32 %v157, %v260
    %v262 = vpop.f32.mrb[0].mxu0
    %263 = vdwg.mxu0
    %v264 = vmax.f32 %v242, 0.0
    %v265 = vmax.f32 %v245, 0.0
    %v266 = vmax.f32 %v250, 0.0
    %v267 = vmax.f32 %v253, 0.0
    %v268 = vmax.f32 %v258, 0.0
    %v269 = vmax.f32 %v261, 0.0
    %v270 = vlaneseq
    %v271 = vshrl.u32 %v270, 7
    %v272 = vadd.s32 %v271, 8
    %v273 = vadd.s32 %v271, 16
    %v274 = vadd.s32 %v271, 24
    %v275 = vadd.s32 %v271, 32
    %v276 = vadd.s32 %v271, 40
    %vm277 = vcmp.lt.s32.totalorder %v271, 0
    %v278 = vsub.s32 0, %v271
    %v279 = vsel %vm277, %v278, %v271
    %v280 = vmul.u32.u64.compose %v279, 2863311531
    %v281 = vextract.low.u32 %v280
    %v282 = vextract.high.u32 %v280
    %v283 = vshrl.u32 %v282, 4
    %v284 = vmul.u32 %v283, 24
    %v285 = vsub.s32 %v279, %v284
    %v286 = vsub.s32 0, %v285
    %v287 = vsel %vm277, %v286, %v285
    %vm288 = vcmp.lt.s32.totalorder %v272, 0
    %v289 = vsub.s32 0, %v272
    %v290 = vsel %vm288, %v289, %v272
    %v291 = vmul.u32.u64.compose %v290, 2863311531
    %v292 = vextract.low.u32 %v291
    %v293 = vextract.high.u32 %v291
    %v294 = vshrl.u32 %v293, 4
    %v295 = vmul.u32 %v294, 24
    %v296 = vsub.s32 %v290, %v295
    %v297 = vsub.s32 0, %v296
    %v298 = vsel %vm288, %v297, %v296
    %vm299 = vcmp.lt.s32.totalorder %v273, 0
    %v300 = vsub.s32 0, %v273
    %v301 = vsel %vm299, %v300, %v273
    %v302 = vmul.u32.u64.compose %v301, 2863311531
    %v303 = vextract.low.u32 %v302
    %v304 = vextract.high.u32 %v302
    %v305 = vshrl.u32 %v304, 4
    %v306 = vmul.u32 %v305, 24
    %v307 = vsub.s32 %v301, %v306
    %v308 = vsub.s32 0, %v307
    %v309 = vsel %vm299, %v308, %v307
    %vm310 = vcmp.lt.s32.totalorder %v274, 0
    %v311 = vsub.s32 0, %v274
    %v312 = vsel %vm310, %v311, %v274
    %v313 = vmul.u32.u64.compose %v312, 2863311531
    %v314 = vextract.low.u32 %v313
    %v315 = vextract.high.u32 %v313
    %v316 = vshrl.u32 %v315, 4
    %v317 = vmul.u32 %v316, 24
    %v318 = vsub.s32 %v312, %v317
    %v319 = vsub.s32 0, %v318
    %v320 = vsel %vm310, %v319, %v318
    %vm321 = vcmp.lt.s32.totalorder %v275, 0
    %v322 = vsub.s32 0, %v275
    %v323 = vsel %vm321, %v322, %v275
    %v324 = vmul.u32.u64.compose %v323, 2863311531
    %v325 = vextract.low.u32 %v324
    %v326 = vextract.high.u32 %v324
    %v327 = vshrl.u32 %v326, 4
    %v328 = vmul.u32 %v327, 24
    %v329 = vsub.s32 %v323, %v328
    %v330 = vsub.s32 0, %v329
    %v331 = vsel %vm321, %v330, %v329
    %vm332 = vcmp.lt.s32.totalorder %v276, 0
    %v333 = vsub.s32 0, %v276
    %v334 = vsel %vm332, %v333, %v276
    %v335 = vmul.u32.u64.compose %v334, 2863311531
    %v336 = vextract.low.u32 %v335
    %v337 = vextract.high.u32 %v335
    %v338 = vshrl.u32 %v337, 4
    %v339 = vmul.u32 %v338, 24
    %v340 = vsub.s32 %v334, %v339
    %v341 = vsub.s32 0, %v340
    %v342 = vsel %vm332, %v341, %v340
    %vm343 = vcmp.ne.s32.totalorder %v287, 0
    %vm344 = vcmp.ne.s32.totalorder %v298, 0
    %vm345 = vcmp.ne.s32.totalorder %v309, 0
    %vm346 = vcmp.ne.s32.totalorder %v320, 0
    %vm347 = vcmp.ne.s32.totalorder %v331, 0
    %vm348 = vcmp.ne.s32.totalorder %v342, 0
    %vm349 = vcmp.lt.s32.totalorder %v287, 0
    %vm350 = vcmp.lt.s32.totalorder %v298, 0
    %vm351 = vcmp.lt.s32.totalorder %v309, 0
    %vm352 = vcmp.lt.s32.totalorder %v320, 0
    %vm353 = vcmp.lt.s32.totalorder %v331, 0
    %vm354 = vcmp.lt.s32.totalorder %v342, 0
    %vm355 = vmand %vm349, %vm343
    %vm356 = vmand %vm350, %vm344
    %vm357 = vmand %vm351, %vm345
    %vm358 = vmand %vm352, %vm346
    %vm359 = vmand %vm353, %vm347
    %vm360 = vmand %vm354, %vm348
    %v361 = vadd.s32 %v287, 24
    %v362 = vadd.s32 %v298, 24
    %v363 = vadd.s32 %v309, 24
    %v364 = vadd.s32 %v320, 24
    %v365 = vadd.s32 %v331, 24
    %v366 = vadd.s32 %v342, 24
    %v367 = vsel %vm355, %v361, %v287
    %v368 = vsel %vm356, %v362, %v298
    %v369 = vsel %vm357, %v363, %v309
    %v370 = vsel %vm358, %v364, %v320
    %v371 = vsel %vm359, %v365, %v331
    %v372 = vsel %vm360, %v366, %v342
    %v373 = vadd.s32 %v367, 4294967290
    %v374 = vadd.s32 %v368, 4294967290
    %v375 = vadd.s32 %v369, 4294967290
    %v376 = vadd.s32 %v370, 4294967290
    %v377 = vadd.s32 %v371, 4294967290
    %v378 = vadd.s32 %v372, 4294967290
    %vm379 = vcmp.ge.s32.totalorder %v373, 0
    %vm380 = vcmp.ge.s32.totalorder %v374, 0
    %vm381 = vcmp.ge.s32.totalorder %v375, 0
    %vm382 = vcmp.ge.s32.totalorder %v376, 0
    %vm383 = vcmp.ge.s32.totalorder %v377, 0
    %vm384 = vcmp.ge.s32.totalorder %v378, 0
    %vm385 = vcmp.lt.s32.totalorder %v373, 24
    %vm386 = vcmp.lt.s32.totalorder %v374, 24
    %vm387 = vcmp.lt.s32.totalorder %v375, 24
    %vm388 = vcmp.lt.s32.totalorder %v376, 24
    %vm389 = vcmp.lt.s32.totalorder %v377, 24
    %vm390 = vcmp.lt.s32.totalorder %v378, 24
    %vm391 = vmand %vm379, %vm385
    %vm392 = vmand %vm380, %vm386
    %vm393 = vmand %vm381, %vm387
    %vm394 = vmand %vm382, %vm388
    %vm395 = vmand %vm383, %vm389
    %vm396 = vmand %vm384, %vm390
    %v397 = vadd.s32 %v367, 4294967293
    %v398 = vadd.s32 %v368, 4294967293
    %v399 = vadd.s32 %v369, 4294967293
    %v400 = vadd.s32 %v370, 4294967293
    %v401 = vadd.s32 %v371, 4294967293
    %v402 = vadd.s32 %v372, 4294967293
    %vm403 = vcmp.ge.s32.totalorder %v397, 0
    %vm404 = vcmp.ge.s32.totalorder %v398, 0
    %vm405 = vcmp.ge.s32.totalorder %v399, 0
    %vm406 = vcmp.ge.s32.totalorder %v400, 0
    %vm407 = vcmp.ge.s32.totalorder %v401, 0
    %vm408 = vcmp.ge.s32.totalorder %v402, 0
    %vm409 = vcmp.lt.s32.totalorder %v397, 24
    %vm410 = vcmp.lt.s32.totalorder %v398, 24
    %vm411 = vcmp.lt.s32.totalorder %v399, 24
    %vm412 = vcmp.lt.s32.totalorder %v400, 24
    %vm413 = vcmp.lt.s32.totalorder %v401, 24
    %vm414 = vcmp.lt.s32.totalorder %v402, 24
    %vm415 = vmand %vm403, %vm409
    %vm416 = vmand %vm404, %vm410
    %vm417 = vmand %vm405, %vm411
    %vm418 = vmand %vm406, %vm412
    %vm419 = vmand %vm407, %vm413
    %vm420 = vmand %vm408, %vm414
    %v421 = vadd.s32 %v367, 4294967294
    %v422 = vadd.s32 %v368, 4294967294
    %v423 = vadd.s32 %v369, 4294967294
    %v424 = vadd.s32 %v370, 4294967294
    %v425 = vadd.s32 %v371, 4294967294
    %v426 = vadd.s32 %v372, 4294967294
    %vm427 = vcmp.ge.s32.totalorder %v421, 0
    %vm428 = vcmp.ge.s32.totalorder %v422, 0
    %vm429 = vcmp.ge.s32.totalorder %v423, 0
    %vm430 = vcmp.ge.s32.totalorder %v424, 0
    %vm431 = vcmp.ge.s32.totalorder %v425, 0
    %vm432 = vcmp.ge.s32.totalorder %v426, 0
    %vm433 = vcmp.lt.s32.totalorder %v421, 24
    %vm434 = vcmp.lt.s32.totalorder %v422, 24
    %vm435 = vcmp.lt.s32.totalorder %v423, 24
    %vm436 = vcmp.lt.s32.totalorder %v424, 24
    %vm437 = vcmp.lt.s32.totalorder %v425, 24
    %vm438 = vcmp.lt.s32.totalorder %v426, 24
    %vm439 = vmand %vm427, %vm433
    %vm440 = vmand %vm428, %vm434
    %vm441 = vmand %vm429, %vm435
    %vm442 = vmand %vm430, %vm436
    %vm443 = vmand %vm431, %vm437
    %vm444 = vmand %vm432, %vm438
    %v445 = vadd.s32 %v367, 4294967295
    %v446 = vadd.s32 %v368, 4294967295
    %v447 = vadd.s32 %v369, 4294967295
    %v448 = vadd.s32 %v370, 4294967295
    %v449 = vadd.s32 %v371, 4294967295
    %v450 = vadd.s32 %v372, 4294967295
    %vm451 = vcmp.ge.s32.totalorder %v445, 0
    %vm452 = vcmp.ge.s32.totalorder %v446, 0
    %vm453 = vcmp.ge.s32.totalorder %v447, 0
    %vm454 = vcmp.ge.s32.totalorder %v448, 0
    %vm455 = vcmp.ge.s32.totalorder %v449, 0
    %vm456 = vcmp.ge.s32.totalorder %v450, 0
    %vm457 = vcmp.lt.s32.totalorder %v445, 24
    %vm458 = vcmp.lt.s32.totalorder %v446, 24
    %vm459 = vcmp.lt.s32.totalorder %v447, 24
    %vm460 = vcmp.lt.s32.totalorder %v448, 24
    %vm461 = vcmp.lt.s32.totalorder %v449, 24
    %vm462 = vcmp.lt.s32.totalorder %v450, 24
    %vm463 = vmand %vm451, %vm457
    %vm464 = vmand %vm452, %vm458
    %vm465 = vmand %vm453, %vm459
    %vm466 = vmand %vm454, %vm460
    %vm467 = vmand %vm455, %vm461
    %vm468 = vmand %vm456, %vm462
    %v469 = vadd.s32 %v367, 1
    %v470 = vadd.s32 %v368, 1
    %v471 = vadd.s32 %v369, 1
    %v472 = vadd.s32 %v370, 1
    %v473 = vadd.s32 %v371, 1
    %v474 = vadd.s32 %v372, 1
    %vm475 = vcmp.ge.s32.totalorder %v469, 0
    %vm476 = vcmp.ge.s32.totalorder %v470, 0
    %vm477 = vcmp.ge.s32.totalorder %v471, 0
    %vm478 = vcmp.ge.s32.totalorder %v472, 0
    %vm479 = vcmp.ge.s32.totalorder %v473, 0
    %vm480 = vcmp.ge.s32.totalorder %v474, 0
    %vm481 = vcmp.lt.s32.totalorder %v469, 24
    %vm482 = vcmp.lt.s32.totalorder %v470, 24
    %vm483 = vcmp.lt.s32.totalorder %v471, 24
    %vm484 = vcmp.lt.s32.totalorder %v472, 24
    %vm485 = vcmp.lt.s32.totalorder %v473, 24
    %vm486 = vcmp.lt.s32.totalorder %v474, 24
    %vm487 = vmand %vm475, %vm481
    %vm488 = vmand %vm476, %vm482
    %vm489 = vmand %vm477, %vm483
    %vm490 = vmand %vm478, %vm484
    %vm491 = vmand %vm479, %vm485
    %vm492 = vmand %vm480, %vm486
    %v493 = vadd.s32 %v367, 2
    %v494 = vadd.s32 %v368, 2
    %v495 = vadd.s32 %v369, 2
    %v496 = vadd.s32 %v370, 2
    %v497 = vadd.s32 %v371, 2
    %v498 = vadd.s32 %v372, 2
    %vm499 = vcmp.ge.s32.totalorder %v493, 0
    %vm500 = vcmp.ge.s32.totalorder %v494, 0
    %vm501 = vcmp.ge.s32.totalorder %v495, 0
    %vm502 = vcmp.ge.s32.totalorder %v496, 0
    %vm503 = vcmp.ge.s32.totalorder %v497, 0
    %vm504 = vcmp.ge.s32.totalorder %v498, 0
    %vm505 = vcmp.lt.s32.totalorder %v493, 24
    %vm506 = vcmp.lt.s32.totalorder %v494, 24
    %vm507 = vcmp.lt.s32.totalorder %v495, 24
    %vm508 = vcmp.lt.s32.totalorder %v496, 24
    %vm509 = vcmp.lt.s32.totalorder %v497, 24
    %vm510 = vcmp.lt.s32.totalorder %v498, 24
    %vm511 = vmand %vm499, %vm505
    %vm512 = vmand %vm500, %vm506
    %vm513 = vmand %vm501, %vm507
    %vm514 = vmand %vm502, %vm508
    %vm515 = vmand %vm503, %vm509
    %vm516 = vmand %vm504, %vm510
    %v517 = vadd.s32 %v367, 3
    %v518 = vadd.s32 %v368, 3
    %v519 = vadd.s32 %v369, 3
    %v520 = vadd.s32 %v370, 3
    %v521 = vadd.s32 %v371, 3
    %v522 = vadd.s32 %v372, 3
    %vm523 = vcmp.ge.s32.totalorder %v517, 0
    %vm524 = vcmp.ge.s32.totalorder %v518, 0
    %vm525 = vcmp.ge.s32.totalorder %v519, 0
    %vm526 = vcmp.ge.s32.totalorder %v520, 0
    %vm527 = vcmp.ge.s32.totalorder %v521, 0
    %vm528 = vcmp.ge.s32.totalorder %v522, 0
    %vm529 = vcmp.lt.s32.totalorder %v517, 24
    %vm530 = vcmp.lt.s32.totalorder %v518, 24
    %vm531 = vcmp.lt.s32.totalorder %v519, 24
    %vm532 = vcmp.lt.s32.totalorder %v520, 24
    %vm533 = vcmp.lt.s32.totalorder %v521, 24
    %vm534 = vcmp.lt.s32.totalorder %v522, 24
    %vm535 = vmand %vm523, %vm529
    %vm536 = vmand %vm524, %vm530
    %vm537 = vmand %vm525, %vm531
    %vm538 = vmand %vm526, %vm532
    %vm539 = vmand %vm527, %vm533
    %vm540 = vmand %vm528, %vm534
    %v541 = vadd.s32 %v367, 6
    %v542 = vadd.s32 %v368, 6
    %v543 = vadd.s32 %v369, 6
    %v544 = vadd.s32 %v370, 6
    %v545 = vadd.s32 %v371, 6
    %v546 = vadd.s32 %v372, 6
    %vm547 = vcmp.ge.s32.totalorder %v541, 0
    %vm548 = vcmp.ge.s32.totalorder %v542, 0
    %vm549 = vcmp.ge.s32.totalorder %v543, 0
    %vm550 = vcmp.ge.s32.totalorder %v544, 0
    %vm551 = vcmp.ge.s32.totalorder %v545, 0
    %vm552 = vcmp.ge.s32.totalorder %v546, 0
    %vm553 = vcmp.lt.s32.totalorder %v541, 24
    %vm554 = vcmp.lt.s32.totalorder %v542, 24
    %vm555 = vcmp.lt.s32.totalorder %v543, 24
    %vm556 = vcmp.lt.s32.totalorder %v544, 24
    %vm557 = vcmp.lt.s32.totalorder %v545, 24
    %vm558 = vcmp.lt.s32.totalorder %v546, 24
    %vm559 = vmand %vm547, %vm553
    %vm560 = vmand %vm548, %vm554
    %vm561 = vmand %vm549, %vm555
    %vm562 = vmand %vm550, %vm556
    %vm563 = vmand %vm551, %vm557
    %vm564 = vmand %vm552, %vm558
    %v565 = vrot.slane %v264, 7
    %v566 = vrot.slane %v265, 7
    %v567 = vrot.slane %v266, 7
    %v568 = vrot.slane %v267, 7
    %v569 = vrot.slane %v268, 7
    %v570 = vrot.slane %v269, 7
    %vm571 = vcmp.lt.s32.totalorder %v271, 1
    %v572 = vsel %vm571, %v569, %v570
    %v573 = vsel %vm571, %v568, %v569
    %v574 = vsel %vm571, %v567, %v568
    %v575 = vsel %vm571, %v566, %v567
    %v576 = vsel %vm571, %v565, %v566
    %v577 = vsel %vm571, %v570, %v565
    %v578 = vsel %vm463, 1, 0
    %v579 = vsel %vm464, 1, 0
    %v580 = vsel %vm465, 1, 0
    %v581 = vsel %vm466, 1, 0
    %v582 = vsel %vm467, 1, 0
    %v583 = vsel %vm468, 1, 0
    %vm584 = vcmp.eq.s32.totalorder %v578, 1
    %vm585 = vcmp.eq.s32.totalorder %v579, 1
    %vm586 = vcmp.eq.s32.totalorder %v580, 1
    %vm587 = vcmp.eq.s32.totalorder %v581, 1
    %vm588 = vcmp.eq.s32.totalorder %v582, 1
    %vm589 = vcmp.eq.s32.totalorder %v583, 1
    %v590 = vsel %vm584, %v577, 0.0
    %v591 = vsel %vm585, %v576, 0.0
    %v592 = vsel %vm586, %v575, 0.0
    %v593 = vsel %vm587, %v574, 0.0
    %v594 = vsel %vm588, %v573, 0.0
    %v595 = vsel %vm589, %v572, 0.0
    %v596 = vpack.c.bf16 %v591, %v590
    %v597 = vpack.c.bf16 %v593, %v592
    %v598 = vpack.c.bf16 %v595, %v594
    %v599 = vpack.c.bf16 %v265, %v264
    %v600 = vpack.c.bf16 %v267, %v266
    %v601 = vpack.c.bf16 %v269, %v268
    %v602 = vrot.slane %v264, 1
    %v603 = vrot.slane %v265, 1
    %v604 = vrot.slane %v266, 1
    %v605 = vrot.slane %v267, 1
    %v606 = vrot.slane %v268, 1
    %v607 = vrot.slane %v269, 1
    %vm608 = vcmp.lt.s32.totalorder %v271, 7
    %v609 = vsel %vm608, %v606, %v607
    %v610 = vsel %vm608, %v605, %v606
    %v611 = vsel %vm608, %v604, %v605
    %v612 = vsel %vm608, %v603, %v604
    %v613 = vsel %vm608, %v602, %v603
    %v614 = vsel %vm608, %v607, %v602
    %v615 = vsel %vm487, 1, 0
    %v616 = vsel %vm488, 1, 0
    %v617 = vsel %vm489, 1, 0
    %v618 = vsel %vm490, 1, 0
    %v619 = vsel %vm491, 1, 0
    %v620 = vsel %vm492, 1, 0
    %vm621 = vcmp.eq.s32.totalorder %v615, 1
    %vm622 = vcmp.eq.s32.totalorder %v616, 1
    %vm623 = vcmp.eq.s32.totalorder %v617, 1
    %vm624 = vcmp.eq.s32.totalorder %v618, 1
    %vm625 = vcmp.eq.s32.totalorder %v619, 1
    %vm626 = vcmp.eq.s32.totalorder %v620, 1
    %v627 = vsel %vm621, %v613, 0.0
    %v628 = vsel %vm622, %v612, 0.0
    %v629 = vsel %vm623, %v611, 0.0
    %v630 = vsel %vm624, %v610, 0.0
    %v631 = vsel %vm625, %v609, 0.0
    %v632 = vsel %vm626, %v614, 0.0
    %v633 = vpack.c.bf16 %v628, %v627
    %v634 = vpack.c.bf16 %v630, %v629
    %v635 = vpack.c.bf16 %v632, %v631
    %v636 = vrot.slane %v264, 2
    %v637 = vrot.slane %v265, 2
    %v638 = vrot.slane %v266, 2
    %v639 = vrot.slane %v267, 2
    %v640 = vrot.slane %v268, 2
    %v641 = vrot.slane %v269, 2
    %vm642 = vcmp.lt.s32.totalorder %v271, 6
    %v643 = vsel %vm642, %v640, %v641
    %v644 = vsel %vm642, %v639, %v640
    %v645 = vsel %vm642, %v638, %v639
    %v646 = vsel %vm642, %v637, %v638
    %v647 = vsel %vm642, %v636, %v637
    %v648 = vsel %vm642, %v641, %v636
    %v649 = vsel %vm511, 1, 0
    %v650 = vsel %vm512, 1, 0
    %v651 = vsel %vm513, 1, 0
    %v652 = vsel %vm514, 1, 0
    %v653 = vsel %vm515, 1, 0
    %v654 = vsel %vm516, 1, 0
    %vm655 = vcmp.eq.s32.totalorder %v649, 1
    %vm656 = vcmp.eq.s32.totalorder %v650, 1
    %vm657 = vcmp.eq.s32.totalorder %v651, 1
    %vm658 = vcmp.eq.s32.totalorder %v652, 1
    %vm659 = vcmp.eq.s32.totalorder %v653, 1
    %vm660 = vcmp.eq.s32.totalorder %v654, 1
    %v661 = vsel %vm655, %v647, 0.0
    %v662 = vsel %vm656, %v646, 0.0
    %v663 = vsel %vm657, %v645, 0.0
    %v664 = vsel %vm658, %v644, 0.0
    %v665 = vsel %vm659, %v643, 0.0
    %v666 = vsel %vm660, %v648, 0.0
    %v667 = vpack.c.bf16 %v662, %v661
    %v668 = vpack.c.bf16 %v664, %v663
    %v669 = vpack.c.bf16 %v666, %v665
    %v670 = vld [vmem:[#allocation5] sm:$0xf]
    %v671 = vld [vmem:[#allocation5 + $0x4] sm:$0xf]
    %v672 = vld [vmem:[#allocation5 + $0x8] sm:$0xf]
    %v673 = vld [vmem:[#allocation5 + $0xc] sm:$0xf]
    %v674 = vld [vmem:[#allocation5 + $0x10] sm:$0xf]
    %v675 = vld [vmem:[#allocation5 + $0x14] sm:$0xf]
    %v676 = vld [vmem:[#allocation5 + $0x18] sm:$0xf]
    %v677 = vld [vmem:[#allocation5 + $0x1c] sm:$0xf]
    %v678 = vld [vmem:[#allocation5 + $0x20] sm:$0xf]
    %v679 = vld [vmem:[#allocation5 + $0x24] sm:$0xf]
    %v680 = vld [vmem:[#allocation5 + $0x28] sm:$0xf]
    %v681 = vld [vmem:[#allocation5 + $0x2c] sm:$0xf]
    %v682 = vld [vmem:[#allocation5 + $0x30] sm:$0xf]
    %v683 = vld [vmem:[#allocation5 + $0x34] sm:$0xf]
    %v684 = vld [vmem:[#allocation5 + $0x38] sm:$0xf]
    %v685 = vld [vmem:[#allocation5 + $0x3c] sm:$0xf]
    %v686 = vld [vmem:[#allocation5 + $0x40] sm:$0xf]
    %v687 = vld [vmem:[#allocation5 + $0x44] sm:$0xf]
    %v688 = vld [vmem:[#allocation5 + $0x48] sm:$0xf]
    %v689 = vld [vmem:[#allocation5 + $0x4c] sm:$0xf]
    %v690 = vld [vmem:[#allocation5 + $0x50] sm:$0xf]
    %v691 = vld [vmem:[#allocation5 + $0x54] sm:$0xf]
    %v692 = vld [vmem:[#allocation5 + $0x58] sm:$0xf]
    %v693 = vld [vmem:[#allocation5 + $0x5c] sm:$0xf]
    %v694 = vld [vmem:[#allocation5 + $0x60] sm:$0xf]
    %v695 = vld [vmem:[#allocation5 + $0x64] sm:$0xf]
    %v696 = vld [vmem:[#allocation5 + $0x68] sm:$0xf]
    %v697 = vld [vmem:[#allocation5 + $0x6c] sm:$0xf]
    %v698 = vld [vmem:[#allocation5 + $0x70] sm:$0xf]
    %v699 = vld [vmem:[#allocation5 + $0x74] sm:$0xf]
    %v700 = vld [vmem:[#allocation5 + $0x78] sm:$0xf]
    %v701 = vld [vmem:[#allocation5 + $0x7c] sm:$0xf]
    %v702 = vld [vmem:[#allocation5 + $0x80] sm:$0xf]
    %v703 = vld [vmem:[#allocation5 + $0x84] sm:$0xf]
    %v704 = vld [vmem:[#allocation5 + $0x88] sm:$0xf]
    %v705 = vld [vmem:[#allocation5 + $0x8c] sm:$0xf]
    %v706 = vld [vmem:[#allocation5 + $0x90] sm:$0xf]
    %v707 = vld [vmem:[#allocation5 + $0x94] sm:$0xf]
    %v708 = vld [vmem:[#allocation5 + $0x98] sm:$0xf]
    %v709 = vld [vmem:[#allocation5 + $0x9c] sm:$0xf]
    %v710 = vld [vmem:[#allocation5 + $0xa0] sm:$0xf]
    %v711 = vld [vmem:[#allocation5 + $0xa4] sm:$0xf]
    %v712 = vld [vmem:[#allocation5 + $0xa8] sm:$0xf]
    %v713 = vld [vmem:[#allocation5 + $0xac] sm:$0xf]
    %v714 = vld [vmem:[#allocation5 + $0xb0] sm:$0xf]
    %v715 = vld [vmem:[#allocation5 + $0xb4] sm:$0xf]
    %v716 = vld [vmem:[#allocation5 + $0xb8] sm:$0xf]
    %v717 = vld [vmem:[#allocation5 + $0xbc] sm:$0xf]
    %v718 = vld [vmem:[#allocation5 + $0xc0] sm:$0xf]
    %v719 = vld [vmem:[#allocation5 + $0xc4] sm:$0xf]
    %v720 = vld [vmem:[#allocation5 + $0xc8] sm:$0xf]
    %v721 = vld [vmem:[#allocation5 + $0xcc] sm:$0xf]
    %v722 = vld [vmem:[#allocation5 + $0xd0] sm:$0xf]
    %v723 = vld [vmem:[#allocation5 + $0xd4] sm:$0xf]
    %v724 = vld [vmem:[#allocation5 + $0xd8] sm:$0xf]
    %v725 = vld [vmem:[#allocation5 + $0xdc] sm:$0xf]
    %v726 = vld [vmem:[#allocation5 + $0xe0] sm:$0xf]
    %v727 = vld [vmem:[#allocation5 + $0xe4] sm:$0xf]
    %v728 = vld [vmem:[#allocation5 + $0xe8] sm:$0xf]
    %v729 = vld [vmem:[#allocation5 + $0xec] sm:$0xf]
    %v730 = vld [vmem:[#allocation5 + $0xf0] sm:$0xf]
    %v731 = vld [vmem:[#allocation5 + $0xf4] sm:$0xf]
    %v732 = vld [vmem:[#allocation5 + $0xf8] sm:$0xf]
    %v733 = vld [vmem:[#allocation5 + $0xfc] sm:$0xf]
    %v734 = vld [vmem:[#allocation7] sm:$0x1]
    %v736 = vlaneseq
    %v737 = vshrl.u32 %v736, 7
    %v738 = vsub.s32 0, %v737
    %v739 = vrot.slane %v734, %v738
    %v805 = vunpack.c.l.b16 %v670
    %v806 = vunpack.c.l.b16 %v671
    %v807 = vunpack.c.l.b16 %v672
    %v808 = vunpack.c.l.b16 %v673
    %v809 = vunpack.c.l.b16 %v674
    %v810 = vunpack.c.l.b16 %v675
    %v811 = vunpack.c.l.b16 %v676
    %v812 = vunpack.c.l.b16 %v677
    %v813 = vunpack.c.l.b16 %v678
    %v814 = vunpack.c.l.b16 %v679
    %v815 = vunpack.c.l.b16 %v680
    %v816 = vunpack.c.l.b16 %v681
    %v817 = vunpack.c.l.b16 %v682
    %v818 = vunpack.c.l.b16 %v683
    %v819 = vunpack.c.l.b16 %v684
    %v820 = vunpack.c.l.b16 %v685
    %v821 = vunpack.c.l.b16 %v686
    %v822 = vunpack.c.l.b16 %v687
    %v823 = vunpack.c.l.b16 %v688
    %v824 = vunpack.c.l.b16 %v689
    %v825 = vunpack.c.l.b16 %v690
    %v826 = vunpack.c.l.b16 %v691
    %v827 = vunpack.c.l.b16 %v692
    %v828 = vunpack.c.l.b16 %v693
    %v829 = vunpack.c.l.b16 %v694
    %v830 = vunpack.c.l.b16 %v695
    %v831 = vunpack.c.l.b16 %v696
    %v832 = vunpack.c.l.b16 %v697
    %v833 = vunpack.c.l.b16 %v698
    %v834 = vunpack.c.l.b16 %v699
    %v835 = vunpack.c.l.b16 %v700
    %v836 = vunpack.c.l.b16 %v701
    %v837 = vunpack.c.l.b16 %v702
    %v838 = vunpack.c.l.b16 %v703
    %v839 = vunpack.c.l.b16 %v704
    %v840 = vunpack.c.l.b16 %v705
    %v841 = vunpack.c.l.b16 %v706
    %v842 = vunpack.c.l.b16 %v707
    %v843 = vunpack.c.l.b16 %v708
    %v844 = vunpack.c.l.b16 %v709
    %v845 = vunpack.c.l.b16 %v710
    %v846 = vunpack.c.l.b16 %v711
    %v847 = vunpack.c.l.b16 %v712
    %v848 = vunpack.c.l.b16 %v713
    %v849 = vunpack.c.l.b16 %v714
    %v850 = vunpack.c.l.b16 %v715
    %v851 = vunpack.c.l.b16 %v716
    %v852 = vunpack.c.l.b16 %v717
    %v853 = vunpack.c.l.b16 %v718
    %v854 = vunpack.c.l.b16 %v719
    %v855 = vunpack.c.l.b16 %v720
    %v856 = vunpack.c.l.b16 %v721
    %v857 = vunpack.c.l.b16 %v722
    %v858 = vunpack.c.l.b16 %v723
    %v859 = vunpack.c.l.b16 %v724
    %v860 = vunpack.c.l.b16 %v725
    %v861 = vunpack.c.l.b16 %v726
    %v862 = vunpack.c.l.b16 %v727
    %v863 = vunpack.c.l.b16 %v728
    %v864 = vunpack.c.l.b16 %v729
    %v865 = vunpack.c.l.b16 %v730
    %v866 = vunpack.c.l.b16 %v731
    %v867 = vunpack.c.l.b16 %v732
    %v868 = vunpack.c.l.b16 %v733
    %v869 = vpack.c.b16 %v806, %v805
    %v870 = vpack.c.b16 %v808, %v807
    %v871 = vpack.c.b16 %v810, %v809
    %v872 = vpack.c.b16 %v812, %v811
    %v873 = vpack.c.b16 %v814, %v813
    %v874 = vpack.c.b16 %v816, %v815
    %v875 = vpack.c.b16 %v818, %v817
    %v876 = vpack.c.b16 %v820, %v819
    %v877 = vpack.c.b16 %v822, %v821
    %v878 = vpack.c.b16 %v824, %v823
    %v879 = vpack.c.b16 %v826, %v825
    %v880 = vpack.c.b16 %v828, %v827
    %v881 = vpack.c.b16 %v830, %v829
    %v882 = vpack.c.b16 %v832, %v831
    %v883 = vpack.c.b16 %v834, %v833
    %v884 = vpack.c.b16 %v836, %v835
    %v885 = vpack.c.b16 %v838, %v837
    %v886 = vpack.c.b16 %v840, %v839
    %v887 = vpack.c.b16 %v842, %v841
    %v888 = vpack.c.b16 %v844, %v843
    %v889 = vpack.c.b16 %v846, %v845
    %v890 = vpack.c.b16 %v848, %v847
    %v891 = vpack.c.b16 %v850, %v849
    %v892 = vpack.c.b16 %v852, %v851
    %v893 = vpack.c.b16 %v854, %v853
    %v894 = vpack.c.b16 %v856, %v855
    %v895 = vpack.c.b16 %v858, %v857
    %v896 = vpack.c.b16 %v860, %v859
    %v897 = vpack.c.b16 %v862, %v861
    %v898 = vpack.c.b16 %v864, %v863
    %v899 = vpack.c.b16 %v866, %v865
    %v900 = vpack.c.b16 %v868, %v867
    %933 = vmatprep.subr.bf16.mxu0 0
    %934 = vmatpush1.bf16.msra.mxu0 %v869
    %935 = vmatprep.subr.bf16.mxu0 0
    %936 = vmatpush1.bf16.msra.mxu0 %v870
    %937 = vmatprep.subr.bf16.mxu0 0
    %938 = vmatpush1.bf16.msra.mxu0 %v871
    %939 = vmatprep.subr.bf16.mxu0 0
    %940 = vmatpush1.bf16.msra.mxu0 %v872
    %941 = vmatprep.subr.bf16.mxu0 0
    %942 = vmatpush1.bf16.msra.mxu0 %v873
    %943 = vmatprep.subr.bf16.mxu0 0
    %944 = vmatpush1.bf16.msra.mxu0 %v874
    %945 = vmatprep.subr.bf16.mxu0 0
    %946 = vmatpush1.bf16.msra.mxu0 %v875
    %947 = vmatprep.subr.bf16.mxu0 0
    %948 = vmatpush1.bf16.msra.mxu0 %v876
    %949 = vmatprep.subr.bf16.mxu0 0
    %950 = vmatpush1.bf16.msra.mxu0 %v877
    %951 = vmatprep.subr.bf16.mxu0 0
    %952 = vmatpush1.bf16.msra.mxu0 %v878
    %953 = vmatprep.subr.bf16.mxu0 0
    %954 = vmatpush1.bf16.msra.mxu0 %v879
    %955 = vmatprep.subr.bf16.mxu0 0
    %956 = vmatpush1.bf16.msra.mxu0 %v880
    %957 = vmatprep.subr.bf16.mxu0 0
    %958 = vmatpush1.bf16.msra.mxu0 %v881
    %959 = vmatprep.subr.bf16.mxu0 0
    %960 = vmatpush1.bf16.msra.mxu0 %v882
    %961 = vmatprep.subr.bf16.mxu0 0
    %962 = vmatpush1.bf16.msra.mxu0 %v883
    %963 = vmatprep.subr.bf16.mxu0 0
    %964 = vmatpush1.bf16.msra.mxu0 %v884
    %965 = vmatprep.mubr.bf16.mxu0 %v599
    %966 = vmatmul.mubr.bf16.gmra.mrb[0].mxu0 %v596
    %v967 = vpop.f32.mrb[0].mxu0
    %v968 = vadd.f32 %v739, %v967
    %v969 = vpop.f32.mrb[0].mxu0
    %v970 = vpop.f32.mrb[0].mxu0
    %v971 = vadd.f32 %v739, %v970
    %v972 = vpop.f32.mrb[0].mxu0
    %973 = vmatprep.mubr.bf16.mxu0 %v600
    %974 = vmatmul.mubr.bf16.gmra.mrb[0].mxu0 %v597
    %v975 = vpop.f32.mrb[0].mxu0
    %v976 = vadd.f32 %v739, %v975
    %v977 = vpop.f32.mrb[0].mxu0
    %v978 = vpop.f32.mrb[0].mxu0
    %v979 = vadd.f32 %v739, %v978
    %v980 = vpop.f32.mrb[0].mxu0
    %981 = vmatprep.mubr.bf16.mxu0 %v601
    %982 = vmatmul.mubr.bf16.gmra.mrb[0].mxu0 %v598
    %v983 = vpop.f32.mrb[0].mxu0
    %v984 = vadd.f32 %v739, %v983
    %v985 = vpop.f32.mrb[0].mxu0
    %v986 = vpop.f32.mrb[0].mxu0
    %v987 = vadd.f32 %v739, %v986
    %v988 = vpop.f32.mrb[0].mxu0
    %989 = vdwg.mxu0
    %990 = vmatprep.subr.bf16.mxu0 0
    %991 = vmatpush1.bf16.msra.mxu0 %v885
    %992 = vmatprep.subr.bf16.mxu0 0
    %993 = vmatpush1.bf16.msra.mxu0 %v886
    %994 = vmatprep.subr.bf16.mxu0 0
    %995 = vmatpush1.bf16.msra.mxu0 %v887
    %996 = vmatprep.subr.bf16.mxu0 0
    %997 = vmatpush1.bf16.msra.mxu0 %v888
    %998 = vmatprep.subr.bf16.mxu0 0
    %999 = vmatpush1.bf16.msra.mxu0 %v889
    %1000 = vmatprep.subr.bf16.mxu0 0
    %1001 = vmatpush1.bf16.msra.mxu0 %v890
    %1002 = vmatprep.subr.bf16.mxu0 0
    %1003 = vmatpush1.bf16.msra.mxu0 %v891
    %1004 = vmatprep.subr.bf16.mxu0 0
    %1005 = vmatpush1.bf16.msra.mxu0 %v892
    %1006 = vmatprep.subr.bf16.mxu0 0
    %1007 = vmatpush1.bf16.msra.mxu0 %v893
    %1008 = vmatprep.subr.bf16.mxu0 0
    %1009 = vmatpush1.bf16.msra.mxu0 %v894
    %1010 = vmatprep.subr.bf16.mxu0 0
    %1011 = vmatpush1.bf16.msra.mxu0 %v895
    %1012 = vmatprep.subr.bf16.mxu0 0
    %1013 = vmatpush1.bf16.msra.mxu0 %v896
    %1014 = vmatprep.subr.bf16.mxu0 0
    %1015 = vmatpush1.bf16.msra.mxu0 %v897
    %1016 = vmatprep.subr.bf16.mxu0 0
    %1017 = vmatpush1.bf16.msra.mxu0 %v898
    %1018 = vmatprep.subr.bf16.mxu0 0
    %1019 = vmatpush1.bf16.msra.mxu0 %v899
    %1020 = vmatprep.subr.bf16.mxu0 0
    %1021 = vmatpush1.bf16.msra.mxu0 %v900
    %1022 = vmatprep.mubr.bf16.mxu0 %v667
    %1023 = vmatmul.mubr.bf16.gmra.mrb[0].mxu0 %v633
    %v1024 = vpop.f32.mrb[0].mxu0
    %v1025 = vadd.f32 %v968, %v1024
    %v1026 = vpop.f32.mrb[0].mxu0
    %v1027 = vpop.f32.mrb[0].mxu0
    %v1028 = vadd.f32 %v971, %v1027
    %v1029 = vpop.f32.mrb[0].mxu0
    %1030 = vmatprep.mubr.bf16.mxu0 %v668
    %1031 = vmatmul.mubr.bf16.gmra.mrb[0].mxu0 %v634
    %v1032 = vpop.f32.mrb[0].mxu0
    %v1033 = vadd.f32 %v976, %v1032
    %v1034 = vpop.f32.mrb[0].mxu0
    %v1035 = vpop.f32.mrb[0].mxu0
    %v1036 = vadd.f32 %v979, %v1035
    %v1037 = vpop.f32.mrb[0].mxu0
    %1038 = vmatprep.mubr.bf16.mxu0 %v669
    %1039 = vmatmul.mubr.bf16.gmra.mrb[0].mxu0 %v635
    %v1040 = vpop.f32.mrb[0].mxu0
    %v1041 = vadd.f32 %v984, %v1040
    %v1042 = vpop.f32.mrb[0].mxu0
    %v1043 = vpop.f32.mrb[0].mxu0
    %v1044 = vadd.f32 %v987, %v1043
    %v1045 = vpop.f32.mrb[0].mxu0
    %1046 = vdwg.mxu0
    %v1047 = vmax.f32 %v1025, 0.0
    %v1048 = vmax.f32 %v1028, 0.0
    %v1049 = vmax.f32 %v1033, 0.0
    %v1050 = vmax.f32 %v1036, 0.0
    %v1051 = vmax.f32 %v1041, 0.0
    %v1052 = vmax.f32 %v1044, 0.0
    %v1053 = vrot.slane %v1047, 7
    %v1054 = vrot.slane %v1048, 7
    %v1055 = vrot.slane %v1049, 7
    %v1056 = vrot.slane %v1050, 7
    %v1057 = vrot.slane %v1051, 7
    %v1058 = vrot.slane %v1052, 7
    %v1059 = vsel %vm571, %v1057, %v1058
    %v1060 = vsel %vm571, %v1056, %v1057
    %v1061 = vsel %vm571, %v1055, %v1056
    %v1062 = vsel %vm571, %v1054, %v1055
    %v1063 = vsel %vm571, %v1053, %v1054
    %v1064 = vsel %vm571, %v1058, %v1053
    %v1065 = vsel %vm584, %v1064, 0.0
    %v1066 = vsel %vm585, %v1063, 0.0
    %v1067 = vsel %vm586, %v1062, 0.0
    %v1068 = vsel %vm587, %v1061, 0.0
    %v1069 = vsel %vm588, %v1060, 0.0
    %v1070 = vsel %vm589, %v1059, 0.0
    %v1071 = vpack.c.bf16 %v1066, %v1065
    %v1072 = vpack.c.bf16 %v1068, %v1067
    %v1073 = vpack.c.bf16 %v1070, %v1069
    %v1074 = vpack.c.bf16 %v1048, %v1047
    %v1075 = vpack.c.bf16 %v1050, %v1049
    %v1076 = vpack.c.bf16 %v1052, %v1051
    %v1077 = vrot.slane %v1047, 1
    %v1078 = vrot.slane %v1048, 1
    %v1079 = vrot.slane %v1049, 1
    %v1080 = vrot.slane %v1050, 1
    %v1081 = vrot.slane %v1051, 1
    %v1082 = vrot.slane %v1052, 1
    %v1083 = vsel %vm608, %v1081, %v1082
    %v1084 = vsel %vm608, %v1080, %v1081
    %v1085 = vsel %vm608, %v1079, %v1080
    %v1086 = vsel %vm608, %v1078, %v1079
    %v1087 = vsel %vm608, %v1077, %v1078
    %v1088 = vsel %vm608, %v1082, %v1077
    %v1089 = vsel %vm621, %v1087, 0.0
    %v1090 = vsel %vm622, %v1086, 0.0
    %v1091 = vsel %vm623, %v1085, 0.0
    %v1092 = vsel %vm624, %v1084, 0.0
    %v1093 = vsel %vm625, %v1083, 0.0
    %v1094 = vsel %vm626, %v1088, 0.0
    %v1095 = vpack.c.bf16 %v1090, %v1089
    %v1096 = vpack.c.bf16 %v1092, %v1091
    %v1097 = vpack.c.bf16 %v1094, %v1093
    %v1098 = vrot.slane %v1047, 2
    %v1099 = vrot.slane %v1048, 2
    %v1100 = vrot.slane %v1049, 2
    %v1101 = vrot.slane %v1050, 2
    %v1102 = vrot.slane %v1051, 2
    %v1103 = vrot.slane %v1052, 2
    %v1104 = vsel %vm642, %v1102, %v1103
    %v1105 = vsel %vm642, %v1101, %v1102
    %v1106 = vsel %vm642, %v1100, %v1101
    %v1107 = vsel %vm642, %v1099, %v1100
    %v1108 = vsel %vm642, %v1098, %v1099
    %v1109 = vsel %vm642, %v1103, %v1098
    %v1110 = vsel %vm655, %v1108, 0.0
    %v1111 = vsel %vm656, %v1107, 0.0
    %v1112 = vsel %vm657, %v1106, 0.0
    %v1113 = vsel %vm658, %v1105, 0.0
    %v1114 = vsel %vm659, %v1104, 0.0
    %v1115 = vsel %vm660, %v1109, 0.0
    %v1116 = vpack.c.bf16 %v1111, %v1110
    %v1117 = vpack.c.bf16 %v1113, %v1112
    %v1118 = vpack.c.bf16 %v1115, %v1114
    %s1119 = scalar_lea.vmem [#allocation5], 256
    %v1120 = vld [vmem:[%s1119] sm:$0xf]
    %v1121 = vld [vmem:[%s1119 + $0x4] sm:$0xf]
    %v1122 = vld [vmem:[%s1119 + $0x8] sm:$0xf]
    %v1123 = vld [vmem:[%s1119 + $0xc] sm:$0xf]
    %v1124 = vld [vmem:[%s1119 + $0x10] sm:$0xf]
    %v1125 = vld [vmem:[%s1119 + $0x14] sm:$0xf]
    %v1126 = vld [vmem:[%s1119 + $0x18] sm:$0xf]
    %v1127 = vld [vmem:[%s1119 + $0x1c] sm:$0xf]
    %v1128 = vld [vmem:[%s1119 + $0x20] sm:$0xf]
    %v1129 = vld [vmem:[%s1119 + $0x24] sm:$0xf]
    %v1130 = vld [vmem:[%s1119 + $0x28] sm:$0xf]
    %v1131 = vld [vmem:[%s1119 + $0x2c] sm:$0xf]
    %v1132 = vld [vmem:[%s1119 + $0x30] sm:$0xf]
    %v1133 = vld [vmem:[%s1119 + $0x34] sm:$0xf]
    %v1134 = vld [vmem:[%s1119 + $0x38] sm:$0xf]
    %v1135 = vld [vmem:[%s1119 + $0x3c] sm:$0xf]
    %v1136 = vld [vmem:[%s1119 + $0x40] sm:$0xf]
    %v1137 = vld [vmem:[%s1119 + $0x44] sm:$0xf]
    %v1138 = vld [vmem:[%s1119 + $0x48] sm:$0xf]
    %v1139 = vld [vmem:[%s1119 + $0x4c] sm:$0xf]
    %v1140 = vld [vmem:[%s1119 + $0x50] sm:$0xf]
    %v1141 = vld [vmem:[%s1119 + $0x54] sm:$0xf]
    %v1142 = vld [vmem:[%s1119 + $0x58] sm:$0xf]
    %v1143 = vld [vmem:[%s1119 + $0x5c] sm:$0xf]
    %v1144 = vld [vmem:[%s1119 + $0x60] sm:$0xf]
    %v1145 = vld [vmem:[%s1119 + $0x64] sm:$0xf]
    %v1146 = vld [vmem:[%s1119 + $0x68] sm:$0xf]
    %v1147 = vld [vmem:[%s1119 + $0x6c] sm:$0xf]
    %v1148 = vld [vmem:[%s1119 + $0x70] sm:$0xf]
    %v1149 = vld [vmem:[%s1119 + $0x74] sm:$0xf]
    %v1150 = vld [vmem:[%s1119 + $0x78] sm:$0xf]
    %v1151 = vld [vmem:[%s1119 + $0x7c] sm:$0xf]
    %v1152 = vld [vmem:[%s1119 + $0x80] sm:$0xf]
    %v1153 = vld [vmem:[%s1119 + $0x84] sm:$0xf]
    %v1154 = vld [vmem:[%s1119 + $0x88] sm:$0xf]
    %v1155 = vld [vmem:[%s1119 + $0x8c] sm:$0xf]
    %v1156 = vld [vmem:[%s1119 + $0x90] sm:$0xf]
    %v1157 = vld [vmem:[%s1119 + $0x94] sm:$0xf]
    %v1158 = vld [vmem:[%s1119 + $0x98] sm:$0xf]
    %v1159 = vld [vmem:[%s1119 + $0x9c] sm:$0xf]
    %v1160 = vld [vmem:[%s1119 + $0xa0] sm:$0xf]
    %v1161 = vld [vmem:[%s1119 + $0xa4] sm:$0xf]
    %v1162 = vld [vmem:[%s1119 + $0xa8] sm:$0xf]
    %v1163 = vld [vmem:[%s1119 + $0xac] sm:$0xf]
    %v1164 = vld [vmem:[%s1119 + $0xb0] sm:$0xf]
    %v1165 = vld [vmem:[%s1119 + $0xb4] sm:$0xf]
    %v1166 = vld [vmem:[%s1119 + $0xb8] sm:$0xf]
    %v1167 = vld [vmem:[%s1119 + $0xbc] sm:$0xf]
    %v1168 = vld [vmem:[%s1119 + $0xc0] sm:$0xf]
    %v1169 = vld [vmem:[%s1119 + $0xc4] sm:$0xf]
    %v1170 = vld [vmem:[%s1119 + $0xc8] sm:$0xf]
    %v1171 = vld [vmem:[%s1119 + $0xcc] sm:$0xf]
    %v1172 = vld [vmem:[%s1119 + $0xd0] sm:$0xf]
    %v1173 = vld [vmem:[%s1119 + $0xd4] sm:$0xf]
    %v1174 = vld [vmem:[%s1119 + $0xd8] sm:$0xf]
    %v1175 = vld [vmem:[%s1119 + $0xdc] sm:$0xf]
    %v1176 = vld [vmem:[%s1119 + $0xe0] sm:$0xf]
    %v1177 = vld [vmem:[%s1119 + $0xe4] sm:$0xf]
    %v1178 = vld [vmem:[%s1119 + $0xe8] sm:$0xf]
    %v1179 = vld [vmem:[%s1119 + $0xec] sm:$0xf]
    %v1180 = vld [vmem:[%s1119 + $0xf0] sm:$0xf]
    %v1181 = vld [vmem:[%s1119 + $0xf4] sm:$0xf]
    %v1182 = vld [vmem:[%s1119 + $0xf8] sm:$0xf]
    %v1183 = vld [vmem:[%s1119 + $0xfc] sm:$0xf]
    %s1184 = scalar_lea.vmem [#allocation7], 1
    %v1185 = vld [vmem:[%s1184] sm:$0x1]
    %v1187 = vlaneseq
    %v1188 = vshrl.u32 %v1187, 7
    %v1189 = vsub.s32 0, %v1188
    %v1190 = vrot.slane %v1185, %v1189
    %v1256 = vunpack.c.l.b16 %v1120
    %v1257 = vunpack.c.l.b16 %v1121
    %v1258 = vunpack.c.l.b16 %v1122
    %v1259 = vunpack.c.l.b16 %v1123
    %v1260 = vunpack.c.l.b16 %v1124
    %v1261 = vunpack.c.l.b16 %v1125
    %v1262 = vunpack.c.l.b16 %v1126
    %v1263 = vunpack.c.l.b16 %v1127
    %v1264 = vunpack.c.l.b16 %v1128
    %v1265 = vunpack.c.l.b16 %v1129
    %v1266 = vunpack.c.l.b16 %v1130
    %v1267 = vunpack.c.l.b16 %v1131
    %v1268 = vunpack.c.l.b16 %v1132
    %v1269 = vunpack.c.l.b16 %v1133
    %v1270 = vunpack.c.l.b16 %v1134
    %v1271 = vunpack.c.l.b16 %v1135
    %v1272 = vunpack.c.l.b16 %v1136
    %v1273 = vunpack.c.l.b16 %v1137
    %v1274 = vunpack.c.l.b16 %v1138
    %v1275 = vunpack.c.l.b16 %v1139
    %v1276 = vunpack.c.l.b16 %v1140
    %v1277 = vunpack.c.l.b16 %v1141
    %v1278 = vunpack.c.l.b16 %v1142
    %v1279 = vunpack.c.l.b16 %v1143
    %v1280 = vunpack.c.l.b16 %v1144
    %v1281 = vunpack.c.l.b16 %v1145
    %v1282 = vunpack.c.l.b16 %v1146
    %v1283 = vunpack.c.l.b16 %v1147
    %v1284 = vunpack.c.l.b16 %v1148
    %v1285 = vunpack.c.l.b16 %v1149
    %v1286 = vunpack.c.l.b16 %v1150
    %v1287 = vunpack.c.l.b16 %v1151
    %v1288 = vunpack.c.l.b16 %v1152
    %v1289 = vunpack.c.l.b16 %v1153
    %v1290 = vunpack.c.l.b16 %v1154
    %v1291 = vunpack.c.l.b16 %v1155
    %v1292 = vunpack.c.l.b16 %v1156
    %v1293 = vunpack.c.l.b16 %v1157
    %v1294 = vunpack.c.l.b16 %v1158
    %v1295 = vunpack.c.l.b16 %v1159
    %v1296 = vunpack.c.l.b16 %v1160
    %v1297 = vunpack.c.l.b16 %v1161
    %v1298 = vunpack.c.l.b16 %v1162
    %v1299 = vunpack.c.l.b16 %v1163
    %v1300 = vunpack.c.l.b16 %v1164
    %v1301 = vunpack.c.l.b16 %v1165
    %v1302 = vunpack.c.l.b16 %v1166
    %v1303 = vunpack.c.l.b16 %v1167
    %v1304 = vunpack.c.l.b16 %v1168
    %v1305 = vunpack.c.l.b16 %v1169
    %v1306 = vunpack.c.l.b16 %v1170
    %v1307 = vunpack.c.l.b16 %v1171
    %v1308 = vunpack.c.l.b16 %v1172
    %v1309 = vunpack.c.l.b16 %v1173
    %v1310 = vunpack.c.l.b16 %v1174
    %v1311 = vunpack.c.l.b16 %v1175
    %v1312 = vunpack.c.l.b16 %v1176
    %v1313 = vunpack.c.l.b16 %v1177
    %v1314 = vunpack.c.l.b16 %v1178
    %v1315 = vunpack.c.l.b16 %v1179
    %v1316 = vunpack.c.l.b16 %v1180
    %v1317 = vunpack.c.l.b16 %v1181
    %v1318 = vunpack.c.l.b16 %v1182
    %v1319 = vunpack.c.l.b16 %v1183
    %v1320 = vpack.c.b16 %v1257, %v1256
    %v1321 = vpack.c.b16 %v1259, %v1258
    %v1322 = vpack.c.b16 %v1261, %v1260
    %v1323 = vpack.c.b16 %v1263, %v1262
    %v1324 = vpack.c.b16 %v1265, %v1264
    %v1325 = vpack.c.b16 %v1267, %v1266
    %v1326 = vpack.c.b16 %v1269, %v1268
    %v1327 = vpack.c.b16 %v1271, %v1270
    %v1328 = vpack.c.b16 %v1273, %v1272
    %v1329 = vpack.c.b16 %v1275, %v1274
    %v1330 = vpack.c.b16 %v1277, %v1276
    %v1331 = vpack.c.b16 %v1279, %v1278
    %v1332 = vpack.c.b16 %v1281, %v1280
    %v1333 = vpack.c.b16 %v1283, %v1282
    %v1334 = vpack.c.b16 %v1285, %v1284
    %v1335 = vpack.c.b16 %v1287, %v1286
    %v1336 = vpack.c.b16 %v1289, %v1288
    %v1337 = vpack.c.b16 %v1291, %v1290
    %v1338 = vpack.c.b16 %v1293, %v1292
    %v1339 = vpack.c.b16 %v1295, %v1294
    %v1340 = vpack.c.b16 %v1297, %v1296
    %v1341 = vpack.c.b16 %v1299, %v1298
    %v1342 = vpack.c.b16 %v1301, %v1300
    %v1343 = vpack.c.b16 %v1303, %v1302
    %v1344 = vpack.c.b16 %v1305, %v1304
    %v1345 = vpack.c.b16 %v1307, %v1306
    %v1346 = vpack.c.b16 %v1309, %v1308
    %v1347 = vpack.c.b16 %v1311, %v1310
    %v1348 = vpack.c.b16 %v1313, %v1312
    %v1349 = vpack.c.b16 %v1315, %v1314
    %v1350 = vpack.c.b16 %v1317, %v1316
    %v1351 = vpack.c.b16 %v1319, %v1318
    %1384 = vmatprep.subr.bf16.mxu0 0
    %1385 = vmatpush1.bf16.msra.mxu0 %v1320
    %1386 = vmatprep.subr.bf16.mxu0 0
    %1387 = vmatpush1.bf16.msra.mxu0 %v1321
    %1388 = vmatprep.subr.bf16.mxu0 0
    %1389 = vmatpush1.bf16.msra.mxu0 %v1322
    %1390 = vmatprep.subr.bf16.mxu0 0
    %1391 = vmatpush1.bf16.msra.mxu0 %v1323
    %1392 = vmatprep.subr.bf16.mxu0 0
    %1393 = vmatpush1.bf16.msra.mxu0 %v1324
    %1394 = vmatprep.subr.bf16.mxu0 0
    %1395 = vmatpush1.bf16.msra.mxu0 %v1325
    %1396 = vmatprep.subr.bf16.mxu0 0
    %1397 = vmatpush1.bf16.msra.mxu0 %v1326
    %1398 = vmatprep.subr.bf16.mxu0 0
    %1399 = vmatpush1.bf16.msra.mxu0 %v1327
    %1400 = vmatprep.subr.bf16.mxu0 0
    %1401 = vmatpush1.bf16.msra.mxu0 %v1328
    %1402 = vmatprep.subr.bf16.mxu0 0
    %1403 = vmatpush1.bf16.msra.mxu0 %v1329
    %1404 = vmatprep.subr.bf16.mxu0 0
    %1405 = vmatpush1.bf16.msra.mxu0 %v1330
    %1406 = vmatprep.subr.bf16.mxu0 0
    %1407 = vmatpush1.bf16.msra.mxu0 %v1331
    %1408 = vmatprep.subr.bf16.mxu0 0
    %1409 = vmatpush1.bf16.msra.mxu0 %v1332
    %1410 = vmatprep.subr.bf16.mxu0 0
    %1411 = vmatpush1.bf16.msra.mxu0 %v1333
    %1412 = vmatprep.subr.bf16.mxu0 0
    %1413 = vmatpush1.bf16.msra.mxu0 %v1334
    %1414 = vmatprep.subr.bf16.mxu0 0
    %1415 = vmatpush1.bf16.msra.mxu0 %v1335
    %1416 = vmatprep.mubr.bf16.mxu0 %v1074
    %1417 = vmatmul.mubr.bf16.gmra.mrb[0].mxu0 %v1071
    %v1418 = vpop.f32.mrb[0].mxu0
    %v1419 = vadd.f32 %v1190, %v1418
    %v1420 = vpop.f32.mrb[0].mxu0
    %v1421 = vpop.f32.mrb[0].mxu0
    %v1422 = vadd.f32 %v1190, %v1421
    %v1423 = vpop.f32.mrb[0].mxu0
    %1424 = vmatprep.mubr.bf16.mxu0 %v1075
    %1425 = vmatmul.mubr.bf16.gmra.mrb[0].mxu0 %v1072
    %v1426 = vpop.f32.mrb[0].mxu0
    %v1427 = vadd.f32 %v1190, %v1426
    %v1428 = vpop.f32.mrb[0].mxu0
    %v1429 = vpop.f32.mrb[0].mxu0
    %v1430 = vadd.f32 %v1190, %v1429
    %v1431 = vpop.f32.mrb[0].mxu0
    %1432 = vmatprep.mubr.bf16.mxu0 %v1076
    %1433 = vmatmul.mubr.bf16.gmra.mrb[0].mxu0 %v1073
    %v1434 = vpop.f32.mrb[0].mxu0
    %v1435 = vadd.f32 %v1190, %v1434
    %v1436 = vpop.f32.mrb[0].mxu0
    %v1437 = vpop.f32.mrb[0].mxu0
    %v1438 = vadd.f32 %v1190, %v1437
    %v1439 = vpop.f32.mrb[0].mxu0
    %1440 = vdwg.mxu0
    %1441 = vmatprep.subr.bf16.mxu0 0
    %1442 = vmatpush1.bf16.msra.mxu0 %v1336
    %1443 = vmatprep.subr.bf16.mxu0 0
    %1444 = vmatpush1.bf16.msra.mxu0 %v1337
    %1445 = vmatprep.subr.bf16.mxu0 0
    %1446 = vmatpush1.bf16.msra.mxu0 %v1338
    %1447 = vmatprep.subr.bf16.mxu0 0
    %1448 = vmatpush1.bf16.msra.mxu0 %v1339
    %1449 = vmatprep.subr.bf16.mxu0 0
    %1450 = vmatpush1.bf16.msra.mxu0 %v1340
    %1451 = vmatprep.subr.bf16.mxu0 0
    %1452 = vmatpush1.bf16.msra.mxu0 %v1341
    %1453 = vmatprep.subr.bf16.mxu0 0
    %1454 = vmatpush1.bf16.msra.mxu0 %v1342
    %1455 = vmatprep.subr.bf16.mxu0 0
    %1456 = vmatpush1.bf16.msra.mxu0 %v1343
    %1457 = vmatprep.subr.bf16.mxu0 0
    %1458 = vmatpush1.bf16.msra.mxu0 %v1344
    %1459 = vmatprep.subr.bf16.mxu0 0
    %1460 = vmatpush1.bf16.msra.mxu0 %v1345
    %1461 = vmatprep.subr.bf16.mxu0 0
    %1462 = vmatpush1.bf16.msra.mxu0 %v1346
    %1463 = vmatprep.subr.bf16.mxu0 0
    %1464 = vmatpush1.bf16.msra.mxu0 %v1347
    %1465 = vmatprep.subr.bf16.mxu0 0
    %1466 = vmatpush1.bf16.msra.mxu0 %v1348
    %1467 = vmatprep.subr.bf16.mxu0 0
    %1468 = vmatpush1.bf16.msra.mxu0 %v1349
    %1469 = vmatprep.subr.bf16.mxu0 0
    %1470 = vmatpush1.bf16.msra.mxu0 %v1350
    %1471 = vmatprep.subr.bf16.mxu0 0
    %1472 = vmatpush1.bf16.msra.mxu0 %v1351
    %1473 = vmatprep.mubr.bf16.mxu0 %v1116
    %1474 = vmatmul.mubr.bf16.gmra.mrb[0].mxu0 %v1095
    %v1475 = vpop.f32.mrb[0].mxu0
    %v1476 = vadd.f32 %v1419, %v1475
    %v1477 = vpop.f32.mrb[0].mxu0
    %v1478 = vpop.f32.mrb[0].mxu0
    %v1479 = vadd.f32 %v1422, %v1478
    %v1480 = vpop.f32.mrb[0].mxu0
    %1481 = vmatprep.mubr.bf16.mxu0 %v1117
    %1482 = vmatmul.mubr.bf16.gmra.mrb[0].mxu0 %v1096
    %v1483 = vpop.f32.mrb[0].mxu0
    %v1484 = vadd.f32 %v1427, %v1483
    %v1485 = vpop.f32.mrb[0].mxu0
    %v1486 = vpop.f32.mrb[0].mxu0
    %v1487 = vadd.f32 %v1430, %v1486
    %v1488 = vpop.f32.mrb[0].mxu0
    %1489 = vmatprep.mubr.bf16.mxu0 %v1118
    %1490 = vmatmul.mubr.bf16.gmra.mrb[0].mxu0 %v1097
    %v1491 = vpop.f32.mrb[0].mxu0
    %v1492 = vadd.f32 %v1435, %v1491
    %v1493 = vpop.f32.mrb[0].mxu0
    %v1494 = vpop.f32.mrb[0].mxu0
    %v1495 = vadd.f32 %v1438, %v1494
    %v1496 = vpop.f32.mrb[0].mxu0
    %1497 = vdwg.mxu0
    %v1498 = vmax.f32 %v1476, 0.0
    %v1499 = vmax.f32 %v1479, 0.0
    %v1500 = vmax.f32 %v1484, 0.0
    %v1501 = vmax.f32 %v1487, 0.0
    %v1502 = vmax.f32 %v1492, 0.0
    %v1503 = vmax.f32 %v1495, 0.0
    %v1504 = vadd.f32 %v264, %v1498
    %v1505 = vadd.f32 %v265, %v1499
    %v1506 = vadd.f32 %v266, %v1500
    %v1507 = vadd.f32 %v267, %v1501
    %v1508 = vadd.f32 %v268, %v1502
    %v1509 = vadd.f32 %v269, %v1503
    %v1510 = vrot.slane %v1504, 5
    %v1511 = vrot.slane %v1505, 5
    %v1512 = vrot.slane %v1506, 5
    %v1513 = vrot.slane %v1507, 5
    %v1514 = vrot.slane %v1508, 5
    %v1515 = vrot.slane %v1509, 5
    %vm1516 = vcmp.lt.s32.totalorder %v271, 3
    %v1517 = vsel %vm1516, %v1514, %v1515
    %v1518 = vsel %vm1516, %v1513, %v1514
    %v1519 = vsel %vm1516, %v1512, %v1513
    %v1520 = vsel %vm1516, %v1511, %v1512
    %v1521 = vsel %vm1516, %v1510, %v1511
    %v1522 = vsel %vm1516, %v1515, %v1510
    %v1523 = vsel %vm415, 1, 0
    %v1524 = vsel %vm416, 1, 0
    %v1525 = vsel %vm417, 1, 0
    %v1526 = vsel %vm418, 1, 0
    %v1527 = vsel %vm419, 1, 0
    %v1528 = vsel %vm420, 1, 0
    %vm1529 = vcmp.eq.s32.totalorder %v1523, 1
    %vm1530 = vcmp.eq.s32.totalorder %v1524, 1
    %vm1531 = vcmp.eq.s32.totalorder %v1525, 1
    %vm1532 = vcmp.eq.s32.totalorder %v1526, 1
    %vm1533 = vcmp.eq.s32.totalorder %v1527, 1
    %vm1534 = vcmp.eq.s32.totalorder %v1528, 1
    %v1535 = vsel %vm1529, %v1522, 0.0
    %v1536 = vsel %vm1530, %v1521, 0.0
    %v1537 = vsel %vm1531, %v1520, 0.0
    %v1538 = vsel %vm1532, %v1519, 0.0
    %v1539 = vsel %vm1533, %v1518, 0.0
    %v1540 = vsel %vm1534, %v1517, 0.0
    %v1541 = vpack.c.bf16 %v1536, %v1535
    %v1542 = vpack.c.bf16 %v1538, %v1537
    %v1543 = vpack.c.bf16 %v1540, %v1539
    %v1544 = vrot.slane %v1504, 7
    %v1545 = vrot.slane %v1505, 7
    %v1546 = vrot.slane %v1506, 7
    %v1547 = vrot.slane %v1507, 7
    %v1548 = vrot.slane %v1508, 7
    %v1549 = vrot.slane %v1509, 7
    %v1550 = vsel %vm571, %v1548, %v1549
    %v1551 = vsel %vm571, %v1547, %v1548
    %v1552 = vsel %vm571, %v1546, %v1547
    %v1553 = vsel %vm571, %v1545, %v1546
    %v1554 = vsel %vm571, %v1544, %v1545
    %v1555 = vsel %vm571, %v1549, %v1544
    %v1556 = vsel %vm584, %v1555, 0.0
    %v1557 = vsel %vm585, %v1554, 0.0
    %v1558 = vsel %vm586, %v1553, 0.0
    %v1559 = vsel %vm587, %v1552, 0.0
    %v1560 = vsel %vm588, %v1551, 0.0
    %v1561 = vsel %vm589, %v1550, 0.0
    %v1562 = vpack.c.bf16 %v1557, %v1556
    %v1563 = vpack.c.bf16 %v1559, %v1558
    %v1564 = vpack.c.bf16 %v1561, %v1560
    %v1565 = vrot.slane %v1504, 1
    %v1566 = vrot.slane %v1505, 1
    %v1567 = vrot.slane %v1506, 1
    %v1568 = vrot.slane %v1507, 1
    %v1569 = vrot.slane %v1508, 1
    %v1570 = vrot.slane %v1509, 1
    %v1571 = vsel %vm608, %v1569, %v1570
    %v1572 = vsel %vm608, %v1568, %v1569
    %v1573 = vsel %vm608, %v1567, %v1568
    %v1574 = vsel %vm608, %v1566, %v1567
    %v1575 = vsel %vm608, %v1565, %v1566
    %v1576 = vsel %vm608, %v1570, %v1565
    %v1577 = vsel %vm621, %v1575, 0.0
    %v1578 = vsel %vm622, %v1574, 0.0
    %v1579 = vsel %vm623, %v1573, 0.0
    %v1580 = vsel %vm624, %v1572, 0.0
    %v1581 = vsel %vm625, %v1571, 0.0
    %v1582 = vsel %vm626, %v1576, 0.0
    %v1583 = vpack.c.bf16 %v1578, %v1577
    %v1584 = vpack.c.bf16 %v1580, %v1579
    %v1585 = vpack.c.bf16 %v1582, %v1581
    %v1586 = vrot.slane %v1504, 3
    %v1587 = vrot.slane %v1505, 3
    %v1588 = vrot.slane %v1506, 3
    %v1589 = vrot.slane %v1507, 3
    %v1590 = vrot.slane %v1508, 3
    %v1591 = vrot.slane %v1509, 3
    %vm1592 = vcmp.lt.s32.totalorder %v271, 5
    %v1593 = vsel %vm1592, %v1590, %v1591
    %v1594 = vsel %vm1592, %v1589, %v1590
    %v1595 = vsel %vm1592, %v1588, %v1589
    %v1596 = vsel %vm1592, %v1587, %v1588
    %v1597 = vsel %vm1592, %v1586, %v1587
    %v1598 = vsel %vm1592, %v1591, %v1586
    %v1599 = vsel %vm535, 1, 0
    %v1600 = vsel %vm536, 1, 0
    %v1601 = vsel %vm537, 1, 0
    %v1602 = vsel %vm538, 1, 0
    %v1603 = vsel %vm539, 1, 0
    %v1604 = vsel %vm540, 1, 0
    %vm1605 = vcmp.eq.s32.totalorder %v1599, 1
    %vm1606 = vcmp.eq.s32.totalorder %v1600, 1
    %vm1607 = vcmp.eq.s32.totalorder %v1601, 1
    %vm1608 = vcmp.eq.s32.totalorder %v1602, 1
    %vm1609 = vcmp.eq.s32.totalorder %v1603, 1
    %vm1610 = vcmp.eq.s32.totalorder %v1604, 1
    %v1611 = vsel %vm1605, %v1597, 0.0
    %v1612 = vsel %vm1606, %v1596, 0.0
    %v1613 = vsel %vm1607, %v1595, 0.0
    %v1614 = vsel %vm1608, %v1594, 0.0
    %v1615 = vsel %vm1609, %v1593, 0.0
    %v1616 = vsel %vm1610, %v1598, 0.0
    %v1617 = vpack.c.bf16 %v1612, %v1611
    %v1618 = vpack.c.bf16 %v1614, %v1613
    %v1619 = vpack.c.bf16 %v1616, %v1615
    %s1620 = scalar_lea.vmem [#allocation5], 512
    %v1621 = vld [vmem:[%s1620] sm:$0xf]
    %v1622 = vld [vmem:[%s1620 + $0x4] sm:$0xf]
    %v1623 = vld [vmem:[%s1620 + $0x8] sm:$0xf]
    %v1624 = vld [vmem:[%s1620 + $0xc] sm:$0xf]
    %v1625 = vld [vmem:[%s1620 + $0x10] sm:$0xf]
    %v1626 = vld [vmem:[%s1620 + $0x14] sm:$0xf]
    %v1627 = vld [vmem:[%s1620 + $0x18] sm:$0xf]
    %v1628 = vld [vmem:[%s1620 + $0x1c] sm:$0xf]
    %v1629 = vld [vmem:[%s1620 + $0x20] sm:$0xf]
    %v1630 = vld [vmem:[%s1620 + $0x24] sm:$0xf]
    %v1631 = vld [vmem:[%s1620 + $0x28] sm:$0xf]
    %v1632 = vld [vmem:[%s1620 + $0x2c] sm:$0xf]
    %v1633 = vld [vmem:[%s1620 + $0x30] sm:$0xf]
    %v1634 = vld [vmem:[%s1620 + $0x34] sm:$0xf]
    %v1635 = vld [vmem:[%s1620 + $0x38] sm:$0xf]
    %v1636 = vld [vmem:[%s1620 + $0x3c] sm:$0xf]
    %v1637 = vld [vmem:[%s1620 + $0x40] sm:$0xf]
    %v1638 = vld [vmem:[%s1620 + $0x44] sm:$0xf]
    %v1639 = vld [vmem:[%s1620 + $0x48] sm:$0xf]
    %v1640 = vld [vmem:[%s1620 + $0x4c] sm:$0xf]
    %v1641 = vld [vmem:[%s1620 + $0x50] sm:$0xf]
    %v1642 = vld [vmem:[%s1620 + $0x54] sm:$0xf]
    %v1643 = vld [vmem:[%s1620 + $0x58] sm:$0xf]
    %v1644 = vld [vmem:[%s1620 + $0x5c] sm:$0xf]
    %v1645 = vld [vmem:[%s1620 + $0x60] sm:$0xf]
    %v1646 = vld [vmem:[%s1620 + $0x64] sm:$0xf]
    %v1647 = vld [vmem:[%s1620 + $0x68] sm:$0xf]
    %v1648 = vld [vmem:[%s1620 + $0x6c] sm:$0xf]
    %v1649 = vld [vmem:[%s1620 + $0x70] sm:$0xf]
    %v1650 = vld [vmem:[%s1620 + $0x74] sm:$0xf]
    %v1651 = vld [vmem:[%s1620 + $0x78] sm:$0xf]
    %v1652 = vld [vmem:[%s1620 + $0x7c] sm:$0xf]
    %v1653 = vld [vmem:[%s1620 + $0x80] sm:$0xf]
    %v1654 = vld [vmem:[%s1620 + $0x84] sm:$0xf]
    %v1655 = vld [vmem:[%s1620 + $0x88] sm:$0xf]
    %v1656 = vld [vmem:[%s1620 + $0x8c] sm:$0xf]
    %v1657 = vld [vmem:[%s1620 + $0x90] sm:$0xf]
    %v1658 = vld [vmem:[%s1620 + $0x94] sm:$0xf]
    %v1659 = vld [vmem:[%s1620 + $0x98] sm:$0xf]
    %v1660 = vld [vmem:[%s1620 + $0x9c] sm:$0xf]
    %v1661 = vld [vmem:[%s1620 + $0xa0] sm:$0xf]
    %v1662 = vld [vmem:[%s1620 + $0xa4] sm:$0xf]
    %v1663 = vld [vmem:[%s1620 + $0xa8] sm:$0xf]
    %v1664 = vld [vmem:[%s1620 + $0xac] sm:$0xf]
    %v1665 = vld [vmem:[%s1620 + $0xb0] sm:$0xf]
    %v1666 = vld [vmem:[%s1620 + $0xb4] sm:$0xf]
    %v1667 = vld [vmem:[%s1620 + $0xb8] sm:$0xf]
    %v1668 = vld [vmem:[%s1620 + $0xbc] sm:$0xf]
    %v1669 = vld [vmem:[%s1620 + $0xc0] sm:$0xf]
    %v1670 = vld [vmem:[%s1620 + $0xc4] sm:$0xf]
    %v1671 = vld [vmem:[%s1620 + $0xc8] sm:$0xf]
    %v1672 = vld [vmem:[%s1620 + $0xcc] sm:$0xf]
    %v1673 = vld [vmem:[%s1620 + $0xd0] sm:$0xf]
    %v1674 = vld [vmem:[%s1620 + $0xd4] sm:$0xf]
    %v1675 = vld [vmem:[%s1620 + $0xd8] sm:$0xf]
    %v1676 = vld [vmem:[%s1620 + $0xdc] sm:$0xf]
    %v1677 = vld [vmem:[%s1620 + $0xe0] sm:$0xf]
    %v1678 = vld [vmem:[%s1620 + $0xe4] sm:$0xf]
    %v1679 = vld [vmem:[%s1620 + $0xe8] sm:$0xf]
    %v1680 = vld [vmem:[%s1620 + $0xec] sm:$0xf]
    %v1681 = vld [vmem:[%s1620 + $0xf0] sm:$0xf]
    %v1682 = vld [vmem:[%s1620 + $0xf4] sm:$0xf]
    %v1683 = vld [vmem:[%s1620 + $0xf8] sm:$0xf]
    %v1684 = vld [vmem:[%s1620 + $0xfc] sm:$0xf]
    %s1685 = scalar_lea.vmem [#allocation7], 2
    %v1686 = vld [vmem:[%s1685] sm:$0x1]
    %v1688 = vlaneseq
    %v1689 = vshrl.u32 %v1688, 7
    %v1690 = vsub.s32 0, %v1689
    %v1691 = vrot.slane %v1686, %v1690
    %v1757 = vunpack.c.l.b16 %v1621
    %v1758 = vunpack.c.l.b16 %v1622
    %v1759 = vunpack.c.l.b16 %v1623
    %v1760 = vunpack.c.l.b16 %v1624
    %v1761 = vunpack.c.l.b16 %v1625
    %v1762 = vunpack.c.l.b16 %v1626
    %v1763 = vunpack.c.l.b16 %v1627
    %v1764 = vunpack.c.l.b16 %v1628
    %v1765 = vunpack.c.l.b16 %v1629
    %v1766 = vunpack.c.l.b16 %v1630
    %v1767 = vunpack.c.l.b16 %v1631
    %v1768 = vunpack.c.l.b16 %v1632
    %v1769 = vunpack.c.l.b16 %v1633
    %v1770 = vunpack.c.l.b16 %v1634
    %v1771 = vunpack.c.l.b16 %v1635
    %v1772 = vunpack.c.l.b16 %v1636
    %v1773 = vunpack.c.l.b16 %v1637
    %v1774 = vunpack.c.l.b16 %v1638
    %v1775 = vunpack.c.l.b16 %v1639
    %v1776 = vunpack.c.l.b16 %v1640
    %v1777 = vunpack.c.l.b16 %v1641
    %v1778 = vunpack.c.l.b16 %v1642
    %v1779 = vunpack.c.l.b16 %v1643
    %v1780 = vunpack.c.l.b16 %v1644
    %v1781 = vunpack.c.l.b16 %v1645
    %v1782 = vunpack.c.l.b16 %v1646
    %v1783 = vunpack.c.l.b16 %v1647
    %v1784 = vunpack.c.l.b16 %v1648
    %v1785 = vunpack.c.l.b16 %v1649
    %v1786 = vunpack.c.l.b16 %v1650
    %v1787 = vunpack.c.l.b16 %v1651
    %v1788 = vunpack.c.l.b16 %v1652
    %v1789 = vunpack.c.l.b16 %v1653
    %v1790 = vunpack.c.l.b16 %v1654
    %v1791 = vunpack.c.l.b16 %v1655
    %v1792 = vunpack.c.l.b16 %v1656
    %v1793 = vunpack.c.l.b16 %v1657
    %v1794 = vunpack.c.l.b16 %v1658
    %v1795 = vunpack.c.l.b16 %v1659
    %v1796 = vunpack.c.l.b16 %v1660
    %v1797 = vunpack.c.l.b16 %v1661
    %v1798 = vunpack.c.l.b16 %v1662
    %v1799 = vunpack.c.l.b16 %v1663
    %v1800 = vunpack.c.l.b16 %v1664
    %v1801 = vunpack.c.l.b16 %v1665
    %v1802 = vunpack.c.l.b16 %v1666
    %v1803 = vunpack.c.l.b16 %v1667
    %v1804 = vunpack.c.l.b16 %v1668
    %v1805 = vunpack.c.l.b16 %v1669
    %v1806 = vunpack.c.l.b16 %v1670
    %v1807 = vunpack.c.l.b16 %v1671
    %v1808 = vunpack.c.l.b16 %v1672
    %v1809 = vunpack.c.l.b16 %v1673
    %v1810 = vunpack.c.l.b16 %v1674
    %v1811 = vunpack.c.l.b16 %v1675
    %v1812 = vunpack.c.l.b16 %v1676
    %v1813 = vunpack.c.l.b16 %v1677
    %v1814 = vunpack.c.l.b16 %v1678
    %v1815 = vunpack.c.l.b16 %v1679
    %v1816 = vunpack.c.l.b16 %v1680
    %v1817 = vunpack.c.l.b16 %v1681
    %v1818 = vunpack.c.l.b16 %v1682
    %v1819 = vunpack.c.l.b16 %v1683
    %v1820 = vunpack.c.l.b16 %v1684
    %v1821 = vpack.c.b16 %v1758, %v1757
    %v1822 = vpack.c.b16 %v1760, %v1759
    %v1823 = vpack.c.b16 %v1762, %v1761
    %v1824 = vpack.c.b16 %v1764, %v1763
    %v1825 = vpack.c.b16 %v1766, %v1765
    %v1826 = vpack.c.b16 %v1768, %v1767
    %v1827 = vpack.c.b16 %v1770, %v1769
    %v1828 = vpack.c.b16 %v1772, %v1771
    %v1829 = vpack.c.b16 %v1774, %v1773
    %v1830 = vpack.c.b16 %v1776, %v1775
    %v1831 = vpack.c.b16 %v1778, %v1777
    %v1832 = vpack.c.b16 %v1780, %v1779
    %v1833 = vpack.c.b16 %v1782, %v1781
    %v1834 = vpack.c.b16 %v1784, %v1783
    %v1835 = vpack.c.b16 %v1786, %v1785
    %v1836 = vpack.c.b16 %v1788, %v1787
    %v1837 = vpack.c.b16 %v1790, %v1789
    %v1838 = vpack.c.b16 %v1792, %v1791
    %v1839 = vpack.c.b16 %v1794, %v1793
    %v1840 = vpack.c.b16 %v1796, %v1795
    %v1841 = vpack.c.b16 %v1798, %v1797
    %v1842 = vpack.c.b16 %v1800, %v1799
    %v1843 = vpack.c.b16 %v1802, %v1801
    %v1844 = vpack.c.b16 %v1804, %v1803
    %v1845 = vpack.c.b16 %v1806, %v1805
    %v1846 = vpack.c.b16 %v1808, %v1807
    %v1847 = vpack.c.b16 %v1810, %v1809
    %v1848 = vpack.c.b16 %v1812, %v1811
    %v1849 = vpack.c.b16 %v1814, %v1813
    %v1850 = vpack.c.b16 %v1816, %v1815
    %v1851 = vpack.c.b16 %v1818, %v1817
    %v1852 = vpack.c.b16 %v1820, %v1819
    %1885 = vmatprep.subr.bf16.mxu0 0
    %1886 = vmatpush1.bf16.msra.mxu0 %v1821
    %1887 = vmatprep.subr.bf16.mxu0 0
    %1888 = vmatpush1.bf16.msra.mxu0 %v1822
    %1889 = vmatprep.subr.bf16.mxu0 0
    %1890 = vmatpush1.bf16.msra.mxu0 %v1823
    %1891 = vmatprep.subr.bf16.mxu0 0
    %1892 = vmatpush1.bf16.msra.mxu0 %v1824
    %1893 = vmatprep.subr.bf16.mxu0 0
    %1894 = vmatpush1.bf16.msra.mxu0 %v1825
    %1895 = vmatprep.subr.bf16.mxu0 0
    %1896 = vmatpush1.bf16.msra.mxu0 %v1826
    %1897 = vmatprep.subr.bf16.mxu0 0
    %1898 = vmatpush1.bf16.msra.mxu0 %v1827
    %1899 = vmatprep.subr.bf16.mxu0 0
    %1900 = vmatpush1.bf16.msra.mxu0 %v1828
    %1901 = vmatprep.subr.bf16.mxu0 0
    %1902 = vmatpush1.bf16.msra.mxu0 %v1829
    %1903 = vmatprep.subr.bf16.mxu0 0
    %1904 = vmatpush1.bf16.msra.mxu0 %v1830
    %1905 = vmatprep.subr.bf16.mxu0 0
    %1906 = vmatpush1.bf16.msra.mxu0 %v1831
    %1907 = vmatprep.subr.bf16.mxu0 0
    %1908 = vmatpush1.bf16.msra.mxu0 %v1832
    %1909 = vmatprep.subr.bf16.mxu0 0
    %1910 = vmatpush1.bf16.msra.mxu0 %v1833
    %1911 = vmatprep.subr.bf16.mxu0 0
    %1912 = vmatpush1.bf16.msra.mxu0 %v1834
    %1913 = vmatprep.subr.bf16.mxu0 0
    %1914 = vmatpush1.bf16.msra.mxu0 %v1835
    %1915 = vmatprep.subr.bf16.mxu0 0
    %1916 = vmatpush1.bf16.msra.mxu0 %v1836
    %1917 = vmatprep.mubr.bf16.mxu0 %v1562
    %1918 = vmatmul.mubr.bf16.gmra.mrb[0].mxu0 %v1541
    %v1919 = vpop.f32.mrb[0].mxu0
    %v1920 = vadd.f32 %v1691, %v1919
    %v1921 = vpop.f32.mrb[0].mxu0
    %v1922 = vpop.f32.mrb[0].mxu0
    %v1923 = vadd.f32 %v1691, %v1922
    %v1924 = vpop.f32.mrb[0].mxu0
    %1925 = vmatprep.mubr.bf16.mxu0 %v1563
    %1926 = vmatmul.mubr.bf16.gmra.mrb[0].mxu0 %v1542
    %v1927 = vpop.f32.mrb[0].mxu0
    %v1928 = vadd.f32 %v1691, %v1927
    %v1929 = vpop.f32.mrb[0].mxu0
    %v1930 = vpop.f32.mrb[0].mxu0
    %v1931 = vadd.f32 %v1691, %v1930
    %v1932 = vpop.f32.mrb[0].mxu0
    %1933 = vmatprep.mubr.bf16.mxu0 %v1564
    %1934 = vmatmul.mubr.bf16.gmra.mrb[0].mxu0 %v1543
    %v1935 = vpop.f32.mrb[0].mxu0
    %v1936 = vadd.f32 %v1691, %v1935
    %v1937 = vpop.f32.mrb[0].mxu0
    %v1938 = vpop.f32.mrb[0].mxu0
    %v1939 = vadd.f32 %v1691, %v1938
    %v1940 = vpop.f32.mrb[0].mxu0
    %1941 = vdwg.mxu0
    %1942 = vmatprep.subr.bf16.mxu0 0
    %1943 = vmatpush1.bf16.msra.mxu0 %v1837
    %1944 = vmatprep.subr.bf16.mxu0 0
    %1945 = vmatpush1.bf16.msra.mxu0 %v1838
    %1946 = vmatprep.subr.bf16.mxu0 0
    %1947 = vmatpush1.bf16.msra.mxu0 %v1839
    %1948 = vmatprep.subr.bf16.mxu0 0
    %1949 = vmatpush1.bf16.msra.mxu0 %v1840
    %1950 = vmatprep.subr.bf16.mxu0 0
    %1951 = vmatpush1.bf16.msra.mxu0 %v1841
    %1952 = vmatprep.subr.bf16.mxu0 0
    %1953 = vmatpush1.bf16.msra.mxu0 %v1842
    %1954 = vmatprep.subr.bf16.mxu0 0
    %1955 = vmatpush1.bf16.msra.mxu0 %v1843
    %1956 = vmatprep.subr.bf16.mxu0 0
    %1957 = vmatpush1.bf16.msra.mxu0 %v1844
    %1958 = vmatprep.subr.bf16.mxu0 0
    %1959 = vmatpush1.bf16.msra.mxu0 %v1845
    %1960 = vmatprep.subr.bf16.mxu0 0
    %1961 = vmatpush1.bf16.msra.mxu0 %v1846
    %1962 = vmatprep.subr.bf16.mxu0 0
    %1963 = vmatpush1.bf16.msra.mxu0 %v1847
    %1964 = vmatprep.subr.bf16.mxu0 0
    %1965 = vmatpush1.bf16.msra.mxu0 %v1848
    %1966 = vmatprep.subr.bf16.mxu0 0
    %1967 = vmatpush1.bf16.msra.mxu0 %v1849
    %1968 = vmatprep.subr.bf16.mxu0 0
    %1969 = vmatpush1.bf16.msra.mxu0 %v1850
    %1970 = vmatprep.subr.bf16.mxu0 0
    %1971 = vmatpush1.bf16.msra.mxu0 %v1851
    %1972 = vmatprep.subr.bf16.mxu0 0
    %1973 = vmatpush1.bf16.msra.mxu0 %v1852
    %1974 = vmatprep.mubr.bf16.mxu0 %v1617
    %1975 = vmatmul.mubr.bf16.gmra.mrb[0].mxu0 %v1583
    %v1976 = vpop.f32.mrb[0].mxu0
    %v1977 = vadd.f32 %v1920, %v1976
    %v1978 = vpop.f32.mrb[0].mxu0
    %v1979 = vpop.f32.mrb[0].mxu0
    %v1980 = vadd.f32 %v1923, %v1979
    %v1981 = vpop.f32.mrb[0].mxu0
    %1982 = vmatprep.mubr.bf16.mxu0 %v1618
    %1983 = vmatmul.mubr.bf16.gmra.mrb[0].mxu0 %v1584
    %v1984 = vpop.f32.mrb[0].mxu0
    %v1985 = vadd.f32 %v1928, %v1984
    %v1986 = vpop.f32.mrb[0].mxu0
    %v1987 = vpop.f32.mrb[0].mxu0
    %v1988 = vadd.f32 %v1931, %v1987
    %v1989 = vpop.f32.mrb[0].mxu0
    %1990 = vmatprep.mubr.bf16.mxu0 %v1619
    %1991 = vmatmul.mubr.bf16.gmra.mrb[0].mxu0 %v1585
    %v1992 = vpop.f32.mrb[0].mxu0
    %v1993 = vadd.f32 %v1936, %v1992
    %v1994 = vpop.f32.mrb[0].mxu0
    %v1995 = vpop.f32.mrb[0].mxu0
    %v1996 = vadd.f32 %v1939, %v1995
    %v1997 = vpop.f32.mrb[0].mxu0
    %1998 = vdwg.mxu0
    %v1999 = vmax.f32 %v1977, 0.0
    %v2000 = vmax.f32 %v1980, 0.0
    %v2001 = vmax.f32 %v1985, 0.0
    %v2002 = vmax.f32 %v1988, 0.0
    %v2003 = vmax.f32 %v1993, 0.0
    %v2004 = vmax.f32 %v1996, 0.0
    %v2005 = vrot.slane %v1999, 5
    %v2006 = vrot.slane %v2000, 5
    %v2007 = vrot.slane %v2001, 5
    %v2008 = vrot.slane %v2002, 5
    %v2009 = vrot.slane %v2003, 5
    %v2010 = vrot.slane %v2004, 5
    %v2011 = vsel %vm1516, %v2009, %v2010
    %v2012 = vsel %vm1516, %v2008, %v2009
    %v2013 = vsel %vm1516, %v2007, %v2008
    %v2014 = vsel %vm1516, %v2006, %v2007
    %v2015 = vsel %vm1516, %v2005, %v2006
    %v2016 = vsel %vm1516, %v2010, %v2005
    %v2017 = vsel %vm1529, %v2016, 0.0
    %v2018 = vsel %vm1530, %v2015, 0.0
    %v2019 = vsel %vm1531, %v2014, 0.0
    %v2020 = vsel %vm1532, %v2013, 0.0
    %v2021 = vsel %vm1533, %v2012, 0.0
    %v2022 = vsel %vm1534, %v2011, 0.0
    %v2023 = vpack.c.bf16 %v2018, %v2017
    %v2024 = vpack.c.bf16 %v2020, %v2019
    %v2025 = vpack.c.bf16 %v2022, %v2021
    %v2026 = vrot.slane %v1999, 7
    %v2027 = vrot.slane %v2000, 7
    %v2028 = vrot.slane %v2001, 7
    %v2029 = vrot.slane %v2002, 7
    %v2030 = vrot.slane %v2003, 7
    %v2031 = vrot.slane %v2004, 7
    %v2032 = vsel %vm571, %v2030, %v2031
    %v2033 = vsel %vm571, %v2029, %v2030
    %v2034 = vsel %vm571, %v2028, %v2029
    %v2035 = vsel %vm571, %v2027, %v2028
    %v2036 = vsel %vm571, %v2026, %v2027
    %v2037 = vsel %vm571, %v2031, %v2026
    %v2038 = vsel %vm584, %v2037, 0.0
    %v2039 = vsel %vm585, %v2036, 0.0
    %v2040 = vsel %vm586, %v2035, 0.0
    %v2041 = vsel %vm587, %v2034, 0.0
    %v2042 = vsel %vm588, %v2033, 0.0
    %v2043 = vsel %vm589, %v2032, 0.0
    %v2044 = vpack.c.bf16 %v2039, %v2038
    %v2045 = vpack.c.bf16 %v2041, %v2040
    %v2046 = vpack.c.bf16 %v2043, %v2042
    %v2047 = vrot.slane %v1999, 1
    %v2048 = vrot.slane %v2000, 1
    %v2049 = vrot.slane %v2001, 1
    %v2050 = vrot.slane %v2002, 1
    %v2051 = vrot.slane %v2003, 1
    %v2052 = vrot.slane %v2004, 1
    %v2053 = vsel %vm608, %v2051, %v2052
    %v2054 = vsel %vm608, %v2050, %v2051
    %v2055 = vsel %vm608, %v2049, %v2050
    %v2056 = vsel %vm608, %v2048, %v2049
    %v2057 = vsel %vm608, %v2047, %v2048
    %v2058 = vsel %vm608, %v2052, %v2047
    %v2059 = vsel %vm621, %v2057, 0.0
    %v2060 = vsel %vm622, %v2056, 0.0
    %v2061 = vsel %vm623, %v2055, 0.0
    %v2062 = vsel %vm624, %v2054, 0.0
    %v2063 = vsel %vm625, %v2053, 0.0
    %v2064 = vsel %vm626, %v2058, 0.0
    %v2065 = vpack.c.bf16 %v2060, %v2059
    %v2066 = vpack.c.bf16 %v2062, %v2061
    %v2067 = vpack.c.bf16 %v2064, %v2063
    %v2068 = vrot.slane %v1999, 3
    %v2069 = vrot.slane %v2000, 3
    %v2070 = vrot.slane %v2001, 3
    %v2071 = vrot.slane %v2002, 3
    %v2072 = vrot.slane %v2003, 3
    %v2073 = vrot.slane %v2004, 3
    %v2074 = vsel %vm1592, %v2072, %v2073
    %v2075 = vsel %vm1592, %v2071, %v2072
    %v2076 = vsel %vm1592, %v2070, %v2071
    %v2077 = vsel %vm1592, %v2069, %v2070
    %v2078 = vsel %vm1592, %v2068, %v2069
    %v2079 = vsel %vm1592, %v2073, %v2068
    %v2080 = vsel %vm1605, %v2078, 0.0
    %v2081 = vsel %vm1606, %v2077, 0.0
    %v2082 = vsel %vm1607, %v2076, 0.0
    %v2083 = vsel %vm1608, %v2075, 0.0
    %v2084 = vsel %vm1609, %v2074, 0.0
    %v2085 = vsel %vm1610, %v2079, 0.0
    %v2086 = vpack.c.bf16 %v2081, %v2080
    %v2087 = vpack.c.bf16 %v2083, %v2082
    %v2088 = vpack.c.bf16 %v2085, %v2084
    %s2089 = scalar_lea.vmem [#allocation5], 768
    %v2090 = vld [vmem:[%s2089] sm:$0xf]
    %v2091 = vld [vmem:[%s2089 + $0x4] sm:$0xf]
    %v2092 = vld [vmem:[%s2089 + $0x8] sm:$0xf]
    %v2093 = vld [vmem:[%s2089 + $0xc] sm:$0xf]
    %v2094 = vld [vmem:[%s2089 + $0x10] sm:$0xf]
    %v2095 = vld [vmem:[%s2089 + $0x14] sm:$0xf]
    %v2096 = vld [vmem:[%s2089 + $0x18] sm:$0xf]
    %v2097 = vld [vmem:[%s2089 + $0x1c] sm:$0xf]
    %v2098 = vld [vmem:[%s2089 + $0x20] sm:$0xf]
    %v2099 = vld [vmem:[%s2089 + $0x24] sm:$0xf]
    %v2100 = vld [vmem:[%s2089 + $0x28] sm:$0xf]
    %v2101 = vld [vmem:[%s2089 + $0x2c] sm:$0xf]
    %v2102 = vld [vmem:[%s2089 + $0x30] sm:$0xf]
    %v2103 = vld [vmem:[%s2089 + $0x34] sm:$0xf]
    %v2104 = vld [vmem:[%s2089 + $0x38] sm:$0xf]
    %v2105 = vld [vmem:[%s2089 + $0x3c] sm:$0xf]
    %v2106 = vld [vmem:[%s2089 + $0x40] sm:$0xf]
    %v2107 = vld [vmem:[%s2089 + $0x44] sm:$0xf]
    %v2108 = vld [vmem:[%s2089 + $0x48] sm:$0xf]
    %v2109 = vld [vmem:[%s2089 + $0x4c] sm:$0xf]
    %v2110 = vld [vmem:[%s2089 + $0x50] sm:$0xf]
    %v2111 = vld [vmem:[%s2089 + $0x54] sm:$0xf]
    %v2112 = vld [vmem:[%s2089 + $0x58] sm:$0xf]
    %v2113 = vld [vmem:[%s2089 + $0x5c] sm:$0xf]
    %v2114 = vld [vmem:[%s2089 + $0x60] sm:$0xf]
    %v2115 = vld [vmem:[%s2089 + $0x64] sm:$0xf]
    %v2116 = vld [vmem:[%s2089 + $0x68] sm:$0xf]
    %v2117 = vld [vmem:[%s2089 + $0x6c] sm:$0xf]
    %v2118 = vld [vmem:[%s2089 + $0x70] sm:$0xf]
    %v2119 = vld [vmem:[%s2089 + $0x74] sm:$0xf]
    %v2120 = vld [vmem:[%s2089 + $0x78] sm:$0xf]
    %v2121 = vld [vmem:[%s2089 + $0x7c] sm:$0xf]
    %v2122 = vld [vmem:[%s2089 + $0x80] sm:$0xf]
    %v2123 = vld [vmem:[%s2089 + $0x84] sm:$0xf]
    %v2124 = vld [vmem:[%s2089 + $0x88] sm:$0xf]
    %v2125 = vld [vmem:[%s2089 + $0x8c] sm:$0xf]
    %v2126 = vld [vmem:[%s2089 + $0x90] sm:$0xf]
    %v2127 = vld [vmem:[%s2089 + $0x94] sm:$0xf]
    %v2128 = vld [vmem:[%s2089 + $0x98] sm:$0xf]
    %v2129 = vld [vmem:[%s2089 + $0x9c] sm:$0xf]
    %v2130 = vld [vmem:[%s2089 + $0xa0] sm:$0xf]
    %v2131 = vld [vmem:[%s2089 + $0xa4] sm:$0xf]
    %v2132 = vld [vmem:[%s2089 + $0xa8] sm:$0xf]
    %v2133 = vld [vmem:[%s2089 + $0xac] sm:$0xf]
    %v2134 = vld [vmem:[%s2089 + $0xb0] sm:$0xf]
    %v2135 = vld [vmem:[%s2089 + $0xb4] sm:$0xf]
    %v2136 = vld [vmem:[%s2089 + $0xb8] sm:$0xf]
    %v2137 = vld [vmem:[%s2089 + $0xbc] sm:$0xf]
    %v2138 = vld [vmem:[%s2089 + $0xc0] sm:$0xf]
    %v2139 = vld [vmem:[%s2089 + $0xc4] sm:$0xf]
    %v2140 = vld [vmem:[%s2089 + $0xc8] sm:$0xf]
    %v2141 = vld [vmem:[%s2089 + $0xcc] sm:$0xf]
    %v2142 = vld [vmem:[%s2089 + $0xd0] sm:$0xf]
    %v2143 = vld [vmem:[%s2089 + $0xd4] sm:$0xf]
    %v2144 = vld [vmem:[%s2089 + $0xd8] sm:$0xf]
    %v2145 = vld [vmem:[%s2089 + $0xdc] sm:$0xf]
    %v2146 = vld [vmem:[%s2089 + $0xe0] sm:$0xf]
    %v2147 = vld [vmem:[%s2089 + $0xe4] sm:$0xf]
    %v2148 = vld [vmem:[%s2089 + $0xe8] sm:$0xf]
    %v2149 = vld [vmem:[%s2089 + $0xec] sm:$0xf]
    %v2150 = vld [vmem:[%s2089 + $0xf0] sm:$0xf]
    %v2151 = vld [vmem:[%s2089 + $0xf4] sm:$0xf]
    %v2152 = vld [vmem:[%s2089 + $0xf8] sm:$0xf]
    %v2153 = vld [vmem:[%s2089 + $0xfc] sm:$0xf]
    %s2154 = scalar_lea.vmem [#allocation7], 3
    %v2155 = vld [vmem:[%s2154] sm:$0x1]
    %v2157 = vlaneseq
    %v2158 = vshrl.u32 %v2157, 7
    %v2159 = vsub.s32 0, %v2158
    %v2160 = vrot.slane %v2155, %v2159
    %v2226 = vunpack.c.l.b16 %v2090
    %v2227 = vunpack.c.l.b16 %v2091
    %v2228 = vunpack.c.l.b16 %v2092
    %v2229 = vunpack.c.l.b16 %v2093
    %v2230 = vunpack.c.l.b16 %v2094
    %v2231 = vunpack.c.l.b16 %v2095
    %v2232 = vunpack.c.l.b16 %v2096
    %v2233 = vunpack.c.l.b16 %v2097
    %v2234 = vunpack.c.l.b16 %v2098
    %v2235 = vunpack.c.l.b16 %v2099
    %v2236 = vunpack.c.l.b16 %v2100
    %v2237 = vunpack.c.l.b16 %v2101
    %v2238 = vunpack.c.l.b16 %v2102
    %v2239 = vunpack.c.l.b16 %v2103
    %v2240 = vunpack.c.l.b16 %v2104
    %v2241 = vunpack.c.l.b16 %v2105
    %v2242 = vunpack.c.l.b16 %v2106
    %v2243 = vunpack.c.l.b16 %v2107
    %v2244 = vunpack.c.l.b16 %v2108
    %v2245 = vunpack.c.l.b16 %v2109
    %v2246 = vunpack.c.l.b16 %v2110
    %v2247 = vunpack.c.l.b16 %v2111
    %v2248 = vunpack.c.l.b16 %v2112
    %v2249 = vunpack.c.l.b16 %v2113
    %v2250 = vunpack.c.l.b16 %v2114
    %v2251 = vunpack.c.l.b16 %v2115
    %v2252 = vunpack.c.l.b16 %v2116
    %v2253 = vunpack.c.l.b16 %v2117
    %v2254 = vunpack.c.l.b16 %v2118
    %v2255 = vunpack.c.l.b16 %v2119
    %v2256 = vunpack.c.l.b16 %v2120
    %v2257 = vunpack.c.l.b16 %v2121
    %v2258 = vunpack.c.l.b16 %v2122
    %v2259 = vunpack.c.l.b16 %v2123
    %v2260 = vunpack.c.l.b16 %v2124
    %v2261 = vunpack.c.l.b16 %v2125
    %v2262 = vunpack.c.l.b16 %v2126
    %v2263 = vunpack.c.l.b16 %v2127
    %v2264 = vunpack.c.l.b16 %v2128
    %v2265 = vunpack.c.l.b16 %v2129
    %v2266 = vunpack.c.l.b16 %v2130
    %v2267 = vunpack.c.l.b16 %v2131
    %v2268 = vunpack.c.l.b16 %v2132
    %v2269 = vunpack.c.l.b16 %v2133
    %v2270 = vunpack.c.l.b16 %v2134
    %v2271 = vunpack.c.l.b16 %v2135
    %v2272 = vunpack.c.l.b16 %v2136
    %v2273 = vunpack.c.l.b16 %v2137
    %v2274 = vunpack.c.l.b16 %v2138
    %v2275 = vunpack.c.l.b16 %v2139
    %v2276 = vunpack.c.l.b16 %v2140
    %v2277 = vunpack.c.l.b16 %v2141
    %v2278 = vunpack.c.l.b16 %v2142
    %v2279 = vunpack.c.l.b16 %v2143
    %v2280 = vunpack.c.l.b16 %v2144
    %v2281 = vunpack.c.l.b16 %v2145
    %v2282 = vunpack.c.l.b16 %v2146
    %v2283 = vunpack.c.l.b16 %v2147
    %v2284 = vunpack.c.l.b16 %v2148
    %v2285 = vunpack.c.l.b16 %v2149
    %v2286 = vunpack.c.l.b16 %v2150
    %v2287 = vunpack.c.l.b16 %v2151
    %v2288 = vunpack.c.l.b16 %v2152
    %v2289 = vunpack.c.l.b16 %v2153
    %v2290 = vpack.c.b16 %v2227, %v2226
    %v2291 = vpack.c.b16 %v2229, %v2228
    %v2292 = vpack.c.b16 %v2231, %v2230
    %v2293 = vpack.c.b16 %v2233, %v2232
    %v2294 = vpack.c.b16 %v2235, %v2234
    %v2295 = vpack.c.b16 %v2237, %v2236
    %v2296 = vpack.c.b16 %v2239, %v2238
    %v2297 = vpack.c.b16 %v2241, %v2240
    %v2298 = vpack.c.b16 %v2243, %v2242
    %v2299 = vpack.c.b16 %v2245, %v2244
    %v2300 = vpack.c.b16 %v2247, %v2246
    %v2301 = vpack.c.b16 %v2249, %v2248
    %v2302 = vpack.c.b16 %v2251, %v2250
    %v2303 = vpack.c.b16 %v2253, %v2252
    %v2304 = vpack.c.b16 %v2255, %v2254
    %v2305 = vpack.c.b16 %v2257, %v2256
    %v2306 = vpack.c.b16 %v2259, %v2258
    %v2307 = vpack.c.b16 %v2261, %v2260
    %v2308 = vpack.c.b16 %v2263, %v2262
    %v2309 = vpack.c.b16 %v2265, %v2264
    %v2310 = vpack.c.b16 %v2267, %v2266
    %v2311 = vpack.c.b16 %v2269, %v2268
    %v2312 = vpack.c.b16 %v2271, %v2270
    %v2313 = vpack.c.b16 %v2273, %v2272
    %v2314 = vpack.c.b16 %v2275, %v2274
    %v2315 = vpack.c.b16 %v2277, %v2276
    %v2316 = vpack.c.b16 %v2279, %v2278
    %v2317 = vpack.c.b16 %v2281, %v2280
    %v2318 = vpack.c.b16 %v2283, %v2282
    %v2319 = vpack.c.b16 %v2285, %v2284
    %v2320 = vpack.c.b16 %v2287, %v2286
    %v2321 = vpack.c.b16 %v2289, %v2288
    %2354 = vmatprep.subr.bf16.mxu0 0
    %2355 = vmatpush1.bf16.msra.mxu0 %v2290
    %2356 = vmatprep.subr.bf16.mxu0 0
    %2357 = vmatpush1.bf16.msra.mxu0 %v2291
    %2358 = vmatprep.subr.bf16.mxu0 0
    %2359 = vmatpush1.bf16.msra.mxu0 %v2292
    %2360 = vmatprep.subr.bf16.mxu0 0
    %2361 = vmatpush1.bf16.msra.mxu0 %v2293
    %2362 = vmatprep.subr.bf16.mxu0 0
    %2363 = vmatpush1.bf16.msra.mxu0 %v2294
    %2364 = vmatprep.subr.bf16.mxu0 0
    %2365 = vmatpush1.bf16.msra.mxu0 %v2295
    %2366 = vmatprep.subr.bf16.mxu0 0
    %2367 = vmatpush1.bf16.msra.mxu0 %v2296
    %2368 = vmatprep.subr.bf16.mxu0 0
    %2369 = vmatpush1.bf16.msra.mxu0 %v2297
    %2370 = vmatprep.subr.bf16.mxu0 0
    %2371 = vmatpush1.bf16.msra.mxu0 %v2298
    %2372 = vmatprep.subr.bf16.mxu0 0
    %2373 = vmatpush1.bf16.msra.mxu0 %v2299
    %2374 = vmatprep.subr.bf16.mxu0 0
    %2375 = vmatpush1.bf16.msra.mxu0 %v2300
    %2376 = vmatprep.subr.bf16.mxu0 0
    %2377 = vmatpush1.bf16.msra.mxu0 %v2301
    %2378 = vmatprep.subr.bf16.mxu0 0
    %2379 = vmatpush1.bf16.msra.mxu0 %v2302
    %2380 = vmatprep.subr.bf16.mxu0 0
    %2381 = vmatpush1.bf16.msra.mxu0 %v2303
    %2382 = vmatprep.subr.bf16.mxu0 0
    %2383 = vmatpush1.bf16.msra.mxu0 %v2304
    %2384 = vmatprep.subr.bf16.mxu0 0
    %2385 = vmatpush1.bf16.msra.mxu0 %v2305
    %2386 = vmatprep.mubr.bf16.mxu0 %v2044
    %2387 = vmatmul.mubr.bf16.gmra.mrb[0].mxu0 %v2023
    %v2388 = vpop.f32.mrb[0].mxu0
    %v2389 = vadd.f32 %v2160, %v2388
    %v2390 = vpop.f32.mrb[0].mxu0
    %v2391 = vpop.f32.mrb[0].mxu0
    %v2392 = vadd.f32 %v2160, %v2391
    %v2393 = vpop.f32.mrb[0].mxu0
    %2394 = vmatprep.mubr.bf16.mxu0 %v2045
    %2395 = vmatmul.mubr.bf16.gmra.mrb[0].mxu0 %v2024
    %v2396 = vpop.f32.mrb[0].mxu0
    %v2397 = vadd.f32 %v2160, %v2396
    %v2398 = vpop.f32.mrb[0].mxu0
    %v2399 = vpop.f32.mrb[0].mxu0
    %v2400 = vadd.f32 %v2160, %v2399
    %v2401 = vpop.f32.mrb[0].mxu0
    %2402 = vmatprep.mubr.bf16.mxu0 %v2046
    %2403 = vmatmul.mubr.bf16.gmra.mrb[0].mxu0 %v2025
    %v2404 = vpop.f32.mrb[0].mxu0
    %v2405 = vadd.f32 %v2160, %v2404
    %v2406 = vpop.f32.mrb[0].mxu0
    %v2407 = vpop.f32.mrb[0].mxu0
    %v2408 = vadd.f32 %v2160, %v2407
    %v2409 = vpop.f32.mrb[0].mxu0
    %2410 = vdwg.mxu0
    %2411 = vmatprep.subr.bf16.mxu0 0
    %2412 = vmatpush1.bf16.msra.mxu0 %v2306
    %2413 = vmatprep.subr.bf16.mxu0 0
    %2414 = vmatpush1.bf16.msra.mxu0 %v2307
    %2415 = vmatprep.subr.bf16.mxu0 0
    %2416 = vmatpush1.bf16.msra.mxu0 %v2308
    %2417 = vmatprep.subr.bf16.mxu0 0
    %2418 = vmatpush1.bf16.msra.mxu0 %v2309
    %2419 = vmatprep.subr.bf16.mxu0 0
    %2420 = vmatpush1.bf16.msra.mxu0 %v2310
    %2421 = vmatprep.subr.bf16.mxu0 0
    %2422 = vmatpush1.bf16.msra.mxu0 %v2311
    %2423 = vmatprep.subr.bf16.mxu0 0
    %2424 = vmatpush1.bf16.msra.mxu0 %v2312
    %2425 = vmatprep.subr.bf16.mxu0 0
    %2426 = vmatpush1.bf16.msra.mxu0 %v2313
    %2427 = vmatprep.subr.bf16.mxu0 0
    %2428 = vmatpush1.bf16.msra.mxu0 %v2314
    %2429 = vmatprep.subr.bf16.mxu0 0
    %2430 = vmatpush1.bf16.msra.mxu0 %v2315
    %2431 = vmatprep.subr.bf16.mxu0 0
    %2432 = vmatpush1.bf16.msra.mxu0 %v2316
    %2433 = vmatprep.subr.bf16.mxu0 0
    %2434 = vmatpush1.bf16.msra.mxu0 %v2317
    %2435 = vmatprep.subr.bf16.mxu0 0
    %2436 = vmatpush1.bf16.msra.mxu0 %v2318
    %2437 = vmatprep.subr.bf16.mxu0 0
    %2438 = vmatpush1.bf16.msra.mxu0 %v2319
    %2439 = vmatprep.subr.bf16.mxu0 0
    %2440 = vmatpush1.bf16.msra.mxu0 %v2320
    %2441 = vmatprep.subr.bf16.mxu0 0
    %2442 = vmatpush1.bf16.msra.mxu0 %v2321
    %2443 = vmatprep.mubr.bf16.mxu0 %v2086
    %2444 = vmatmul.mubr.bf16.gmra.mrb[0].mxu0 %v2065
    %v2445 = vpop.f32.mrb[0].mxu0
    %v2446 = vadd.f32 %v2389, %v2445
    %v2447 = vpop.f32.mrb[0].mxu0
    %v2448 = vpop.f32.mrb[0].mxu0
    %v2449 = vadd.f32 %v2392, %v2448
    %v2450 = vpop.f32.mrb[0].mxu0
    %2451 = vmatprep.mubr.bf16.mxu0 %v2087
    %2452 = vmatmul.mubr.bf16.gmra.mrb[0].mxu0 %v2066
    %v2453 = vpop.f32.mrb[0].mxu0
    %v2454 = vadd.f32 %v2397, %v2453
    %v2455 = vpop.f32.mrb[0].mxu0
    %v2456 = vpop.f32.mrb[0].mxu0
    %v2457 = vadd.f32 %v2400, %v2456
    %v2458 = vpop.f32.mrb[0].mxu0
    %2459 = vmatprep.mubr.bf16.mxu0 %v2088
    %2460 = vmatmul.mubr.bf16.gmra.mrb[0].mxu0 %v2067
    %v2461 = vpop.f32.mrb[0].mxu0
    %v2462 = vadd.f32 %v2405, %v2461
    %v2463 = vpop.f32.mrb[0].mxu0
    %v2464 = vpop.f32.mrb[0].mxu0
    %v2465 = vadd.f32 %v2408, %v2464
    %v2466 = vpop.f32.mrb[0].mxu0
    %2467 = vdwg.mxu0
    %v2468 = vmax.f32 %v2446, 0.0
    %v2469 = vmax.f32 %v2449, 0.0
    %v2470 = vmax.f32 %v2454, 0.0
    %v2471 = vmax.f32 %v2457, 0.0
    %v2472 = vmax.f32 %v2462, 0.0
    %v2473 = vmax.f32 %v2465, 0.0
    %v2474 = vadd.f32 %v1504, %v2468
    %v2475 = vadd.f32 %v1505, %v2469
    %v2476 = vadd.f32 %v1506, %v2470
    %v2477 = vadd.f32 %v1507, %v2471
    %v2478 = vadd.f32 %v1508, %v2472
    %v2479 = vadd.f32 %v1509, %v2473
    %v2480 = vrot.slane %v2474, 2
    %v2481 = vrot.slane %v2475, 2
    %v2482 = vrot.slane %v2476, 2
    %v2483 = vrot.slane %v2477, 2
    %v2484 = vrot.slane %v2478, 2
    %v2485 = vrot.slane %v2479, 2
    %v2486 = vsel %vm642, %v2484, %v2485
    %v2487 = vsel %vm642, %v2483, %v2484
    %v2488 = vsel %vm642, %v2482, %v2483
    %v2489 = vsel %vm642, %v2481, %v2482
    %v2490 = vsel %vm642, %v2480, %v2481
    %v2491 = vsel %vm642, %v2485, %v2480
    %v2492 = vsel %vm391, 1, 0
    %v2493 = vsel %vm392, 1, 0
    %v2494 = vsel %vm393, 1, 0
    %v2495 = vsel %vm394, 1, 0
    %v2496 = vsel %vm395, 1, 0
    %v2497 = vsel %vm396, 1, 0
    %vm2498 = vcmp.eq.s32.totalorder %v2492, 1
    %vm2499 = vcmp.eq.s32.totalorder %v2493, 1
    %vm2500 = vcmp.eq.s32.totalorder %v2494, 1
    %vm2501 = vcmp.eq.s32.totalorder %v2495, 1
    %vm2502 = vcmp.eq.s32.totalorder %v2496, 1
    %vm2503 = vcmp.eq.s32.totalorder %v2497, 1
    %v2504 = vsel %vm2498, %v2491, 0.0
    %v2505 = vsel %vm2499, %v2490, 0.0
    %v2506 = vsel %vm2500, %v2489, 0.0
    %v2507 = vsel %vm2501, %v2488, 0.0
    %v2508 = vsel %vm2502, %v2487, 0.0
    %v2509 = vsel %vm2503, %v2486, 0.0
    %v2510 = vpack.c.bf16 %v2505, %v2504
    %v2511 = vpack.c.bf16 %v2507, %v2506
    %v2512 = vpack.c.bf16 %v2509, %v2508
    %v2513 = vrot.slane %v2474, 6
    %v2514 = vrot.slane %v2475, 6
    %v2515 = vrot.slane %v2476, 6
    %v2516 = vrot.slane %v2477, 6
    %v2517 = vrot.slane %v2478, 6
    %v2518 = vrot.slane %v2479, 6
    %vm2519 = vcmp.lt.s32.totalorder %v271, 2
    %v2520 = vsel %vm2519, %v2517, %v2518
    %v2521 = vsel %vm2519, %v2516, %v2517
    %v2522 = vsel %vm2519, %v2515, %v2516
    %v2523 = vsel %vm2519, %v2514, %v2515
    %v2524 = vsel %vm2519, %v2513, %v2514
    %v2525 = vsel %vm2519, %v2518, %v2513
    %v2526 = vsel %vm439, 1, 0
    %v2527 = vsel %vm440, 1, 0
    %v2528 = vsel %vm441, 1, 0
    %v2529 = vsel %vm442, 1, 0
    %v2530 = vsel %vm443, 1, 0
    %v2531 = vsel %vm444, 1, 0
    %vm2532 = vcmp.eq.s32.totalorder %v2526, 1
    %vm2533 = vcmp.eq.s32.totalorder %v2527, 1
    %vm2534 = vcmp.eq.s32.totalorder %v2528, 1
    %vm2535 = vcmp.eq.s32.totalorder %v2529, 1
    %vm2536 = vcmp.eq.s32.totalorder %v2530, 1
    %vm2537 = vcmp.eq.s32.totalorder %v2531, 1
    %v2538 = vsel %vm2532, %v2525, 0.0
    %v2539 = vsel %vm2533, %v2524, 0.0
    %v2540 = vsel %vm2534, %v2523, 0.0
    %v2541 = vsel %vm2535, %v2522, 0.0
    %v2542 = vsel %vm2536, %v2521, 0.0
    %v2543 = vsel %vm2537, %v2520, 0.0
    %v2544 = vpack.c.bf16 %v2539, %v2538
    %v2545 = vpack.c.bf16 %v2541, %v2540
    %v2546 = vpack.c.bf16 %v2543, %v2542
    %v2547 = vsel %vm655, %v2490, 0.0
    %v2548 = vsel %vm656, %v2489, 0.0
    %v2549 = vsel %vm657, %v2488, 0.0
    %v2550 = vsel %vm658, %v2487, 0.0
    %v2551 = vsel %vm659, %v2486, 0.0
    %v2552 = vsel %vm660, %v2491, 0.0
    %v2553 = vpack.c.bf16 %v2548, %v2547
    %v2554 = vpack.c.bf16 %v2550, %v2549
    %v2555 = vpack.c.bf16 %v2552, %v2551
    %v2556 = vsel %vm559, 1, 0
    %v2557 = vsel %vm560, 1, 0
    %v2558 = vsel %vm561, 1, 0
    %v2559 = vsel %vm562, 1, 0
    %v2560 = vsel %vm563, 1, 0
    %v2561 = vsel %vm564, 1, 0
    %vm2562 = vcmp.eq.s32.totalorder %v2556, 1
    %vm2563 = vcmp.eq.s32.totalorder %v2557, 1
    %vm2564 = vcmp.eq.s32.totalorder %v2558, 1
    %vm2565 = vcmp.eq.s32.totalorder %v2559, 1
    %vm2566 = vcmp.eq.s32.totalorder %v2560, 1
    %vm2567 = vcmp.eq.s32.totalorder %v2561, 1
    %v2568 = vsel %vm2562, %v2524, 0.0
    %v2569 = vsel %vm2563, %v2523, 0.0
    %v2570 = vsel %vm2564, %v2522, 0.0
    %v2571 = vsel %vm2565, %v2521, 0.0
    %v2572 = vsel %vm2566, %v2520, 0.0
    %v2573 = vsel %vm2567, %v2525, 0.0
    %v2574 = vpack.c.bf16 %v2569, %v2568
    %v2575 = vpack.c.bf16 %v2571, %v2570
    %v2576 = vpack.c.bf16 %v2573, %v2572
    %s2577 = scalar_lea.vmem [#allocation5], 1024
    %v2578 = vld [vmem:[%s2577] sm:$0xf]
    %v2579 = vld [vmem:[%s2577 + $0x4] sm:$0xf]
    %v2580 = vld [vmem:[%s2577 + $0x8] sm:$0xf]
    %v2581 = vld [vmem:[%s2577 + $0xc] sm:$0xf]
    %v2582 = vld [vmem:[%s2577 + $0x10] sm:$0xf]
    %v2583 = vld [vmem:[%s2577 + $0x14] sm:$0xf]
    %v2584 = vld [vmem:[%s2577 + $0x18] sm:$0xf]
    %v2585 = vld [vmem:[%s2577 + $0x1c] sm:$0xf]
    %v2586 = vld [vmem:[%s2577 + $0x20] sm:$0xf]
    %v2587 = vld [vmem:[%s2577 + $0x24] sm:$0xf]
    %v2588 = vld [vmem:[%s2577 + $0x28] sm:$0xf]
    %v2589 = vld [vmem:[%s2577 + $0x2c] sm:$0xf]
    %v2590 = vld [vmem:[%s2577 + $0x30] sm:$0xf]
    %v2591 = vld [vmem:[%s2577 + $0x34] sm:$0xf]
    %v2592 = vld [vmem:[%s2577 + $0x38] sm:$0xf]
    %v2593 = vld [vmem:[%s2577 + $0x3c] sm:$0xf]
    %v2594 = vld [vmem:[%s2577 + $0x40] sm:$0xf]
    %v2595 = vld [vmem:[%s2577 + $0x44] sm:$0xf]
    %v2596 = vld [vmem:[%s2577 + $0x48] sm:$0xf]
    %v2597 = vld [vmem:[%s2577 + $0x4c] sm:$0xf]
    %v2598 = vld [vmem:[%s2577 + $0x50] sm:$0xf]
    %v2599 = vld [vmem:[%s2577 + $0x54] sm:$0xf]
    %v2600 = vld [vmem:[%s2577 + $0x58] sm:$0xf]
    %v2601 = vld [vmem:[%s2577 + $0x5c] sm:$0xf]
    %v2602 = vld [vmem:[%s2577 + $0x60] sm:$0xf]
    %v2603 = vld [vmem:[%s2577 + $0x64] sm:$0xf]
    %v2604 = vld [vmem:[%s2577 + $0x68] sm:$0xf]
    %v2605 = vld [vmem:[%s2577 + $0x6c] sm:$0xf]
    %v2606 = vld [vmem:[%s2577 + $0x70] sm:$0xf]
    %v2607 = vld [vmem:[%s2577 + $0x74] sm:$0xf]
    %v2608 = vld [vmem:[%s2577 + $0x78] sm:$0xf]
    %v2609 = vld [vmem:[%s2577 + $0x7c] sm:$0xf]
    %v2610 = vld [vmem:[%s2577 + $0x80] sm:$0xf]
    %v2611 = vld [vmem:[%s2577 + $0x84] sm:$0xf]
    %v2612 = vld [vmem:[%s2577 + $0x88] sm:$0xf]
    %v2613 = vld [vmem:[%s2577 + $0x8c] sm:$0xf]
    %v2614 = vld [vmem:[%s2577 + $0x90] sm:$0xf]
    %v2615 = vld [vmem:[%s2577 + $0x94] sm:$0xf]
    %v2616 = vld [vmem:[%s2577 + $0x98] sm:$0xf]
    %v2617 = vld [vmem:[%s2577 + $0x9c] sm:$0xf]
    %v2618 = vld [vmem:[%s2577 + $0xa0] sm:$0xf]
    %v2619 = vld [vmem:[%s2577 + $0xa4] sm:$0xf]
    %v2620 = vld [vmem:[%s2577 + $0xa8] sm:$0xf]
    %v2621 = vld [vmem:[%s2577 + $0xac] sm:$0xf]
    %v2622 = vld [vmem:[%s2577 + $0xb0] sm:$0xf]
    %v2623 = vld [vmem:[%s2577 + $0xb4] sm:$0xf]
    %v2624 = vld [vmem:[%s2577 + $0xb8] sm:$0xf]
    %v2625 = vld [vmem:[%s2577 + $0xbc] sm:$0xf]
    %v2626 = vld [vmem:[%s2577 + $0xc0] sm:$0xf]
    %v2627 = vld [vmem:[%s2577 + $0xc4] sm:$0xf]
    %v2628 = vld [vmem:[%s2577 + $0xc8] sm:$0xf]
    %v2629 = vld [vmem:[%s2577 + $0xcc] sm:$0xf]
    %v2630 = vld [vmem:[%s2577 + $0xd0] sm:$0xf]
    %v2631 = vld [vmem:[%s2577 + $0xd4] sm:$0xf]
    %v2632 = vld [vmem:[%s2577 + $0xd8] sm:$0xf]
    %v2633 = vld [vmem:[%s2577 + $0xdc] sm:$0xf]
    %v2634 = vld [vmem:[%s2577 + $0xe0] sm:$0xf]
    %v2635 = vld [vmem:[%s2577 + $0xe4] sm:$0xf]
    %v2636 = vld [vmem:[%s2577 + $0xe8] sm:$0xf]
    %v2637 = vld [vmem:[%s2577 + $0xec] sm:$0xf]
    %v2638 = vld [vmem:[%s2577 + $0xf0] sm:$0xf]
    %v2639 = vld [vmem:[%s2577 + $0xf4] sm:$0xf]
    %v2640 = vld [vmem:[%s2577 + $0xf8] sm:$0xf]
    %v2641 = vld [vmem:[%s2577 + $0xfc] sm:$0xf]
    %s2642 = scalar_lea.vmem [#allocation7], 4
    %v2643 = vld [vmem:[%s2642] sm:$0x1]
    %v2645 = vlaneseq
    %v2646 = vshrl.u32 %v2645, 7
    %v2647 = vsub.s32 0, %v2646
    %v2648 = vrot.slane %v2643, %v2647
    %v2714 = vunpack.c.l.b16 %v2578
    %v2715 = vunpack.c.l.b16 %v2579
    %v2716 = vunpack.c.l.b16 %v2580
    %v2717 = vunpack.c.l.b16 %v2581
    %v2718 = vunpack.c.l.b16 %v2582
    %v2719 = vunpack.c.l.b16 %v2583
    %v2720 = vunpack.c.l.b16 %v2584
    %v2721 = vunpack.c.l.b16 %v2585
    %v2722 = vunpack.c.l.b16 %v2586
    %v2723 = vunpack.c.l.b16 %v2587
    %v2724 = vunpack.c.l.b16 %v2588
    %v2725 = vunpack.c.l.b16 %v2589
    %v2726 = vunpack.c.l.b16 %v2590
    %v2727 = vunpack.c.l.b16 %v2591
    %v2728 = vunpack.c.l.b16 %v2592
    %v2729 = vunpack.c.l.b16 %v2593
    %v2730 = vunpack.c.l.b16 %v2594
    %v2731 = vunpack.c.l.b16 %v2595
    %v2732 = vunpack.c.l.b16 %v2596
    %v2733 = vunpack.c.l.b16 %v2597
    %v2734 = vunpack.c.l.b16 %v2598
    %v2735 = vunpack.c.l.b16 %v2599
    %v2736 = vunpack.c.l.b16 %v2600
    %v2737 = vunpack.c.l.b16 %v2601
    %v2738 = vunpack.c.l.b16 %v2602
    %v2739 = vunpack.c.l.b16 %v2603
    %v2740 = vunpack.c.l.b16 %v2604
    %v2741 = vunpack.c.l.b16 %v2605
    %v2742 = vunpack.c.l.b16 %v2606
    %v2743 = vunpack.c.l.b16 %v2607
    %v2744 = vunpack.c.l.b16 %v2608
    %v2745 = vunpack.c.l.b16 %v2609
    %v2746 = vunpack.c.l.b16 %v2610
    %v2747 = vunpack.c.l.b16 %v2611
    %v2748 = vunpack.c.l.b16 %v2612
    %v2749 = vunpack.c.l.b16 %v2613
    %v2750 = vunpack.c.l.b16 %v2614
    %v2751 = vunpack.c.l.b16 %v2615
    %v2752 = vunpack.c.l.b16 %v2616
    %v2753 = vunpack.c.l.b16 %v2617
    %v2754 = vunpack.c.l.b16 %v2618
    %v2755 = vunpack.c.l.b16 %v2619
    %v2756 = vunpack.c.l.b16 %v2620
    %v2757 = vunpack.c.l.b16 %v2621
    %v2758 = vunpack.c.l.b16 %v2622
    %v2759 = vunpack.c.l.b16 %v2623
    %v2760 = vunpack.c.l.b16 %v2624
    %v2761 = vunpack.c.l.b16 %v2625
    %v2762 = vunpack.c.l.b16 %v2626
    %v2763 = vunpack.c.l.b16 %v2627
    %v2764 = vunpack.c.l.b16 %v2628
    %v2765 = vunpack.c.l.b16 %v2629
    %v2766 = vunpack.c.l.b16 %v2630
    %v2767 = vunpack.c.l.b16 %v2631
    %v2768 = vunpack.c.l.b16 %v2632
    %v2769 = vunpack.c.l.b16 %v2633
    %v2770 = vunpack.c.l.b16 %v2634
    %v2771 = vunpack.c.l.b16 %v2635
    %v2772 = vunpack.c.l.b16 %v2636
    %v2773 = vunpack.c.l.b16 %v2637
    %v2774 = vunpack.c.l.b16 %v2638
    %v2775 = vunpack.c.l.b16 %v2639
    %v2776 = vunpack.c.l.b16 %v2640
    %v2777 = vunpack.c.l.b16 %v2641
    %v2778 = vpack.c.b16 %v2715, %v2714
    %v2779 = vpack.c.b16 %v2717, %v2716
    %v2780 = vpack.c.b16 %v2719, %v2718
    %v2781 = vpack.c.b16 %v2721, %v2720
    %v2782 = vpack.c.b16 %v2723, %v2722
    %v2783 = vpack.c.b16 %v2725, %v2724
    %v2784 = vpack.c.b16 %v2727, %v2726
    %v2785 = vpack.c.b16 %v2729, %v2728
    %v2786 = vpack.c.b16 %v2731, %v2730
    %v2787 = vpack.c.b16 %v2733, %v2732
    %v2788 = vpack.c.b16 %v2735, %v2734
    %v2789 = vpack.c.b16 %v2737, %v2736
    %v2790 = vpack.c.b16 %v2739, %v2738
    %v2791 = vpack.c.b16 %v2741, %v2740
    %v2792 = vpack.c.b16 %v2743, %v2742
    %v2793 = vpack.c.b16 %v2745, %v2744
    %v2794 = vpack.c.b16 %v2747, %v2746
    %v2795 = vpack.c.b16 %v2749, %v2748
    %v2796 = vpack.c.b16 %v2751, %v2750
    %v2797 = vpack.c.b16 %v2753, %v2752
    %v2798 = vpack.c.b16 %v2755, %v2754
    %v2799 = vpack.c.b16 %v2757, %v2756
    %v2800 = vpack.c.b16 %v2759, %v2758
    %v2801 = vpack.c.b16 %v2761, %v2760
    %v2802 = vpack.c.b16 %v2763, %v2762
    %v2803 = vpack.c.b16 %v2765, %v2764
    %v2804 = vpack.c.b16 %v2767, %v2766
    %v2805 = vpack.c.b16 %v2769, %v2768
    %v2806 = vpack.c.b16 %v2771, %v2770
    %v2807 = vpack.c.b16 %v2773, %v2772
    %v2808 = vpack.c.b16 %v2775, %v2774
    %v2809 = vpack.c.b16 %v2777, %v2776
    %2842 = vmatprep.subr.bf16.mxu0 0
    %2843 = vmatpush1.bf16.msra.mxu0 %v2778
    %2844 = vmatprep.subr.bf16.mxu0 0
    %2845 = vmatpush1.bf16.msra.mxu0 %v2779
    %2846 = vmatprep.subr.bf16.mxu0 0
    %2847 = vmatpush1.bf16.msra.mxu0 %v2780
    %2848 = vmatprep.subr.bf16.mxu0 0
    %2849 = vmatpush1.bf16.msra.mxu0 %v2781
    %2850 = vmatprep.subr.bf16.mxu0 0
    %2851 = vmatpush1.bf16.msra.mxu0 %v2782
    %2852 = vmatprep.subr.bf16.mxu0 0
    %2853 = vmatpush1.bf16.msra.mxu0 %v2783
    %2854 = vmatprep.subr.bf16.mxu0 0
    %2855 = vmatpush1.bf16.msra.mxu0 %v2784
    %2856 = vmatprep.subr.bf16.mxu0 0
    %2857 = vmatpush1.bf16.msra.mxu0 %v2785
    %2858 = vmatprep.subr.bf16.mxu0 0
    %2859 = vmatpush1.bf16.msra.mxu0 %v2786
    %2860 = vmatprep.subr.bf16.mxu0 0
    %2861 = vmatpush1.bf16.msra.mxu0 %v2787
    %2862 = vmatprep.subr.bf16.mxu0 0
    %2863 = vmatpush1.bf16.msra.mxu0 %v2788
    %2864 = vmatprep.subr.bf16.mxu0 0
    %2865 = vmatpush1.bf16.msra.mxu0 %v2789
    %2866 = vmatprep.subr.bf16.mxu0 0
    %2867 = vmatpush1.bf16.msra.mxu0 %v2790
    %2868 = vmatprep.subr.bf16.mxu0 0
    %2869 = vmatpush1.bf16.msra.mxu0 %v2791
    %2870 = vmatprep.subr.bf16.mxu0 0
    %2871 = vmatpush1.bf16.msra.mxu0 %v2792
    %2872 = vmatprep.subr.bf16.mxu0 0
    %2873 = vmatpush1.bf16.msra.mxu0 %v2793
    %2874 = vmatprep.mubr.bf16.mxu0 %v2544
    %2875 = vmatmul.mubr.bf16.gmra.mrb[0].mxu0 %v2510
    %v2876 = vpop.f32.mrb[0].mxu0
    %v2877 = vadd.f32 %v2648, %v2876
    %v2878 = vpop.f32.mrb[0].mxu0
    %v2879 = vpop.f32.mrb[0].mxu0
    %v2880 = vadd.f32 %v2648, %v2879
    %v2881 = vpop.f32.mrb[0].mxu0
    %2882 = vmatprep.mubr.bf16.mxu0 %v2545
    %2883 = vmatmul.mubr.bf16.gmra.mrb[0].mxu0 %v2511
    %v2884 = vpop.f32.mrb[0].mxu0
    %v2885 = vadd.f32 %v2648, %v2884
    %v2886 = vpop.f32.mrb[0].mxu0
    %v2887 = vpop.f32.mrb[0].mxu0
    %v2888 = vadd.f32 %v2648, %v2887
    %v2889 = vpop.f32.mrb[0].mxu0
    %2890 = vmatprep.mubr.bf16.mxu0 %v2546
    %2891 = vmatmul.mubr.bf16.gmra.mrb[0].mxu0 %v2512
    %v2892 = vpop.f32.mrb[0].mxu0
    %v2893 = vadd.f32 %v2648, %v2892
    %v2894 = vpop.f32.mrb[0].mxu0
    %v2895 = vpop.f32.mrb[0].mxu0
    %v2896 = vadd.f32 %v2648, %v2895
    %v2897 = vpop.f32.mrb[0].mxu0
    %2898 = vdwg.mxu0
    %2899 = vmatprep.subr.bf16.mxu0 0
    %2900 = vmatpush1.bf16.msra.mxu0 %v2794
    %2901 = vmatprep.subr.bf16.mxu0 0
    %2902 = vmatpush1.bf16.msra.mxu0 %v2795
    %2903 = vmatprep.subr.bf16.mxu0 0
    %2904 = vmatpush1.bf16.msra.mxu0 %v2796
    %2905 = vmatprep.subr.bf16.mxu0 0
    %2906 = vmatpush1.bf16.msra.mxu0 %v2797
    %2907 = vmatprep.subr.bf16.mxu0 0
    %2908 = vmatpush1.bf16.msra.mxu0 %v2798
    %2909 = vmatprep.subr.bf16.mxu0 0
    %2910 = vmatpush1.bf16.msra.mxu0 %v2799
    %2911 = vmatprep.subr.bf16.mxu0 0
    %2912 = vmatpush1.bf16.msra.mxu0 %v2800
    %2913 = vmatprep.subr.bf16.mxu0 0
    %2914 = vmatpush1.bf16.msra.mxu0 %v2801
    %2915 = vmatprep.subr.bf16.mxu0 0
    %2916 = vmatpush1.bf16.msra.mxu0 %v2802
    %2917 = vmatprep.subr.bf16.mxu0 0
    %2918 = vmatpush1.bf16.msra.mxu0 %v2803
    %2919 = vmatprep.subr.bf16.mxu0 0
    %2920 = vmatpush1.bf16.msra.mxu0 %v2804
    %2921 = vmatprep.subr.bf16.mxu0 0
    %2922 = vmatpush1.bf16.msra.mxu0 %v2805
    %2923 = vmatprep.subr.bf16.mxu0 0
    %2924 = vmatpush1.bf16.msra.mxu0 %v2806
    %2925 = vmatprep.subr.bf16.mxu0 0
    %2926 = vmatpush1.bf16.msra.mxu0 %v2807
    %2927 = vmatprep.subr.bf16.mxu0 0
    %2928 = vmatpush1.bf16.msra.mxu0 %v2808
    %2929 = vmatprep.subr.bf16.mxu0 0
    %2930 = vmatpush1.bf16.msra.mxu0 %v2809
    %2931 = vmatprep.mubr.bf16.mxu0 %v2574
    %2932 = vmatmul.mubr.bf16.gmra.mrb[0].mxu0 %v2553
    %v2933 = vpop.f32.mrb[0].mxu0
    %v2934 = vadd.f32 %v2877, %v2933
    %v2935 = vpop.f32.mrb[0].mxu0
    %v2936 = vpop.f32.mrb[0].mxu0
    %v2937 = vadd.f32 %v2880, %v2936
    %v2938 = vpop.f32.mrb[0].mxu0
    %2939 = vmatprep.mubr.bf16.mxu0 %v2575
    %2940 = vmatmul.mubr.bf16.gmra.mrb[0].mxu0 %v2554
    %v2941 = vpop.f32.mrb[0].mxu0
    %v2942 = vadd.f32 %v2885, %v2941
    %v2943 = vpop.f32.mrb[0].mxu0
    %v2944 = vpop.f32.mrb[0].mxu0
    %v2945 = vadd.f32 %v2888, %v2944
    %v2946 = vpop.f32.mrb[0].mxu0
    %2947 = vmatprep.mubr.bf16.mxu0 %v2576
    %2948 = vmatmul.mubr.bf16.gmra.mrb[0].mxu0 %v2555
    %v2949 = vpop.f32.mrb[0].mxu0
    %v2950 = vadd.f32 %v2893, %v2949
    %v2951 = vpop.f32.mrb[0].mxu0
    %v2952 = vpop.f32.mrb[0].mxu0
    %v2953 = vadd.f32 %v2896, %v2952
    %v2954 = vpop.f32.mrb[0].mxu0
    %2955 = vdwg.mxu0
    %v2956 = vmax.f32 %v2934, 0.0
    %v2957 = vmax.f32 %v2937, 0.0
    %v2958 = vmax.f32 %v2942, 0.0
    %v2959 = vmax.f32 %v2945, 0.0
    %v2960 = vmax.f32 %v2950, 0.0
    %v2961 = vmax.f32 %v2953, 0.0
    %v2962 = vrot.slane %v2956, 2
    %v2963 = vrot.slane %v2957, 2
    %v2964 = vrot.slane %v2958, 2
    %v2965 = vrot.slane %v2959, 2
    %v2966 = vrot.slane %v2960, 2
    %v2967 = vrot.slane %v2961, 2
    %v2968 = vsel %vm642, %v2966, %v2967
    %v2969 = vsel %vm642, %v2965, %v2966
    %v2970 = vsel %vm642, %v2964, %v2965
    %v2971 = vsel %vm642, %v2963, %v2964
    %v2972 = vsel %vm642, %v2962, %v2963
    %v2973 = vsel %vm642, %v2967, %v2962
    %v2974 = vsel %vm2498, %v2973, 0.0
    %v2975 = vsel %vm2499, %v2972, 0.0
    %v2976 = vsel %vm2500, %v2971, 0.0
    %v2977 = vsel %vm2501, %v2970, 0.0
    %v2978 = vsel %vm2502, %v2969, 0.0
    %v2979 = vsel %vm2503, %v2968, 0.0
    %v2980 = vpack.c.bf16 %v2975, %v2974
    %v2981 = vpack.c.bf16 %v2977, %v2976
    %v2982 = vpack.c.bf16 %v2979, %v2978
    %v2983 = vrot.slane %v2956, 6
    %v2984 = vrot.slane %v2957, 6
    %v2985 = vrot.slane %v2958, 6
    %v2986 = vrot.slane %v2959, 6
    %v2987 = vrot.slane %v2960, 6
    %v2988 = vrot.slane %v2961, 6
    %v2989 = vsel %vm2519, %v2987, %v2988
    %v2990 = vsel %vm2519, %v2986, %v2987
    %v2991 = vsel %vm2519, %v2985, %v2986
    %v2992 = vsel %vm2519, %v2984, %v2985
    %v2993 = vsel %vm2519, %v2983, %v2984
    %v2994 = vsel %vm2519, %v2988, %v2983
    %v2995 = vsel %vm2532, %v2994, 0.0
    %v2996 = vsel %vm2533, %v2993, 0.0
    %v2997 = vsel %vm2534, %v2992, 0.0
    %v2998 = vsel %vm2535, %v2991, 0.0
    %v2999 = vsel %vm2536, %v2990, 0.0
    %v3000 = vsel %vm2537, %v2989, 0.0
    %v3001 = vpack.c.bf16 %v2996, %v2995
    %v3002 = vpack.c.bf16 %v2998, %v2997
    %v3003 = vpack.c.bf16 %v3000, %v2999
    %v3004 = vsel %vm655, %v2972, 0.0
    %v3005 = vsel %vm656, %v2971, 0.0
    %v3006 = vsel %vm657, %v2970, 0.0
    %v3007 = vsel %vm658, %v2969, 0.0
    %v3008 = vsel %vm659, %v2968, 0.0
    %v3009 = vsel %vm660, %v2973, 0.0
    %v3010 = vpack.c.bf16 %v3005, %v3004
    %v3011 = vpack.c.bf16 %v3007, %v3006
    %v3012 = vpack.c.bf16 %v3009, %v3008
    %v3013 = vsel %vm2562, %v2993, 0.0
    %v3014 = vsel %vm2563, %v2992, 0.0
    %v3015 = vsel %vm2564, %v2991, 0.0
    %v3016 = vsel %vm2565, %v2990, 0.0
    %v3017 = vsel %vm2566, %v2989, 0.0
    %v3018 = vsel %vm2567, %v2994, 0.0
    %v3019 = vpack.c.bf16 %v3014, %v3013
    %v3020 = vpack.c.bf16 %v3016, %v3015
    %v3021 = vpack.c.bf16 %v3018, %v3017
    %s3022 = scalar_lea.vmem [#allocation5], 1280
    %v3023 = vld [vmem:[%s3022] sm:$0xf]
    %v3024 = vld [vmem:[%s3022 + $0x4] sm:$0xf]
    %v3025 = vld [vmem:[%s3022 + $0x8] sm:$0xf]
    %v3026 = vld [vmem:[%s3022 + $0xc] sm:$0xf]
    %v3027 = vld [vmem:[%s3022 + $0x10] sm:$0xf]
    %v3028 = vld [vmem:[%s3022 + $0x14] sm:$0xf]
    %v3029 = vld [vmem:[%s3022 + $0x18] sm:$0xf]
    %v3030 = vld [vmem:[%s3022 + $0x1c] sm:$0xf]
    %v3031 = vld [vmem:[%s3022 + $0x20] sm:$0xf]
    %v3032 = vld [vmem:[%s3022 + $0x24] sm:$0xf]
    %v3033 = vld [vmem:[%s3022 + $0x28] sm:$0xf]
    %v3034 = vld [vmem:[%s3022 + $0x2c] sm:$0xf]
    %v3035 = vld [vmem:[%s3022 + $0x30] sm:$0xf]
    %v3036 = vld [vmem:[%s3022 + $0x34] sm:$0xf]
    %v3037 = vld [vmem:[%s3022 + $0x38] sm:$0xf]
    %v3038 = vld [vmem:[%s3022 + $0x3c] sm:$0xf]
    %v3039 = vld [vmem:[%s3022 + $0x40] sm:$0xf]
    %v3040 = vld [vmem:[%s3022 + $0x44] sm:$0xf]
    %v3041 = vld [vmem:[%s3022 + $0x48] sm:$0xf]
    %v3042 = vld [vmem:[%s3022 + $0x4c] sm:$0xf]
    %v3043 = vld [vmem:[%s3022 + $0x50] sm:$0xf]
    %v3044 = vld [vmem:[%s3022 + $0x54] sm:$0xf]
    %v3045 = vld [vmem:[%s3022 + $0x58] sm:$0xf]
    %v3046 = vld [vmem:[%s3022 + $0x5c] sm:$0xf]
    %v3047 = vld [vmem:[%s3022 + $0x60] sm:$0xf]
    %v3048 = vld [vmem:[%s3022 + $0x64] sm:$0xf]
    %v3049 = vld [vmem:[%s3022 + $0x68] sm:$0xf]
    %v3050 = vld [vmem:[%s3022 + $0x6c] sm:$0xf]
    %v3051 = vld [vmem:[%s3022 + $0x70] sm:$0xf]
    %v3052 = vld [vmem:[%s3022 + $0x74] sm:$0xf]
    %v3053 = vld [vmem:[%s3022 + $0x78] sm:$0xf]
    %v3054 = vld [vmem:[%s3022 + $0x7c] sm:$0xf]
    %v3055 = vld [vmem:[%s3022 + $0x80] sm:$0xf]
    %v3056 = vld [vmem:[%s3022 + $0x84] sm:$0xf]
    %v3057 = vld [vmem:[%s3022 + $0x88] sm:$0xf]
    %v3058 = vld [vmem:[%s3022 + $0x8c] sm:$0xf]
    %v3059 = vld [vmem:[%s3022 + $0x90] sm:$0xf]
    %v3060 = vld [vmem:[%s3022 + $0x94] sm:$0xf]
    %v3061 = vld [vmem:[%s3022 + $0x98] sm:$0xf]
    %v3062 = vld [vmem:[%s3022 + $0x9c] sm:$0xf]
    %v3063 = vld [vmem:[%s3022 + $0xa0] sm:$0xf]
    %v3064 = vld [vmem:[%s3022 + $0xa4] sm:$0xf]
    %v3065 = vld [vmem:[%s3022 + $0xa8] sm:$0xf]
    %v3066 = vld [vmem:[%s3022 + $0xac] sm:$0xf]
    %v3067 = vld [vmem:[%s3022 + $0xb0] sm:$0xf]
    %v3068 = vld [vmem:[%s3022 + $0xb4] sm:$0xf]
    %v3069 = vld [vmem:[%s3022 + $0xb8] sm:$0xf]
    %v3070 = vld [vmem:[%s3022 + $0xbc] sm:$0xf]
    %v3071 = vld [vmem:[%s3022 + $0xc0] sm:$0xf]
    %v3072 = vld [vmem:[%s3022 + $0xc4] sm:$0xf]
    %v3073 = vld [vmem:[%s3022 + $0xc8] sm:$0xf]
    %v3074 = vld [vmem:[%s3022 + $0xcc] sm:$0xf]
    %v3075 = vld [vmem:[%s3022 + $0xd0] sm:$0xf]
    %v3076 = vld [vmem:[%s3022 + $0xd4] sm:$0xf]
    %v3077 = vld [vmem:[%s3022 + $0xd8] sm:$0xf]
    %v3078 = vld [vmem:[%s3022 + $0xdc] sm:$0xf]
    %v3079 = vld [vmem:[%s3022 + $0xe0] sm:$0xf]
    %v3080 = vld [vmem:[%s3022 + $0xe4] sm:$0xf]
    %v3081 = vld [vmem:[%s3022 + $0xe8] sm:$0xf]
    %v3082 = vld [vmem:[%s3022 + $0xec] sm:$0xf]
    %v3083 = vld [vmem:[%s3022 + $0xf0] sm:$0xf]
    %v3084 = vld [vmem:[%s3022 + $0xf4] sm:$0xf]
    %v3085 = vld [vmem:[%s3022 + $0xf8] sm:$0xf]
    %v3086 = vld [vmem:[%s3022 + $0xfc] sm:$0xf]
    %s3087 = scalar_lea.vmem [#allocation7], 5
    %v3088 = vld [vmem:[%s3087] sm:$0x1]
    %v3090 = vlaneseq
    %v3091 = vshrl.u32 %v3090, 7
    %v3092 = vsub.s32 0, %v3091
    %v3093 = vrot.slane %v3088, %v3092
    %v3159 = vunpack.c.l.b16 %v3023
    %v3160 = vunpack.c.l.b16 %v3024
    %v3161 = vunpack.c.l.b16 %v3025
    %v3162 = vunpack.c.l.b16 %v3026
    %v3163 = vunpack.c.l.b16 %v3027
    %v3164 = vunpack.c.l.b16 %v3028
    %v3165 = vunpack.c.l.b16 %v3029
    %v3166 = vunpack.c.l.b16 %v3030
    %v3167 = vunpack.c.l.b16 %v3031
    %v3168 = vunpack.c.l.b16 %v3032
    %v3169 = vunpack.c.l.b16 %v3033
    %v3170 = vunpack.c.l.b16 %v3034
    %v3171 = vunpack.c.l.b16 %v3035
    %v3172 = vunpack.c.l.b16 %v3036
    %v3173 = vunpack.c.l.b16 %v3037
    %v3174 = vunpack.c.l.b16 %v3038
    %v3175 = vunpack.c.l.b16 %v3039
    %v3176 = vunpack.c.l.b16 %v3040
    %v3177 = vunpack.c.l.b16 %v3041
    %v3178 = vunpack.c.l.b16 %v3042
    %v3179 = vunpack.c.l.b16 %v3043
    %v3180 = vunpack.c.l.b16 %v3044
    %v3181 = vunpack.c.l.b16 %v3045
    %v3182 = vunpack.c.l.b16 %v3046
    %v3183 = vunpack.c.l.b16 %v3047
    %v3184 = vunpack.c.l.b16 %v3048
    %v3185 = vunpack.c.l.b16 %v3049
    %v3186 = vunpack.c.l.b16 %v3050
    %v3187 = vunpack.c.l.b16 %v3051
    %v3188 = vunpack.c.l.b16 %v3052
    %v3189 = vunpack.c.l.b16 %v3053
    %v3190 = vunpack.c.l.b16 %v3054
    %v3191 = vunpack.c.l.b16 %v3055
    %v3192 = vunpack.c.l.b16 %v3056
    %v3193 = vunpack.c.l.b16 %v3057
    %v3194 = vunpack.c.l.b16 %v3058
    %v3195 = vunpack.c.l.b16 %v3059
    %v3196 = vunpack.c.l.b16 %v3060
    %v3197 = vunpack.c.l.b16 %v3061
    %v3198 = vunpack.c.l.b16 %v3062
    %v3199 = vunpack.c.l.b16 %v3063
    %v3200 = vunpack.c.l.b16 %v3064
    %v3201 = vunpack.c.l.b16 %v3065
    %v3202 = vunpack.c.l.b16 %v3066
    %v3203 = vunpack.c.l.b16 %v3067
    %v3204 = vunpack.c.l.b16 %v3068
    %v3205 = vunpack.c.l.b16 %v3069
    %v3206 = vunpack.c.l.b16 %v3070
    %v3207 = vunpack.c.l.b16 %v3071
    %v3208 = vunpack.c.l.b16 %v3072
    %v3209 = vunpack.c.l.b16 %v3073
    %v3210 = vunpack.c.l.b16 %v3074
    %v3211 = vunpack.c.l.b16 %v3075
    %v3212 = vunpack.c.l.b16 %v3076
    %v3213 = vunpack.c.l.b16 %v3077
    %v3214 = vunpack.c.l.b16 %v3078
    %v3215 = vunpack.c.l.b16 %v3079
    %v3216 = vunpack.c.l.b16 %v3080
    %v3217 = vunpack.c.l.b16 %v3081
    %v3218 = vunpack.c.l.b16 %v3082
    %v3219 = vunpack.c.l.b16 %v3083
    %v3220 = vunpack.c.l.b16 %v3084
    %v3221 = vunpack.c.l.b16 %v3085
    %v3222 = vunpack.c.l.b16 %v3086
    %v3223 = vpack.c.b16 %v3160, %v3159
    %v3224 = vpack.c.b16 %v3162, %v3161
    %v3225 = vpack.c.b16 %v3164, %v3163
    %v3226 = vpack.c.b16 %v3166, %v3165
    %v3227 = vpack.c.b16 %v3168, %v3167
    %v3228 = vpack.c.b16 %v3170, %v3169
    %v3229 = vpack.c.b16 %v3172, %v3171
    %v3230 = vpack.c.b16 %v3174, %v3173
    %v3231 = vpack.c.b16 %v3176, %v3175
    %v3232 = vpack.c.b16 %v3178, %v3177
    %v3233 = vpack.c.b16 %v3180, %v3179
    %v3234 = vpack.c.b16 %v3182, %v3181
    %v3235 = vpack.c.b16 %v3184, %v3183
    %v3236 = vpack.c.b16 %v3186, %v3185
    %v3237 = vpack.c.b16 %v3188, %v3187
    %v3238 = vpack.c.b16 %v3190, %v3189
    %v3239 = vpack.c.b16 %v3192, %v3191
    %v3240 = vpack.c.b16 %v3194, %v3193
    %v3241 = vpack.c.b16 %v3196, %v3195
    %v3242 = vpack.c.b16 %v3198, %v3197
    %v3243 = vpack.c.b16 %v3200, %v3199
    %v3244 = vpack.c.b16 %v3202, %v3201
    %v3245 = vpack.c.b16 %v3204, %v3203
    %v3246 = vpack.c.b16 %v3206, %v3205
    %v3247 = vpack.c.b16 %v3208, %v3207
    %v3248 = vpack.c.b16 %v3210, %v3209
    %v3249 = vpack.c.b16 %v3212, %v3211
    %v3250 = vpack.c.b16 %v3214, %v3213
    %v3251 = vpack.c.b16 %v3216, %v3215
    %v3252 = vpack.c.b16 %v3218, %v3217
    %v3253 = vpack.c.b16 %v3220, %v3219
    %v3254 = vpack.c.b16 %v3222, %v3221
    %3287 = vmatprep.subr.bf16.mxu0 0
    %3288 = vmatpush1.bf16.msra.mxu0 %v3223
    %3289 = vmatprep.subr.bf16.mxu0 0
    %3290 = vmatpush1.bf16.msra.mxu0 %v3224
    %3291 = vmatprep.subr.bf16.mxu0 0
    %3292 = vmatpush1.bf16.msra.mxu0 %v3225
    %3293 = vmatprep.subr.bf16.mxu0 0
    %3294 = vmatpush1.bf16.msra.mxu0 %v3226
    %3295 = vmatprep.subr.bf16.mxu0 0
    %3296 = vmatpush1.bf16.msra.mxu0 %v3227
    %3297 = vmatprep.subr.bf16.mxu0 0
    %3298 = vmatpush1.bf16.msra.mxu0 %v3228
    %3299 = vmatprep.subr.bf16.mxu0 0
    %3300 = vmatpush1.bf16.msra.mxu0 %v3229
    %3301 = vmatprep.subr.bf16.mxu0 0
    %3302 = vmatpush1.bf16.msra.mxu0 %v3230
    %3303 = vmatprep.subr.bf16.mxu0 0
    %3304 = vmatpush1.bf16.msra.mxu0 %v3231
    %3305 = vmatprep.subr.bf16.mxu0 0
    %3306 = vmatpush1.bf16.msra.mxu0 %v3232
    %3307 = vmatprep.subr.bf16.mxu0 0
    %3308 = vmatpush1.bf16.msra.mxu0 %v3233
    %3309 = vmatprep.subr.bf16.mxu0 0
    %3310 = vmatpush1.bf16.msra.mxu0 %v3234
    %3311 = vmatprep.subr.bf16.mxu0 0
    %3312 = vmatpush1.bf16.msra.mxu0 %v3235
    %3313 = vmatprep.subr.bf16.mxu0 0
    %3314 = vmatpush1.bf16.msra.mxu0 %v3236
    %3315 = vmatprep.subr.bf16.mxu0 0
    %3316 = vmatpush1.bf16.msra.mxu0 %v3237
    %3317 = vmatprep.subr.bf16.mxu0 0
    %3318 = vmatpush1.bf16.msra.mxu0 %v3238
    %3319 = vmatprep.mubr.bf16.mxu0 %v3001
    %3320 = vmatmul.mubr.bf16.gmra.mrb[0].mxu0 %v2980
    %v3321 = vpop.f32.mrb[0].mxu0
    %v3322 = vadd.f32 %v3093, %v3321
    %v3323 = vpop.f32.mrb[0].mxu0
    %v3324 = vpop.f32.mrb[0].mxu0
    %v3325 = vadd.f32 %v3093, %v3324
    %v3326 = vpop.f32.mrb[0].mxu0
    %3327 = vmatprep.mubr.bf16.mxu0 %v3002
    %3328 = vmatmul.mubr.bf16.gmra.mrb[0].mxu0 %v2981
    %v3329 = vpop.f32.mrb[0].mxu0
    %v3330 = vadd.f32 %v3093, %v3329
    %v3331 = vpop.f32.mrb[0].mxu0
    %v3332 = vpop.f32.mrb[0].mxu0
    %v3333 = vadd.f32 %v3093, %v3332
    %v3334 = vpop.f32.mrb[0].mxu0
    %3335 = vmatprep.mubr.bf16.mxu0 %v3003
    %3336 = vmatmul.mubr.bf16.gmra.mrb[0].mxu0 %v2982
    %v3337 = vpop.f32.mrb[0].mxu0
    %v3338 = vadd.f32 %v3093, %v3337
    %v3339 = vpop.f32.mrb[0].mxu0
    %v3340 = vpop.f32.mrb[0].mxu0
    %v3341 = vadd.f32 %v3093, %v3340
    %v3342 = vpop.f32.mrb[0].mxu0
    %3343 = vdwg.mxu0
    %3344 = vmatprep.subr.bf16.mxu0 0
    %3345 = vmatpush1.bf16.msra.mxu0 %v3239
    %3346 = vmatprep.subr.bf16.mxu0 0
    %3347 = vmatpush1.bf16.msra.mxu0 %v3240
    %3348 = vmatprep.subr.bf16.mxu0 0
    %3349 = vmatpush1.bf16.msra.mxu0 %v3241
    %3350 = vmatprep.subr.bf16.mxu0 0
    %3351 = vmatpush1.bf16.msra.mxu0 %v3242
    %3352 = vmatprep.subr.bf16.mxu0 0
    %3353 = vmatpush1.bf16.msra.mxu0 %v3243
    %3354 = vmatprep.subr.bf16.mxu0 0
    %3355 = vmatpush1.bf16.msra.mxu0 %v3244
    %3356 = vmatprep.subr.bf16.mxu0 0
    %3357 = vmatpush1.bf16.msra.mxu0 %v3245
    %3358 = vmatprep.subr.bf16.mxu0 0
    %3359 = vmatpush1.bf16.msra.mxu0 %v3246
    %3360 = vmatprep.subr.bf16.mxu0 0
    %3361 = vmatpush1.bf16.msra.mxu0 %v3247
    %3362 = vmatprep.subr.bf16.mxu0 0
    %3363 = vmatpush1.bf16.msra.mxu0 %v3248
    %3364 = vmatprep.subr.bf16.mxu0 0
    %3365 = vmatpush1.bf16.msra.mxu0 %v3249
    %3366 = vmatprep.subr.bf16.mxu0 0
    %3367 = vmatpush1.bf16.msra.mxu0 %v3250
    %3368 = vmatprep.subr.bf16.mxu0 0
    %3369 = vmatpush1.bf16.msra.mxu0 %v3251
    %3370 = vmatprep.subr.bf16.mxu0 0
    %3371 = vmatpush1.bf16.msra.mxu0 %v3252
    %3372 = vmatprep.subr.bf16.mxu0 0
    %3373 = vmatpush1.bf16.msra.mxu0 %v3253
    %3374 = vmatprep.subr.bf16.mxu0 0
    %3375 = vmatpush1.bf16.msra.mxu0 %v3254
    %3376 = vmatprep.mubr.bf16.mxu0 %v3019
    %3377 = vmatmul.mubr.bf16.gmra.mrb[0].mxu0 %v3010
    %v3378 = vpop.f32.mrb[0].mxu0
    %v3379 = vadd.f32 %v3322, %v3378
    %v3380 = vpop.f32.mrb[0].mxu0
    %v3381 = vpop.f32.mrb[0].mxu0
    %v3382 = vadd.f32 %v3325, %v3381
    %v3383 = vpop.f32.mrb[0].mxu0
    %3384 = vmatprep.mubr.bf16.mxu0 %v3020
    %3385 = vmatmul.mubr.bf16.gmra.mrb[0].mxu0 %v3011
    %v3386 = vpop.f32.mrb[0].mxu0
    %v3387 = vadd.f32 %v3330, %v3386
    %v3388 = vpop.f32.mrb[0].mxu0
    %v3389 = vpop.f32.mrb[0].mxu0
    %v3390 = vadd.f32 %v3333, %v3389
    %v3391 = vpop.f32.mrb[0].mxu0
    %3392 = vmatprep.mubr.bf16.mxu0 %v3021
    %3393 = vmatmul.mubr.bf16.gmra.mrb[0].mxu0 %v3012
    %v3394 = vpop.f32.mrb[0].mxu0
    %v3395 = vadd.f32 %v3338, %v3394
    %v3396 = vpop.f32.mrb[0].mxu0
    %v3397 = vpop.f32.mrb[0].mxu0
    %v3398 = vadd.f32 %v3341, %v3397
    %v3399 = vpop.f32.mrb[0].mxu0
    %3400 = vdwg.mxu0
    %v3401 = vmax.f32 %v3379, 0.0
    %v3402 = vmax.f32 %v3382, 0.0
    %v3403 = vmax.f32 %v3387, 0.0
    %v3404 = vmax.f32 %v3390, 0.0
    %v3405 = vmax.f32 %v3395, 0.0
    %v3406 = vmax.f32 %v3398, 0.0
    %v3407 = vadd.f32 %v2474, %v3401
    %v3408 = vadd.f32 %v2475, %v3402
    %v3409 = vadd.f32 %v2476, %v3403
    %v3410 = vadd.f32 %v2477, %v3404
    %v3411 = vadd.f32 %v2478, %v3405
    %v3412 = vadd.f32 %v2479, %v3406
    %v3413 = vrot.slane %v3407, 7
    %v3414 = vrot.slane %v3408, 7
    %v3415 = vrot.slane %v3409, 7
    %v3416 = vrot.slane %v3410, 7
    %v3417 = vrot.slane %v3411, 7
    %v3418 = vrot.slane %v3412, 7
    %v3419 = vsel %vm571, %v3417, %v3418
    %v3420 = vsel %vm571, %v3416, %v3417
    %v3421 = vsel %vm571, %v3415, %v3416
    %v3422 = vsel %vm571, %v3414, %v3415
    %v3423 = vsel %vm571, %v3413, %v3414
    %v3424 = vsel %vm571, %v3418, %v3413
    %v3425 = vsel %vm584, %v3424, 0.0
    %v3426 = vsel %vm585, %v3423, 0.0
    %v3427 = vsel %vm586, %v3422, 0.0
    %v3428 = vsel %vm587, %v3421, 0.0
    %v3429 = vsel %vm588, %v3420, 0.0
    %v3430 = vsel %vm589, %v3419, 0.0
    %v3431 = vpack.c.bf16 %v3426, %v3425
    %v3432 = vpack.c.bf16 %v3428, %v3427
    %v3433 = vpack.c.bf16 %v3430, %v3429
    %v3434 = vpack.c.bf16 %v3408, %v3407
    %v3435 = vpack.c.bf16 %v3410, %v3409
    %v3436 = vpack.c.bf16 %v3412, %v3411
    %v3437 = vrot.slane %v3407, 1
    %v3438 = vrot.slane %v3408, 1
    %v3439 = vrot.slane %v3409, 1
    %v3440 = vrot.slane %v3410, 1
    %v3441 = vrot.slane %v3411, 1
    %v3442 = vrot.slane %v3412, 1
    %v3443 = vsel %vm608, %v3441, %v3442
    %v3444 = vsel %vm608, %v3440, %v3441
    %v3445 = vsel %vm608, %v3439, %v3440
    %v3446 = vsel %vm608, %v3438, %v3439
    %v3447 = vsel %vm608, %v3437, %v3438
    %v3448 = vsel %vm608, %v3442, %v3437
    %v3449 = vsel %vm621, %v3447, 0.0
    %v3450 = vsel %vm622, %v3446, 0.0
    %v3451 = vsel %vm623, %v3445, 0.0
    %v3452 = vsel %vm624, %v3444, 0.0
    %v3453 = vsel %vm625, %v3443, 0.0
    %v3454 = vsel %vm626, %v3448, 0.0
    %v3455 = vpack.c.bf16 %v3450, %v3449
    %v3456 = vpack.c.bf16 %v3452, %v3451
    %v3457 = vpack.c.bf16 %v3454, %v3453
    %v3458 = vrot.slane %v3407, 2
    %v3459 = vrot.slane %v3408, 2
    %v3460 = vrot.slane %v3409, 2
    %v3461 = vrot.slane %v3410, 2
    %v3462 = vrot.slane %v3411, 2
    %v3463 = vrot.slane %v3412, 2
    %v3464 = vsel %vm642, %v3462, %v3463
    %v3465 = vsel %vm642, %v3461, %v3462
    %v3466 = vsel %vm642, %v3460, %v3461
    %v3467 = vsel %vm642, %v3459, %v3460
    %v3468 = vsel %vm642, %v3458, %v3459
    %v3469 = vsel %vm642, %v3463, %v3458
    %v3470 = vsel %vm655, %v3468, 0.0
    %v3471 = vsel %vm656, %v3467, 0.0
    %v3472 = vsel %vm657, %v3466, 0.0
    %v3473 = vsel %vm658, %v3465, 0.0
    %v3474 = vsel %vm659, %v3464, 0.0
    %v3475 = vsel %vm660, %v3469, 0.0
    %v3476 = vpack.c.bf16 %v3471, %v3470
    %v3477 = vpack.c.bf16 %v3473, %v3472
    %v3478 = vpack.c.bf16 %v3475, %v3474
    %s3479 = scalar_lea.vmem [#allocation5], 1536
    %v3480 = vld [vmem:[%s3479] sm:$0xf]
    %v3481 = vld [vmem:[%s3479 + $0x4] sm:$0xf]
    %v3482 = vld [vmem:[%s3479 + $0x8] sm:$0xf]
    %v3483 = vld [vmem:[%s3479 + $0xc] sm:$0xf]
    %v3484 = vld [vmem:[%s3479 + $0x10] sm:$0xf]
    %v3485 = vld [vmem:[%s3479 + $0x14] sm:$0xf]
    %v3486 = vld [vmem:[%s3479 + $0x18] sm:$0xf]
    %v3487 = vld [vmem:[%s3479 + $0x1c] sm:$0xf]
    %v3488 = vld [vmem:[%s3479 + $0x20] sm:$0xf]
    %v3489 = vld [vmem:[%s3479 + $0x24] sm:$0xf]
    %v3490 = vld [vmem:[%s3479 + $0x28] sm:$0xf]
    %v3491 = vld [vmem:[%s3479 + $0x2c] sm:$0xf]
    %v3492 = vld [vmem:[%s3479 + $0x30] sm:$0xf]
    %v3493 = vld [vmem:[%s3479 + $0x34] sm:$0xf]
    %v3494 = vld [vmem:[%s3479 + $0x38] sm:$0xf]
    %v3495 = vld [vmem:[%s3479 + $0x3c] sm:$0xf]
    %v3496 = vld [vmem:[%s3479 + $0x40] sm:$0xf]
    %v3497 = vld [vmem:[%s3479 + $0x44] sm:$0xf]
    %v3498 = vld [vmem:[%s3479 + $0x48] sm:$0xf]
    %v3499 = vld [vmem:[%s3479 + $0x4c] sm:$0xf]
    %v3500 = vld [vmem:[%s3479 + $0x50] sm:$0xf]
    %v3501 = vld [vmem:[%s3479 + $0x54] sm:$0xf]
    %v3502 = vld [vmem:[%s3479 + $0x58] sm:$0xf]
    %v3503 = vld [vmem:[%s3479 + $0x5c] sm:$0xf]
    %v3504 = vld [vmem:[%s3479 + $0x60] sm:$0xf]
    %v3505 = vld [vmem:[%s3479 + $0x64] sm:$0xf]
    %v3506 = vld [vmem:[%s3479 + $0x68] sm:$0xf]
    %v3507 = vld [vmem:[%s3479 + $0x6c] sm:$0xf]
    %v3508 = vld [vmem:[%s3479 + $0x70] sm:$0xf]
    %v3509 = vld [vmem:[%s3479 + $0x74] sm:$0xf]
    %v3510 = vld [vmem:[%s3479 + $0x78] sm:$0xf]
    %v3511 = vld [vmem:[%s3479 + $0x7c] sm:$0xf]
    %v3512 = vld [vmem:[%s3479 + $0x80] sm:$0xf]
    %v3513 = vld [vmem:[%s3479 + $0x84] sm:$0xf]
    %v3514 = vld [vmem:[%s3479 + $0x88] sm:$0xf]
    %v3515 = vld [vmem:[%s3479 + $0x8c] sm:$0xf]
    %v3516 = vld [vmem:[%s3479 + $0x90] sm:$0xf]
    %v3517 = vld [vmem:[%s3479 + $0x94] sm:$0xf]
    %v3518 = vld [vmem:[%s3479 + $0x98] sm:$0xf]
    %v3519 = vld [vmem:[%s3479 + $0x9c] sm:$0xf]
    %v3520 = vld [vmem:[%s3479 + $0xa0] sm:$0xf]
    %v3521 = vld [vmem:[%s3479 + $0xa4] sm:$0xf]
    %v3522 = vld [vmem:[%s3479 + $0xa8] sm:$0xf]
    %v3523 = vld [vmem:[%s3479 + $0xac] sm:$0xf]
    %v3524 = vld [vmem:[%s3479 + $0xb0] sm:$0xf]
    %v3525 = vld [vmem:[%s3479 + $0xb4] sm:$0xf]
    %v3526 = vld [vmem:[%s3479 + $0xb8] sm:$0xf]
    %v3527 = vld [vmem:[%s3479 + $0xbc] sm:$0xf]
    %v3528 = vld [vmem:[%s3479 + $0xc0] sm:$0xf]
    %v3529 = vld [vmem:[%s3479 + $0xc4] sm:$0xf]
    %v3530 = vld [vmem:[%s3479 + $0xc8] sm:$0xf]
    %v3531 = vld [vmem:[%s3479 + $0xcc] sm:$0xf]
    %v3532 = vld [vmem:[%s3479 + $0xd0] sm:$0xf]
    %v3533 = vld [vmem:[%s3479 + $0xd4] sm:$0xf]
    %v3534 = vld [vmem:[%s3479 + $0xd8] sm:$0xf]
    %v3535 = vld [vmem:[%s3479 + $0xdc] sm:$0xf]
    %v3536 = vld [vmem:[%s3479 + $0xe0] sm:$0xf]
    %v3537 = vld [vmem:[%s3479 + $0xe4] sm:$0xf]
    %v3538 = vld [vmem:[%s3479 + $0xe8] sm:$0xf]
    %v3539 = vld [vmem:[%s3479 + $0xec] sm:$0xf]
    %v3540 = vld [vmem:[%s3479 + $0xf0] sm:$0xf]
    %v3541 = vld [vmem:[%s3479 + $0xf4] sm:$0xf]
    %v3542 = vld [vmem:[%s3479 + $0xf8] sm:$0xf]
    %v3543 = vld [vmem:[%s3479 + $0xfc] sm:$0xf]
    %s3544 = scalar_lea.vmem [#allocation7], 6
    %v3545 = vld [vmem:[%s3544] sm:$0x1]
    %v3547 = vlaneseq
    %v3548 = vshrl.u32 %v3547, 7
    %v3549 = vsub.s32 0, %v3548
    %v3550 = vrot.slane %v3545, %v3549
    %v3616 = vunpack.c.l.b16 %v3480
    %v3617 = vunpack.c.l.b16 %v3481
    %v3618 = vunpack.c.l.b16 %v3482
    %v3619 = vunpack.c.l.b16 %v3483
    %v3620 = vunpack.c.l.b16 %v3484
    %v3621 = vunpack.c.l.b16 %v3485
    %v3622 = vunpack.c.l.b16 %v3486
    %v3623 = vunpack.c.l.b16 %v3487
    %v3624 = vunpack.c.l.b16 %v3488
    %v3625 = vunpack.c.l.b16 %v3489
    %v3626 = vunpack.c.l.b16 %v3490
    %v3627 = vunpack.c.l.b16 %v3491
    %v3628 = vunpack.c.l.b16 %v3492
    %v3629 = vunpack.c.l.b16 %v3493
    %v3630 = vunpack.c.l.b16 %v3494
    %v3631 = vunpack.c.l.b16 %v3495
    %v3632 = vunpack.c.l.b16 %v3496
    %v3633 = vunpack.c.l.b16 %v3497
    %v3634 = vunpack.c.l.b16 %v3498
    %v3635 = vunpack.c.l.b16 %v3499
    %v3636 = vunpack.c.l.b16 %v3500
    %v3637 = vunpack.c.l.b16 %v3501
    %v3638 = vunpack.c.l.b16 %v3502
    %v3639 = vunpack.c.l.b16 %v3503
    %v3640 = vunpack.c.l.b16 %v3504
    %v3641 = vunpack.c.l.b16 %v3505
    %v3642 = vunpack.c.l.b16 %v3506
    %v3643 = vunpack.c.l.b16 %v3507
    %v3644 = vunpack.c.l.b16 %v3508
    %v3645 = vunpack.c.l.b16 %v3509
    %v3646 = vunpack.c.l.b16 %v3510
    %v3647 = vunpack.c.l.b16 %v3511
    %v3648 = vunpack.c.l.b16 %v3512
    %v3649 = vunpack.c.l.b16 %v3513
    %v3650 = vunpack.c.l.b16 %v3514
    %v3651 = vunpack.c.l.b16 %v3515
    %v3652 = vunpack.c.l.b16 %v3516
    %v3653 = vunpack.c.l.b16 %v3517
    %v3654 = vunpack.c.l.b16 %v3518
    %v3655 = vunpack.c.l.b16 %v3519
    %v3656 = vunpack.c.l.b16 %v3520
    %v3657 = vunpack.c.l.b16 %v3521
    %v3658 = vunpack.c.l.b16 %v3522
    %v3659 = vunpack.c.l.b16 %v3523
    %v3660 = vunpack.c.l.b16 %v3524
    %v3661 = vunpack.c.l.b16 %v3525
    %v3662 = vunpack.c.l.b16 %v3526
    %v3663 = vunpack.c.l.b16 %v3527
    %v3664 = vunpack.c.l.b16 %v3528
    %v3665 = vunpack.c.l.b16 %v3529
    %v3666 = vunpack.c.l.b16 %v3530
    %v3667 = vunpack.c.l.b16 %v3531
    %v3668 = vunpack.c.l.b16 %v3532
    %v3669 = vunpack.c.l.b16 %v3533
    %v3670 = vunpack.c.l.b16 %v3534
    %v3671 = vunpack.c.l.b16 %v3535
    %v3672 = vunpack.c.l.b16 %v3536
    %v3673 = vunpack.c.l.b16 %v3537
    %v3674 = vunpack.c.l.b16 %v3538
    %v3675 = vunpack.c.l.b16 %v3539
    %v3676 = vunpack.c.l.b16 %v3540
    %v3677 = vunpack.c.l.b16 %v3541
    %v3678 = vunpack.c.l.b16 %v3542
    %v3679 = vunpack.c.l.b16 %v3543
    %v3680 = vpack.c.b16 %v3617, %v3616
    %v3681 = vpack.c.b16 %v3619, %v3618
    %v3682 = vpack.c.b16 %v3621, %v3620
    %v3683 = vpack.c.b16 %v3623, %v3622
    %v3684 = vpack.c.b16 %v3625, %v3624
    %v3685 = vpack.c.b16 %v3627, %v3626
    %v3686 = vpack.c.b16 %v3629, %v3628
    %v3687 = vpack.c.b16 %v3631, %v3630
    %v3688 = vpack.c.b16 %v3633, %v3632
    %v3689 = vpack.c.b16 %v3635, %v3634
    %v3690 = vpack.c.b16 %v3637, %v3636
    %v3691 = vpack.c.b16 %v3639, %v3638
    %v3692 = vpack.c.b16 %v3641, %v3640
    %v3693 = vpack.c.b16 %v3643, %v3642
    %v3694 = vpack.c.b16 %v3645, %v3644
    %v3695 = vpack.c.b16 %v3647, %v3646
    %v3696 = vpack.c.b16 %v3649, %v3648
    %v3697 = vpack.c.b16 %v3651, %v3650
    %v3698 = vpack.c.b16 %v3653, %v3652
    %v3699 = vpack.c.b16 %v3655, %v3654
    %v3700 = vpack.c.b16 %v3657, %v3656
    %v3701 = vpack.c.b16 %v3659, %v3658
    %v3702 = vpack.c.b16 %v3661, %v3660
    %v3703 = vpack.c.b16 %v3663, %v3662
    %v3704 = vpack.c.b16 %v3665, %v3664
    %v3705 = vpack.c.b16 %v3667, %v3666
    %v3706 = vpack.c.b16 %v3669, %v3668
    %v3707 = vpack.c.b16 %v3671, %v3670
    %v3708 = vpack.c.b16 %v3673, %v3672
    %v3709 = vpack.c.b16 %v3675, %v3674
    %v3710 = vpack.c.b16 %v3677, %v3676
    %v3711 = vpack.c.b16 %v3679, %v3678
    %3744 = vmatprep.subr.bf16.mxu0 0
    %3745 = vmatpush1.bf16.msra.mxu0 %v3680
    %3746 = vmatprep.subr.bf16.mxu0 0
    %3747 = vmatpush1.bf16.msra.mxu0 %v3681
    %3748 = vmatprep.subr.bf16.mxu0 0
    %3749 = vmatpush1.bf16.msra.mxu0 %v3682
    %3750 = vmatprep.subr.bf16.mxu0 0
    %3751 = vmatpush1.bf16.msra.mxu0 %v3683
    %3752 = vmatprep.subr.bf16.mxu0 0
    %3753 = vmatpush1.bf16.msra.mxu0 %v3684
    %3754 = vmatprep.subr.bf16.mxu0 0
    %3755 = vmatpush1.bf16.msra.mxu0 %v3685
    %3756 = vmatprep.subr.bf16.mxu0 0
    %3757 = vmatpush1.bf16.msra.mxu0 %v3686
    %3758 = vmatprep.subr.bf16.mxu0 0
    %3759 = vmatpush1.bf16.msra.mxu0 %v3687
    %3760 = vmatprep.subr.bf16.mxu0 0
    %3761 = vmatpush1.bf16.msra.mxu0 %v3688
    %3762 = vmatprep.subr.bf16.mxu0 0
    %3763 = vmatpush1.bf16.msra.mxu0 %v3689
    %3764 = vmatprep.subr.bf16.mxu0 0
    %3765 = vmatpush1.bf16.msra.mxu0 %v3690
    %3766 = vmatprep.subr.bf16.mxu0 0
    %3767 = vmatpush1.bf16.msra.mxu0 %v3691
    %3768 = vmatprep.subr.bf16.mxu0 0
    %3769 = vmatpush1.bf16.msra.mxu0 %v3692
    %3770 = vmatprep.subr.bf16.mxu0 0
    %3771 = vmatpush1.bf16.msra.mxu0 %v3693
    %3772 = vmatprep.subr.bf16.mxu0 0
    %3773 = vmatpush1.bf16.msra.mxu0 %v3694
    %3774 = vmatprep.subr.bf16.mxu0 0
    %3775 = vmatpush1.bf16.msra.mxu0 %v3695
    %3776 = vmatprep.mubr.bf16.mxu0 %v3434
    %3777 = vmatmul.mubr.bf16.gmra.mrb[0].mxu0 %v3431
    %v3778 = vpop.f32.mrb[0].mxu0
    %v3779 = vadd.f32 %v3550, %v3778
    %v3780 = vpop.f32.mrb[0].mxu0
    %v3781 = vpop.f32.mrb[0].mxu0
    %v3782 = vadd.f32 %v3550, %v3781
    %v3783 = vpop.f32.mrb[0].mxu0
    %3784 = vmatprep.mubr.bf16.mxu0 %v3435
    %3785 = vmatmul.mubr.bf16.gmra.mrb[0].mxu0 %v3432
    %v3786 = vpop.f32.mrb[0].mxu0
    %v3787 = vadd.f32 %v3550, %v3786
    %v3788 = vpop.f32.mrb[0].mxu0
    %v3789 = vpop.f32.mrb[0].mxu0
    %v3790 = vadd.f32 %v3550, %v3789
    %v3791 = vpop.f32.mrb[0].mxu0
    %3792 = vmatprep.mubr.bf16.mxu0 %v3436
    %3793 = vmatmul.mubr.bf16.gmra.mrb[0].mxu0 %v3433
    %v3794 = vpop.f32.mrb[0].mxu0
    %v3795 = vadd.f32 %v3550, %v3794
    %v3796 = vpop.f32.mrb[0].mxu0
    %v3797 = vpop.f32.mrb[0].mxu0
    %v3798 = vadd.f32 %v3550, %v3797
    %v3799 = vpop.f32.mrb[0].mxu0
    %3800 = vdwg.mxu0
    %3801 = vmatprep.subr.bf16.mxu0 0
    %3802 = vmatpush1.bf16.msra.mxu0 %v3696
    %3803 = vmatprep.subr.bf16.mxu0 0
    %3804 = vmatpush1.bf16.msra.mxu0 %v3697
    %3805 = vmatprep.subr.bf16.mxu0 0
    %3806 = vmatpush1.bf16.msra.mxu0 %v3698
    %3807 = vmatprep.subr.bf16.mxu0 0
    %3808 = vmatpush1.bf16.msra.mxu0 %v3699
    %3809 = vmatprep.subr.bf16.mxu0 0
    %3810 = vmatpush1.bf16.msra.mxu0 %v3700
    %3811 = vmatprep.subr.bf16.mxu0 0
    %3812 = vmatpush1.bf16.msra.mxu0 %v3701
    %3813 = vmatprep.subr.bf16.mxu0 0
    %3814 = vmatpush1.bf16.msra.mxu0 %v3702
    %3815 = vmatprep.subr.bf16.mxu0 0
    %3816 = vmatpush1.bf16.msra.mxu0 %v3703
    %3817 = vmatprep.subr.bf16.mxu0 0
    %3818 = vmatpush1.bf16.msra.mxu0 %v3704
    %3819 = vmatprep.subr.bf16.mxu0 0
    %3820 = vmatpush1.bf16.msra.mxu0 %v3705
    %3821 = vmatprep.subr.bf16.mxu0 0
    %3822 = vmatpush1.bf16.msra.mxu0 %v3706
    %3823 = vmatprep.subr.bf16.mxu0 0
    %3824 = vmatpush1.bf16.msra.mxu0 %v3707
    %3825 = vmatprep.subr.bf16.mxu0 0
    %3826 = vmatpush1.bf16.msra.mxu0 %v3708
    %3827 = vmatprep.subr.bf16.mxu0 0
    %3828 = vmatpush1.bf16.msra.mxu0 %v3709
    %3829 = vmatprep.subr.bf16.mxu0 0
    %3830 = vmatpush1.bf16.msra.mxu0 %v3710
    %3831 = vmatprep.subr.bf16.mxu0 0
    %3832 = vmatpush1.bf16.msra.mxu0 %v3711
    %3833 = vmatprep.mubr.bf16.mxu0 %v3476
    %3834 = vmatmul.mubr.bf16.gmra.mrb[0].mxu0 %v3455
    %v3835 = vpop.f32.mrb[0].mxu0
    %v3836 = vadd.f32 %v3779, %v3835
    %v3837 = vpop.f32.mrb[0].mxu0
    %v3838 = vpop.f32.mrb[0].mxu0
    %v3839 = vadd.f32 %v3782, %v3838
    %v3840 = vpop.f32.mrb[0].mxu0
    %3841 = vmatprep.mubr.bf16.mxu0 %v3477
    %3842 = vmatmul.mubr.bf16.gmra.mrb[0].mxu0 %v3456
    %v3843 = vpop.f32.mrb[0].mxu0
    %v3844 = vadd.f32 %v3787, %v3843
    %v3845 = vpop.f32.mrb[0].mxu0
    %v3846 = vpop.f32.mrb[0].mxu0
    %v3847 = vadd.f32 %v3790, %v3846
    %v3848 = vpop.f32.mrb[0].mxu0
    %3849 = vmatprep.mubr.bf16.mxu0 %v3478
    %3850 = vmatmul.mubr.bf16.gmra.mrb[0].mxu0 %v3457
    %v3851 = vpop.f32.mrb[0].mxu0
    %v3852 = vadd.f32 %v3795, %v3851
    %v3853 = vpop.f32.mrb[0].mxu0
    %v3854 = vpop.f32.mrb[0].mxu0
    %v3855 = vadd.f32 %v3798, %v3854
    %v3856 = vpop.f32.mrb[0].mxu0
    %3857 = vdwg.mxu0
    %v3858 = vmax.f32 %v3836, 0.0
    %v3859 = vmax.f32 %v3839, 0.0
    %v3860 = vmax.f32 %v3844, 0.0
    %v3861 = vmax.f32 %v3847, 0.0
    %v3862 = vmax.f32 %v3852, 0.0
    %v3863 = vmax.f32 %v3855, 0.0
    %v3864 = vrot.slane %v3858, 7
    %v3865 = vrot.slane %v3859, 7
    %v3866 = vrot.slane %v3860, 7
    %v3867 = vrot.slane %v3861, 7
    %v3868 = vrot.slane %v3862, 7
    %v3869 = vrot.slane %v3863, 7
    %v3870 = vsel %vm571, %v3868, %v3869
    %v3871 = vsel %vm571, %v3867, %v3868
    %v3872 = vsel %vm571, %v3866, %v3867
    %v3873 = vsel %vm571, %v3865, %v3866
    %v3874 = vsel %vm571, %v3864, %v3865
    %v3875 = vsel %vm571, %v3869, %v3864
    %v3876 = vsel %vm584, %v3875, 0.0
    %v3877 = vsel %vm585, %v3874, 0.0
    %v3878 = vsel %vm586, %v3873, 0.0
    %v3879 = vsel %vm587, %v3872, 0.0
    %v3880 = vsel %vm588, %v3871, 0.0
    %v3881 = vsel %vm589, %v3870, 0.0
    %v3882 = vpack.c.bf16 %v3877, %v3876
    %v3883 = vpack.c.bf16 %v3879, %v3878
    %v3884 = vpack.c.bf16 %v3881, %v3880
    %v3885 = vpack.c.bf16 %v3859, %v3858
    %v3886 = vpack.c.bf16 %v3861, %v3860
    %v3887 = vpack.c.bf16 %v3863, %v3862
    %v3888 = vrot.slane %v3858, 1
    %v3889 = vrot.slane %v3859, 1
    %v3890 = vrot.slane %v3860, 1
    %v3891 = vrot.slane %v3861, 1
    %v3892 = vrot.slane %v3862, 1
    %v3893 = vrot.slane %v3863, 1
    %v3894 = vsel %vm608, %v3892, %v3893
    %v3895 = vsel %vm608, %v3891, %v3892
    %v3896 = vsel %vm608, %v3890, %v3891
    %v3897 = vsel %vm608, %v3889, %v3890
    %v3898 = vsel %vm608, %v3888, %v3889
    %v3899 = vsel %vm608, %v3893, %v3888
    %v3900 = vsel %vm621, %v3898, 0.0
    %v3901 = vsel %vm622, %v3897, 0.0
    %v3902 = vsel %vm623, %v3896, 0.0
    %v3903 = vsel %vm624, %v3895, 0.0
    %v3904 = vsel %vm625, %v3894, 0.0
    %v3905 = vsel %vm626, %v3899, 0.0
    %v3906 = vpack.c.bf16 %v3901, %v3900
    %v3907 = vpack.c.bf16 %v3903, %v3902
    %v3908 = vpack.c.bf16 %v3905, %v3904
    %v3909 = vrot.slane %v3858, 2
    %v3910 = vrot.slane %v3859, 2
    %v3911 = vrot.slane %v3860, 2
    %v3912 = vrot.slane %v3861, 2
    %v3913 = vrot.slane %v3862, 2
    %v3914 = vrot.slane %v3863, 2
    %v3915 = vsel %vm642, %v3913, %v3914
    %v3916 = vsel %vm642, %v3912, %v3913
    %v3917 = vsel %vm642, %v3911, %v3912
    %v3918 = vsel %vm642, %v3910, %v3911
    %v3919 = vsel %vm642, %v3909, %v3910
    %v3920 = vsel %vm642, %v3914, %v3909
    %v3921 = vsel %vm655, %v3919, 0.0
    %v3922 = vsel %vm656, %v3918, 0.0
    %v3923 = vsel %vm657, %v3917, 0.0
    %v3924 = vsel %vm658, %v3916, 0.0
    %v3925 = vsel %vm659, %v3915, 0.0
    %v3926 = vsel %vm660, %v3920, 0.0
    %v3927 = vpack.c.bf16 %v3922, %v3921
    %v3928 = vpack.c.bf16 %v3924, %v3923
    %v3929 = vpack.c.bf16 %v3926, %v3925
    %s3930 = scalar_lea.vmem [#allocation5], 1792
    %v3931 = vld [vmem:[%s3930] sm:$0xf]
    %v3932 = vld [vmem:[%s3930 + $0x4] sm:$0xf]
    %v3933 = vld [vmem:[%s3930 + $0x8] sm:$0xf]
    %v3934 = vld [vmem:[%s3930 + $0xc] sm:$0xf]
    %v3935 = vld [vmem:[%s3930 + $0x10] sm:$0xf]
    %v3936 = vld [vmem:[%s3930 + $0x14] sm:$0xf]
    %v3937 = vld [vmem:[%s3930 + $0x18] sm:$0xf]
    %v3938 = vld [vmem:[%s3930 + $0x1c] sm:$0xf]
    %v3939 = vld [vmem:[%s3930 + $0x20] sm:$0xf]
    %v3940 = vld [vmem:[%s3930 + $0x24] sm:$0xf]
    %v3941 = vld [vmem:[%s3930 + $0x28] sm:$0xf]
    %v3942 = vld [vmem:[%s3930 + $0x2c] sm:$0xf]
    %v3943 = vld [vmem:[%s3930 + $0x30] sm:$0xf]
    %v3944 = vld [vmem:[%s3930 + $0x34] sm:$0xf]
    %v3945 = vld [vmem:[%s3930 + $0x38] sm:$0xf]
    %v3946 = vld [vmem:[%s3930 + $0x3c] sm:$0xf]
    %v3947 = vld [vmem:[%s3930 + $0x40] sm:$0xf]
    %v3948 = vld [vmem:[%s3930 + $0x44] sm:$0xf]
    %v3949 = vld [vmem:[%s3930 + $0x48] sm:$0xf]
    %v3950 = vld [vmem:[%s3930 + $0x4c] sm:$0xf]
    %v3951 = vld [vmem:[%s3930 + $0x50] sm:$0xf]
    %v3952 = vld [vmem:[%s3930 + $0x54] sm:$0xf]
    %v3953 = vld [vmem:[%s3930 + $0x58] sm:$0xf]
    %v3954 = vld [vmem:[%s3930 + $0x5c] sm:$0xf]
    %v3955 = vld [vmem:[%s3930 + $0x60] sm:$0xf]
    %v3956 = vld [vmem:[%s3930 + $0x64] sm:$0xf]
    %v3957 = vld [vmem:[%s3930 + $0x68] sm:$0xf]
    %v3958 = vld [vmem:[%s3930 + $0x6c] sm:$0xf]
    %v3959 = vld [vmem:[%s3930 + $0x70] sm:$0xf]
    %v3960 = vld [vmem:[%s3930 + $0x74] sm:$0xf]
    %v3961 = vld [vmem:[%s3930 + $0x78] sm:$0xf]
    %v3962 = vld [vmem:[%s3930 + $0x7c] sm:$0xf]
    %v3963 = vld [vmem:[%s3930 + $0x80] sm:$0xf]
    %v3964 = vld [vmem:[%s3930 + $0x84] sm:$0xf]
    %v3965 = vld [vmem:[%s3930 + $0x88] sm:$0xf]
    %v3966 = vld [vmem:[%s3930 + $0x8c] sm:$0xf]
    %v3967 = vld [vmem:[%s3930 + $0x90] sm:$0xf]
    %v3968 = vld [vmem:[%s3930 + $0x94] sm:$0xf]
    %v3969 = vld [vmem:[%s3930 + $0x98] sm:$0xf]
    %v3970 = vld [vmem:[%s3930 + $0x9c] sm:$0xf]
    %v3971 = vld [vmem:[%s3930 + $0xa0] sm:$0xf]
    %v3972 = vld [vmem:[%s3930 + $0xa4] sm:$0xf]
    %v3973 = vld [vmem:[%s3930 + $0xa8] sm:$0xf]
    %v3974 = vld [vmem:[%s3930 + $0xac] sm:$0xf]
    %v3975 = vld [vmem:[%s3930 + $0xb0] sm:$0xf]
    %v3976 = vld [vmem:[%s3930 + $0xb4] sm:$0xf]
    %v3977 = vld [vmem:[%s3930 + $0xb8] sm:$0xf]
    %v3978 = vld [vmem:[%s3930 + $0xbc] sm:$0xf]
    %v3979 = vld [vmem:[%s3930 + $0xc0] sm:$0xf]
    %v3980 = vld [vmem:[%s3930 + $0xc4] sm:$0xf]
    %v3981 = vld [vmem:[%s3930 + $0xc8] sm:$0xf]
    %v3982 = vld [vmem:[%s3930 + $0xcc] sm:$0xf]
    %v3983 = vld [vmem:[%s3930 + $0xd0] sm:$0xf]
    %v3984 = vld [vmem:[%s3930 + $0xd4] sm:$0xf]
    %v3985 = vld [vmem:[%s3930 + $0xd8] sm:$0xf]
    %v3986 = vld [vmem:[%s3930 + $0xdc] sm:$0xf]
    %v3987 = vld [vmem:[%s3930 + $0xe0] sm:$0xf]
    %v3988 = vld [vmem:[%s3930 + $0xe4] sm:$0xf]
    %v3989 = vld [vmem:[%s3930 + $0xe8] sm:$0xf]
    %v3990 = vld [vmem:[%s3930 + $0xec] sm:$0xf]
    %v3991 = vld [vmem:[%s3930 + $0xf0] sm:$0xf]
    %v3992 = vld [vmem:[%s3930 + $0xf4] sm:$0xf]
    %v3993 = vld [vmem:[%s3930 + $0xf8] sm:$0xf]
    %v3994 = vld [vmem:[%s3930 + $0xfc] sm:$0xf]
    %s3995 = scalar_lea.vmem [#allocation7], 7
    %v3996 = vld [vmem:[%s3995] sm:$0x1]
    %v3998 = vlaneseq
    %v3999 = vshrl.u32 %v3998, 7
    %v4000 = vsub.s32 0, %v3999
    %v4001 = vrot.slane %v3996, %v4000
    %v4067 = vunpack.c.l.b16 %v3931
    %v4068 = vunpack.c.l.b16 %v3932
    %v4069 = vunpack.c.l.b16 %v3933
    %v4070 = vunpack.c.l.b16 %v3934
    %v4071 = vunpack.c.l.b16 %v3935
    %v4072 = vunpack.c.l.b16 %v3936
    %v4073 = vunpack.c.l.b16 %v3937
    %v4074 = vunpack.c.l.b16 %v3938
    %v4075 = vunpack.c.l.b16 %v3939
    %v4076 = vunpack.c.l.b16 %v3940
    %v4077 = vunpack.c.l.b16 %v3941
    %v4078 = vunpack.c.l.b16 %v3942
    %v4079 = vunpack.c.l.b16 %v3943
    %v4080 = vunpack.c.l.b16 %v3944
    %v4081 = vunpack.c.l.b16 %v3945
    %v4082 = vunpack.c.l.b16 %v3946
    %v4083 = vunpack.c.l.b16 %v3947
    %v4084 = vunpack.c.l.b16 %v3948
    %v4085 = vunpack.c.l.b16 %v3949
    %v4086 = vunpack.c.l.b16 %v3950
    %v4087 = vunpack.c.l.b16 %v3951
    %v4088 = vunpack.c.l.b16 %v3952
    %v4089 = vunpack.c.l.b16 %v3953
    %v4090 = vunpack.c.l.b16 %v3954
    %v4091 = vunpack.c.l.b16 %v3955
    %v4092 = vunpack.c.l.b16 %v3956
    %v4093 = vunpack.c.l.b16 %v3957
    %v4094 = vunpack.c.l.b16 %v3958
    %v4095 = vunpack.c.l.b16 %v3959
    %v4096 = vunpack.c.l.b16 %v3960
    %v4097 = vunpack.c.l.b16 %v3961
    %v4098 = vunpack.c.l.b16 %v3962
    %v4099 = vunpack.c.l.b16 %v3963
    %v4100 = vunpack.c.l.b16 %v3964
    %v4101 = vunpack.c.l.b16 %v3965
    %v4102 = vunpack.c.l.b16 %v3966
    %v4103 = vunpack.c.l.b16 %v3967
    %v4104 = vunpack.c.l.b16 %v3968
    %v4105 = vunpack.c.l.b16 %v3969
    %v4106 = vunpack.c.l.b16 %v3970
    %v4107 = vunpack.c.l.b16 %v3971
    %v4108 = vunpack.c.l.b16 %v3972
    %v4109 = vunpack.c.l.b16 %v3973
    %v4110 = vunpack.c.l.b16 %v3974
    %v4111 = vunpack.c.l.b16 %v3975
    %v4112 = vunpack.c.l.b16 %v3976
    %v4113 = vunpack.c.l.b16 %v3977
    %v4114 = vunpack.c.l.b16 %v3978
    %v4115 = vunpack.c.l.b16 %v3979
    %v4116 = vunpack.c.l.b16 %v3980
    %v4117 = vunpack.c.l.b16 %v3981
    %v4118 = vunpack.c.l.b16 %v3982
    %v4119 = vunpack.c.l.b16 %v3983
    %v4120 = vunpack.c.l.b16 %v3984
    %v4121 = vunpack.c.l.b16 %v3985
    %v4122 = vunpack.c.l.b16 %v3986
    %v4123 = vunpack.c.l.b16 %v3987
    %v4124 = vunpack.c.l.b16 %v3988
    %v4125 = vunpack.c.l.b16 %v3989
    %v4126 = vunpack.c.l.b16 %v3990
    %v4127 = vunpack.c.l.b16 %v3991
    %v4128 = vunpack.c.l.b16 %v3992
    %v4129 = vunpack.c.l.b16 %v3993
    %v4130 = vunpack.c.l.b16 %v3994
    %v4131 = vpack.c.b16 %v4068, %v4067
    %v4132 = vpack.c.b16 %v4070, %v4069
    %v4133 = vpack.c.b16 %v4072, %v4071
    %v4134 = vpack.c.b16 %v4074, %v4073
    %v4135 = vpack.c.b16 %v4076, %v4075
    %v4136 = vpack.c.b16 %v4078, %v4077
    %v4137 = vpack.c.b16 %v4080, %v4079
    %v4138 = vpack.c.b16 %v4082, %v4081
    %v4139 = vpack.c.b16 %v4084, %v4083
    %v4140 = vpack.c.b16 %v4086, %v4085
    %v4141 = vpack.c.b16 %v4088, %v4087
    %v4142 = vpack.c.b16 %v4090, %v4089
    %v4143 = vpack.c.b16 %v4092, %v4091
    %v4144 = vpack.c.b16 %v4094, %v4093
    %v4145 = vpack.c.b16 %v4096, %v4095
    %v4146 = vpack.c.b16 %v4098, %v4097
    %v4147 = vpack.c.b16 %v4100, %v4099
    %v4148 = vpack.c.b16 %v4102, %v4101
    %v4149 = vpack.c.b16 %v4104, %v4103
    %v4150 = vpack.c.b16 %v4106, %v4105
    %v4151 = vpack.c.b16 %v4108, %v4107
    %v4152 = vpack.c.b16 %v4110, %v4109
    %v4153 = vpack.c.b16 %v4112, %v4111
    %v4154 = vpack.c.b16 %v4114, %v4113
    %v4155 = vpack.c.b16 %v4116, %v4115
    %v4156 = vpack.c.b16 %v4118, %v4117
    %v4157 = vpack.c.b16 %v4120, %v4119
    %v4158 = vpack.c.b16 %v4122, %v4121
    %v4159 = vpack.c.b16 %v4124, %v4123
    %v4160 = vpack.c.b16 %v4126, %v4125
    %v4161 = vpack.c.b16 %v4128, %v4127
    %v4162 = vpack.c.b16 %v4130, %v4129
    %4195 = vmatprep.subr.bf16.mxu0 0
    %4196 = vmatpush1.bf16.msra.mxu0 %v4131
    %4197 = vmatprep.subr.bf16.mxu0 0
    %4198 = vmatpush1.bf16.msra.mxu0 %v4132
    %4199 = vmatprep.subr.bf16.mxu0 0
    %4200 = vmatpush1.bf16.msra.mxu0 %v4133
    %4201 = vmatprep.subr.bf16.mxu0 0
    %4202 = vmatpush1.bf16.msra.mxu0 %v4134
    %4203 = vmatprep.subr.bf16.mxu0 0
    %4204 = vmatpush1.bf16.msra.mxu0 %v4135
    %4205 = vmatprep.subr.bf16.mxu0 0
    %4206 = vmatpush1.bf16.msra.mxu0 %v4136
    %4207 = vmatprep.subr.bf16.mxu0 0
    %4208 = vmatpush1.bf16.msra.mxu0 %v4137
    %4209 = vmatprep.subr.bf16.mxu0 0
    %4210 = vmatpush1.bf16.msra.mxu0 %v4138
    %4211 = vmatprep.subr.bf16.mxu0 0
    %4212 = vmatpush1.bf16.msra.mxu0 %v4139
    %4213 = vmatprep.subr.bf16.mxu0 0
    %4214 = vmatpush1.bf16.msra.mxu0 %v4140
    %4215 = vmatprep.subr.bf16.mxu0 0
    %4216 = vmatpush1.bf16.msra.mxu0 %v4141
    %4217 = vmatprep.subr.bf16.mxu0 0
    %4218 = vmatpush1.bf16.msra.mxu0 %v4142
    %4219 = vmatprep.subr.bf16.mxu0 0
    %4220 = vmatpush1.bf16.msra.mxu0 %v4143
    %4221 = vmatprep.subr.bf16.mxu0 0
    %4222 = vmatpush1.bf16.msra.mxu0 %v4144
    %4223 = vmatprep.subr.bf16.mxu0 0
    %4224 = vmatpush1.bf16.msra.mxu0 %v4145
    %4225 = vmatprep.subr.bf16.mxu0 0
    %4226 = vmatpush1.bf16.msra.mxu0 %v4146
    %4227 = vmatprep.mubr.bf16.mxu0 %v3885
    %4228 = vmatmul.mubr.bf16.gmra.mrb[0].mxu0 %v3882
    %v4229 = vpop.f32.mrb[0].mxu0
    %v4230 = vadd.f32 %v4001, %v4229
    %v4231 = vpop.f32.mrb[0].mxu0
    %v4232 = vpop.f32.mrb[0].mxu0
    %v4233 = vadd.f32 %v4001, %v4232
    %v4234 = vpop.f32.mrb[0].mxu0
    %4235 = vmatprep.mubr.bf16.mxu0 %v3886
    %4236 = vmatmul.mubr.bf16.gmra.mrb[0].mxu0 %v3883
    %v4237 = vpop.f32.mrb[0].mxu0
    %v4238 = vadd.f32 %v4001, %v4237
    %v4239 = vpop.f32.mrb[0].mxu0
    %v4240 = vpop.f32.mrb[0].mxu0
    %v4241 = vadd.f32 %v4001, %v4240
    %v4242 = vpop.f32.mrb[0].mxu0
    %4243 = vmatprep.mubr.bf16.mxu0 %v3887
    %4244 = vmatmul.mubr.bf16.gmra.mrb[0].mxu0 %v3884
    %v4245 = vpop.f32.mrb[0].mxu0
    %v4246 = vadd.f32 %v4001, %v4245
    %v4247 = vpop.f32.mrb[0].mxu0
    %v4248 = vpop.f32.mrb[0].mxu0
    %v4249 = vadd.f32 %v4001, %v4248
    %v4250 = vpop.f32.mrb[0].mxu0
    %4251 = vdwg.mxu0
    %4252 = vmatprep.subr.bf16.mxu0 0
    %4253 = vmatpush1.bf16.msra.mxu0 %v4147
    %4254 = vmatprep.subr.bf16.mxu0 0
    %4255 = vmatpush1.bf16.msra.mxu0 %v4148
    %4256 = vmatprep.subr.bf16.mxu0 0
    %4257 = vmatpush1.bf16.msra.mxu0 %v4149
    %4258 = vmatprep.subr.bf16.mxu0 0
    %4259 = vmatpush1.bf16.msra.mxu0 %v4150
    %4260 = vmatprep.subr.bf16.mxu0 0
    %4261 = vmatpush1.bf16.msra.mxu0 %v4151
    %4262 = vmatprep.subr.bf16.mxu0 0
    %4263 = vmatpush1.bf16.msra.mxu0 %v4152
    %4264 = vmatprep.subr.bf16.mxu0 0
    %4265 = vmatpush1.bf16.msra.mxu0 %v4153
    %4266 = vmatprep.subr.bf16.mxu0 0
    %4267 = vmatpush1.bf16.msra.mxu0 %v4154
    %4268 = vmatprep.subr.bf16.mxu0 0
    %4269 = vmatpush1.bf16.msra.mxu0 %v4155
    %4270 = vmatprep.subr.bf16.mxu0 0
    %4271 = vmatpush1.bf16.msra.mxu0 %v4156
    %4272 = vmatprep.subr.bf16.mxu0 0
    %4273 = vmatpush1.bf16.msra.mxu0 %v4157
    %4274 = vmatprep.subr.bf16.mxu0 0
    %4275 = vmatpush1.bf16.msra.mxu0 %v4158
    %4276 = vmatprep.subr.bf16.mxu0 0
    %4277 = vmatpush1.bf16.msra.mxu0 %v4159
    %4278 = vmatprep.subr.bf16.mxu0 0
    %4279 = vmatpush1.bf16.msra.mxu0 %v4160
    %4280 = vmatprep.subr.bf16.mxu0 0
    %4281 = vmatpush1.bf16.msra.mxu0 %v4161
    %4282 = vmatprep.subr.bf16.mxu0 0
    %4283 = vmatpush1.bf16.msra.mxu0 %v4162
    %4284 = vmatprep.mubr.bf16.mxu0 %v3927
    %4285 = vmatmul.mubr.bf16.gmra.mrb[0].mxu0 %v3906
    %v4286 = vpop.f32.mrb[0].mxu0
    %v4287 = vadd.f32 %v4230, %v4286
    %v4288 = vpop.f32.mrb[0].mxu0
    %v4289 = vpop.f32.mrb[0].mxu0
    %v4290 = vadd.f32 %v4233, %v4289
    %v4291 = vpop.f32.mrb[0].mxu0
    %4292 = vmatprep.mubr.bf16.mxu0 %v3928
    %4293 = vmatmul.mubr.bf16.gmra.mrb[0].mxu0 %v3907
    %v4294 = vpop.f32.mrb[0].mxu0
    %v4295 = vadd.f32 %v4238, %v4294
    %v4296 = vpop.f32.mrb[0].mxu0
    %v4297 = vpop.f32.mrb[0].mxu0
    %v4298 = vadd.f32 %v4241, %v4297
    %v4299 = vpop.f32.mrb[0].mxu0
    %4300 = vmatprep.mubr.bf16.mxu0 %v3929
    %4301 = vmatmul.mubr.bf16.gmra.mrb[0].mxu0 %v3908
    %v4302 = vpop.f32.mrb[0].mxu0
    %v4303 = vadd.f32 %v4246, %v4302
    %v4304 = vpop.f32.mrb[0].mxu0
    %v4305 = vpop.f32.mrb[0].mxu0
    %v4306 = vadd.f32 %v4249, %v4305
    %v4307 = vpop.f32.mrb[0].mxu0
    %4308 = vdwg.mxu0
    %v4309 = vmax.f32 %v4287, 0.0
    %v4310 = vmax.f32 %v4290, 0.0
    %v4311 = vmax.f32 %v4295, 0.0
    %v4312 = vmax.f32 %v4298, 0.0
    %v4313 = vmax.f32 %v4303, 0.0
    %v4314 = vmax.f32 %v4306, 0.0
    %v4315 = vadd.f32 %v3407, %v4309
    %v4316 = vadd.f32 %v3408, %v4310
    %v4317 = vadd.f32 %v3409, %v4311
    %v4318 = vadd.f32 %v3410, %v4312
    %v4319 = vadd.f32 %v3411, %v4313
    %v4320 = vadd.f32 %v3412, %v4314
    %v4321 = vpack.c.bf16 %v4316, %v4315
    %v4322 = vpack.c.bf16 %v4318, %v4317
    %v4323 = vpack.c.bf16 %v4320, %v4319
    %v4324 = vld [vmem:[%s5] sm:$0xf]
    %v4325 = vld [vmem:[%s5 + $0x4] sm:$0xf]
    %v4326 = vld [vmem:[%s5 + $0x8] sm:$0xf]
    %v4327 = vld [vmem:[%s5 + $0xc] sm:$0xf]
    %v4328 = vld [vmem:[%s5 + $0x10] sm:$0xf]
    %v4329 = vld [vmem:[%s5 + $0x14] sm:$0xf]
    %v4330 = vld [vmem:[%s5 + $0x18] sm:$0xf]
    %v4331 = vld [vmem:[%s5 + $0x1c] sm:$0xf]
    %v4332 = vld [vmem:[%s5 + $0x20] sm:$0xf]
    %v4333 = vld [vmem:[%s5 + $0x24] sm:$0xf]
    %v4334 = vld [vmem:[%s5 + $0x28] sm:$0xf]
    %v4335 = vld [vmem:[%s5 + $0x2c] sm:$0xf]
    %v4336 = vld [vmem:[%s5 + $0x30] sm:$0xf]
    %v4337 = vld [vmem:[%s5 + $0x34] sm:$0xf]
    %v4338 = vld [vmem:[%s5 + $0x38] sm:$0xf]
    %v4339 = vld [vmem:[%s5 + $0x3c] sm:$0xf]
    %v4340 = vld [vmem:[%s6] sm:$0x1]
    %v4342 = vlaneseq
    %v4343 = vshrl.u32 %v4342, 7
    %v4344 = vsub.s32 0, %v4343
    %v4345 = vrot.slane %v4340, %v4344
    %v4363 = vunpack.c.l.b16 %v4324
    %v4364 = vunpack.c.l.b16 %v4325
    %v4365 = vunpack.c.l.b16 %v4326
    %v4366 = vunpack.c.l.b16 %v4327
    %v4367 = vunpack.c.l.b16 %v4328
    %v4368 = vunpack.c.l.b16 %v4329
    %v4369 = vunpack.c.l.b16 %v4330
    %v4370 = vunpack.c.l.b16 %v4331
    %v4371 = vunpack.c.l.b16 %v4332
    %v4372 = vunpack.c.l.b16 %v4333
    %v4373 = vunpack.c.l.b16 %v4334
    %v4374 = vunpack.c.l.b16 %v4335
    %v4375 = vunpack.c.l.b16 %v4336
    %v4376 = vunpack.c.l.b16 %v4337
    %v4377 = vunpack.c.l.b16 %v4338
    %v4378 = vunpack.c.l.b16 %v4339
    %v4379 = vpack.c.b16 %v4364, %v4363
    %v4380 = vpack.c.b16 %v4366, %v4365
    %v4381 = vpack.c.b16 %v4368, %v4367
    %v4382 = vpack.c.b16 %v4370, %v4369
    %v4383 = vpack.c.b16 %v4372, %v4371
    %v4384 = vpack.c.b16 %v4374, %v4373
    %v4385 = vpack.c.b16 %v4376, %v4375
    %v4386 = vpack.c.b16 %v4378, %v4377
    %4395 = vmatprep.subr.bf16.mxu0 0
    %4396 = vmatpush1.bf16.msra.mxu0 %v4379
    %4397 = vmatprep.subr.bf16.mxu0 0
    %4398 = vmatpush1.bf16.msra.mxu0 %v4380
    %4399 = vmatprep.subr.bf16.mxu0 0
    %4400 = vmatpush1.bf16.msra.mxu0 %v4381
    %4401 = vmatprep.subr.bf16.mxu0 0
    %4402 = vmatpush1.bf16.msra.mxu0 %v4382
    %4403 = vmatprep.subr.bf16.mxu0 0
    %4404 = vmatpush1.bf16.msra.mxu0 %v4383
    %4405 = vmatprep.subr.bf16.mxu0 0
    %4406 = vmatpush1.bf16.msra.mxu0 %v4384
    %4407 = vmatprep.subr.bf16.mxu0 0
    %4408 = vmatpush1.bf16.msra.mxu0 %v4385
    %4409 = vmatprep.subr.bf16.mxu0 0
    %4410 = vmatpush1.bf16.msra.mxu0 %v4386
    %4411 = vmatprep.subr.bf16.mxu0 0
    %4412 = vmatpush1.bf16.msra.mxu0 0
    %4413 = vmatprep.subr.bf16.mxu0 0
    %4414 = vmatpush1.bf16.msra.mxu0 0
    %4415 = vmatprep.subr.bf16.mxu0 0
    %4416 = vmatpush1.bf16.msra.mxu0 0
    %4417 = vmatprep.subr.bf16.mxu0 0
    %4418 = vmatpush1.bf16.msra.mxu0 0
    %4419 = vmatprep.subr.bf16.mxu0 0
    %4420 = vmatpush1.bf16.msra.mxu0 0
    %4421 = vmatprep.subr.bf16.mxu0 0
    %4422 = vmatpush1.bf16.msra.mxu0 0
    %4423 = vmatprep.subr.bf16.mxu0 0
    %4424 = vmatpush1.bf16.msra.mxu0 0
    %4425 = vmatprep.subr.bf16.mxu0 0
    %4426 = vmatpush1.bf16.msra.mxu0 0
    %4427 = vmatprep.mubr.bf16.mxu0 0
    %4428 = vmatmul.mubr.bf16.gmra.mrb[0].mxu0 %v4321
    %v4429 = vpop.f32.mrb[0].mxu0
    %v4430 = vadd.f32 %v4345, %v4429
    %v4431 = vpop.f32.mrb[0].mxu0
    %v4432 = vpop.f32.mrb[0].mxu0
    %v4433 = vadd.f32 %v4345, %v4432
    %v4434 = vpop.f32.mrb[0].mxu0
    %4435 = vmatprep.mubr.bf16.mxu0 0
    %4436 = vmatmul.mubr.bf16.gmra.mrb[0].mxu0 %v4322
    %v4437 = vpop.f32.mrb[0].mxu0
    %v4438 = vadd.f32 %v4345, %v4437
    %v4439 = vpop.f32.mrb[0].mxu0
    %v4440 = vpop.f32.mrb[0].mxu0
    %v4441 = vadd.f32 %v4345, %v4440
    %v4442 = vpop.f32.mrb[0].mxu0
    %4443 = vmatprep.mubr.bf16.mxu0 0
    %4444 = vmatmul.mubr.bf16.gmra.mrb[0].mxu0 %v4323
    %v4445 = vpop.f32.mrb[0].mxu0
    %v4446 = vadd.f32 %v4345, %v4445
    %v4447 = vpop.f32.mrb[0].mxu0
    %v4448 = vpop.f32.mrb[0].mxu0
    %v4449 = vadd.f32 %v4345, %v4448
    %v4450 = vpop.f32.mrb[0].mxu0
    %4451 = vdwg.mxu0
    %v4452 = vadd.f32 %v4430, %v264
    %v4453 = vadd.f32 %v4433, %v265
    %v4454 = vadd.f32 %v4438, %v266
    %v4455 = vadd.f32 %v4441, %v267
    %v4456 = vadd.f32 %v4446, %v268
    %v4457 = vadd.f32 %v4449, %v269
    %v4458 = vmax.f32 %v4452, 0.0
    %v4459 = vmax.f32 %v4453, 0.0
    %v4460 = vmax.f32 %v4454, 0.0
    %v4461 = vmax.f32 %v4455, 0.0
    %v4462 = vmax.f32 %v4456, 0.0
    %v4463 = vmax.f32 %v4457, 0.0
    %v4464 = vpack.c.bf16 %v4459, %v4458
    %v4465 = vpack.c.bf16 %v4461, %v4460
    %v4466 = vpack.c.bf16 %v4463, %v4462
    %v4467 = vld [vmem:[#allocation8] sm:$0xf]
    %v4468 = vld [vmem:[#allocation8 + $0x4] sm:$0xf]
    %v4469 = vld [vmem:[#allocation8 + $0x8] sm:$0xf]
    %v4470 = vld [vmem:[#allocation8 + $0xc] sm:$0xf]
    %v4471 = vld [vmem:[#allocation8 + $0x10] sm:$0xf]
    %v4472 = vld [vmem:[#allocation8 + $0x14] sm:$0xf]
    %v4473 = vld [vmem:[#allocation8 + $0x18] sm:$0xf]
    %v4474 = vld [vmem:[#allocation8 + $0x1c] sm:$0xf]
    %v4475 = vld [vmem:[#allocation8 + $0x20] sm:$0xf]
    %v4476 = vld [vmem:[#allocation8 + $0x24] sm:$0xf]
    %v4477 = vld [vmem:[#allocation8 + $0x28] sm:$0xf]
    %v4478 = vld [vmem:[#allocation8 + $0x2c] sm:$0xf]
    %v4479 = vld [vmem:[#allocation8 + $0x30] sm:$0xf]
    %v4480 = vld [vmem:[#allocation8 + $0x34] sm:$0xf]
    %v4481 = vld [vmem:[#allocation8 + $0x38] sm:$0xf]
    %v4482 = vld [vmem:[#allocation8 + $0x3c] sm:$0xf]
    %v4483 = vld [vmem:[%s8] sm:$0x1]
    %v4485 = vlaneseq
    %v4486 = vshrl.u32 %v4485, 7
    %v4487 = vsub.s32 0, %v4486
    %v4488 = vrot.slane %v4483, %v4487
    %v4506 = vunpack.c.l.b16 %v4467
    %v4507 = vunpack.c.l.b16 %v4468
    %v4508 = vunpack.c.l.b16 %v4469
    %v4509 = vunpack.c.l.b16 %v4470
    %v4510 = vunpack.c.l.b16 %v4471
    %v4511 = vunpack.c.l.b16 %v4472
    %v4512 = vunpack.c.l.b16 %v4473
    %v4513 = vunpack.c.l.b16 %v4474
    %v4514 = vunpack.c.l.b16 %v4475
    %v4515 = vunpack.c.l.b16 %v4476
    %v4516 = vunpack.c.l.b16 %v4477
    %v4517 = vunpack.c.l.b16 %v4478
    %v4518 = vunpack.c.l.b16 %v4479
    %v4519 = vunpack.c.l.b16 %v4480
    %v4520 = vunpack.c.l.b16 %v4481
    %v4521 = vunpack.c.l.b16 %v4482
    %v4522 = vpack.c.b16 %v4507, %v4506
    %v4523 = vpack.c.b16 %v4509, %v4508
    %v4524 = vpack.c.b16 %v4511, %v4510
    %v4525 = vpack.c.b16 %v4513, %v4512
    %v4526 = vpack.c.b16 %v4515, %v4514
    %v4527 = vpack.c.b16 %v4517, %v4516
    %v4528 = vpack.c.b16 %v4519, %v4518
    %v4529 = vpack.c.b16 %v4521, %v4520
    %4538 = vmatprep.subr.bf16.mxu0 0
    %4539 = vmatpush1.bf16.msra.mxu0 %v4522
    %4540 = vmatprep.subr.bf16.mxu0 0
    %4541 = vmatpush1.bf16.msra.mxu0 %v4523
    %4542 = vmatprep.subr.bf16.mxu0 0
    %4543 = vmatpush1.bf16.msra.mxu0 %v4524
    %4544 = vmatprep.subr.bf16.mxu0 0
    %4545 = vmatpush1.bf16.msra.mxu0 %v4525
    %4546 = vmatprep.subr.bf16.mxu0 0
    %4547 = vmatpush1.bf16.msra.mxu0 %v4526
    %4548 = vmatprep.subr.bf16.mxu0 0
    %4549 = vmatpush1.bf16.msra.mxu0 %v4527
    %4550 = vmatprep.subr.bf16.mxu0 0
    %4551 = vmatpush1.bf16.msra.mxu0 %v4528
    %4552 = vmatprep.subr.bf16.mxu0 0
    %4553 = vmatpush1.bf16.msra.mxu0 %v4529
    %4554 = vmatprep.subr.bf16.mxu0 0
    %4555 = vmatpush1.bf16.msra.mxu0 0
    %4556 = vmatprep.subr.bf16.mxu0 0
    %4557 = vmatpush1.bf16.msra.mxu0 0
    %4558 = vmatprep.subr.bf16.mxu0 0
    %4559 = vmatpush1.bf16.msra.mxu0 0
    %4560 = vmatprep.subr.bf16.mxu0 0
    %4561 = vmatpush1.bf16.msra.mxu0 0
    %4562 = vmatprep.subr.bf16.mxu0 0
    %4563 = vmatpush1.bf16.msra.mxu0 0
    %4564 = vmatprep.subr.bf16.mxu0 0
    %4565 = vmatpush1.bf16.msra.mxu0 0
    %4566 = vmatprep.subr.bf16.mxu0 0
    %4567 = vmatpush1.bf16.msra.mxu0 0
    %4568 = vmatprep.subr.bf16.mxu0 0
    %4569 = vmatpush1.bf16.msra.mxu0 0
    %4570 = vmatprep.mubr.bf16.mxu0 0
    %4571 = vmatmul.mubr.bf16.gmra.mrb[0].mxu0 %v4464
    %v4572 = vpop.f32.mrb[0].mxu0
    %v4573 = vadd.f32 %v4488, %v4572
    %v4574 = vpop.f32.mrb[0].mxu0
    %v4575 = vpop.f32.mrb[0].mxu0
    %v4576 = vadd.f32 %v4488, %v4575
    %v4577 = vpop.f32.mrb[0].mxu0
    %4578 = vmatprep.mubr.bf16.mxu0 0
    %4579 = vmatmul.mubr.bf16.gmra.mrb[0].mxu0 %v4465
    %v4580 = vpop.f32.mrb[0].mxu0
    %v4581 = vadd.f32 %v4488, %v4580
    %v4582 = vpop.f32.mrb[0].mxu0
    %v4583 = vpop.f32.mrb[0].mxu0
    %v4584 = vadd.f32 %v4488, %v4583
    %v4585 = vpop.f32.mrb[0].mxu0
    %4586 = vmatprep.mubr.bf16.mxu0 0
    %4587 = vmatmul.mubr.bf16.gmra.mrb[0].mxu0 %v4466
    %v4588 = vpop.f32.mrb[0].mxu0
    %v4589 = vadd.f32 %v4488, %v4588
    %v4590 = vpop.f32.mrb[0].mxu0
    %v4591 = vpop.f32.mrb[0].mxu0
    %v4592 = vadd.f32 %v4488, %v4591
    %v4593 = vpop.f32.mrb[0].mxu0
    %4594 = vdwg.mxu0
    %4595 = vst [vmem:[#allocation10] sm:$0xff] %v4573
    %4596 = vst [vmem:[#allocation10 + $0x8] sm:$0xff] %v4576
    %4597 = vst [vmem:[#allocation10 + $0x10] sm:$0xff] %v4581
    %4598 = vst [vmem:[#allocation10 + $0x18] sm:$0xff] %v4584
    %4599 = vst [vmem:[#allocation10 + $0x20] sm:$0xff] %v4589
    %4600 = vst [vmem:[#allocation10 + $0x28] sm:$0xff] %v4592
    // Predicated region
    $region54: #{tpu_custom_call.1} parent=1 // pred_check
      _
    $region55: #{tpu_custom_call.1} parent=1 // pred_check_branch
      %4602 = sbr.rel (0) target = $region57
    $region56: #{tpu_custom_call.1} parent=1 // pred_region
      %s4604 = ssub.s32 768, 768
      %4605 = vsyncadd [#allocation4], %s4604
      %s4606 = sshll.u32 [#allocation10], 4
      %s4607 = int_to_ptr.vmem [resolvable:$true] %s4606
      %4612 = dma.vmem_to_hbm [thread:$0]  %s4607, 768, %s9, [#allocation4], 128, 128, 8
    $region57: #{tpu_custom_call.1} parent=1 // pred_fallthru
      _
    // Predicated region
    $region58: #{tpu_custom_call.1} parent=1 // pred_check
      _
    $region59: #{tpu_custom_call.1} parent=1 // pred_check_branch
      %4614 = sbr.rel (0) target = $region61
    $region60: #{tpu_custom_call.1} parent=1 // pred_region
      %4615 = dma.done [#allocation4], 768
    $region61: #{tpu_custom_call.1} parent=1 // pred_fallthru
      _
    %4616 = vsyncpa [#allocation3], 1
    %4617 = vsyncpa [#allocation6], 1
    %4618 = vsyncpa [#allocation9], 1
    %4619 = vsyncpa [#allocation4], 1

</llo_original>
